<compile_context>
chip_gen: v6e
topology: v6e:2x2x1
jax: 0.10.0
libtpu: 0.0.40
codegen_flags: <defaults>
</compile_context>

<pallas_src>
import jax
import jax.numpy as jnp
import numpy as np
from jax import lax
from jax.experimental import pallas as pl
from jax.experimental.pallas import tpu as pltpu

L0 = 16            # input length: 16 -> (conv+pool)x5 -> length 2 with 4 channels
MAX_BLOCK_B = 512  # max samples per grid step (multiple of 128 -> lane-dense)


def _conv_relu_pool(x, w_ref, b_ref):
    """One Conv1d(k=3, stride=1, pad=2) + ReLU + MaxPool1d(2) stage.

    x:     (L_in, C_in, B) f32, batch on lanes.
    w_ref: VMEM ref (3, C_in, C_out, 1)  -- torch (C_out, C_in, 3) transposed.
    b_ref: VMEM ref (1, C_out, 1)
    returns (L_out//2, C_out, B)
    """
    l_in, c_in, bsz = x.shape
    w = w_ref[...]                                   # (3, C_in, C_out, 1)
    c_out = w.shape[2]
    l_out = l_in + 2                                 # L + 2*pad - K + 1

    # pad along the leading (length) axis: whole-(C,B)-slab copies, no shuffles
    zpad = jnp.zeros((2, c_in, bsz), jnp.float32)
    xp = jnp.concatenate([zpad, x, zpad], axis=0)    # (L_in+4, C_in, B)

    acc = jnp.zeros((l_out, c_out, bsz), jnp.float32) + b_ref[...]
    for k in range(3):                               # static, unrolled
        xs = xp[k:k + l_out]                         # (L_out, C_in, B)
        for ci in range(c_in):
            xc = xs[:, ci:ci + 1, :]                 # (L_out, 1, B)
            acc = acc + xc * w[k, ci]                # (C_out,1) bcast -> (L_out,C_out,B)
    h = jnp.maximum(acc, 0.0)

    # MaxPool1d(2): floor division; drops the last position when L_out is odd.
    l_pool = l_out // 2
    hp = h[:2 * l_pool].reshape(l_pool, 2, c_out, bsz)   # last two dims untouched
    return hp.max(axis=1)                            # (L_pool, C_out, B)


def _cnn_kernel(x_ref, w1, b1, w2, b2, w3, b3, w4, b4, w5, b5,
                wf1, bf1, wf2, bf2, out_ref):
    h = x_ref[...].astype(jnp.float32)               # (16, 1, B)
    h = _conv_relu_pool(h, w1, b1)                   # (9, 4, B)
    h = _conv_relu_pool(h, w2, b2)                   # (5, 8, B)
    h = _conv_relu_pool(h, w3, b3)                   # (3, 10, B)
    h = _conv_relu_pool(h, w4, b4)                   # (2, 8, B)
    h = _conv_relu_pool(h, w5, b5)                   # (2, 4, B)

    bsz = h.shape[-1]
    # fc1 respecting PyTorch flatten order (feature index = c*2 + l);
    # wf1 pre-arranged as (2, 4, 10, 1) indexed [l, c, j].
    wfa = wf1[...]
    y = jnp.zeros((10, bsz), jnp.float32) + bf1[...]         # (10, B)
    for l in range(2):
        for c in range(4):
            y = y + h[l, c:c + 1, :] * wfa[l, c]             # (1,B)*(10,1) -> (10,B)
    y = jnp.maximum(y, 0.0)

    # fc2 + sigmoid (exp on EUP, exact formula to match reference tolerances)
    z = jnp.sum(y * wf2[...], axis=0, keepdims=True) + bf2[...]   # (1, B)
    out_ref[...] = 1.0 / (1.0 + jnp.exp(-z))


def cnn_forward(x_ncl, kernel_params, max_block_b=MAX_BLOCK_B):
    n = x_ncl.shape[0]
    # lane-dense batch block: smallest multiple of 128 covering n, capped
    block_b = min(max_block_b, ((n + 127) // 128) * 128)
    n_pad = ((n + block_b - 1) // block_b) * block_b

    # PyTorch NCL (N,1,16) -> (16, 1, N), zero-pad batch (lane axis) to n_pad.
    x_lcb = jnp.transpose(x_ncl.astype(jnp.float32), (2, 1, 0))
    x_lcb = jnp.pad(x_lcb, ((0, 0), (0, 0), (0, n_pad - n)))

    def const_spec(arr):
        nd = arr.ndim
        return pl.BlockSpec(arr.shape, lambda i, nd=nd: (0,) * nd)

    in_specs = [pl.BlockSpec((L0, 1, block_b), lambda i: (0, 0, i))]
    in_specs += [const_spec(p) for p in kernel_params]

    out = pl.pallas_call(
        _cnn_kernel,
        out_shape=jax.ShapeDtypeStruct((1, n_pad), jnp.float32),
        grid=(n_pad // block_b,),
        in_specs=in_specs,
        out_specs=pl.BlockSpec((1, block_b), lambda i: (0, i)),
        compiler_params=pltpu.CompilerParams(
            dimension_semantics=("parallel",)),
    )(x_lcb, *kernel_params)
    return out[0, :n].reshape(n, 1)


def init_params(key):
    """Deterministic synthetic parameters in PyTorch conventions + kernel layout."""
    ks = jax.random.split(key, 14)

    def u(k, shape, scale=0.3):
        return jax.random.uniform(k, shape, jnp.float32, -1.0, 1.0) * scale

    conv_shapes = [(4, 1, 3), (8, 4, 3), (10, 8, 3), (8, 10, 3), (4, 8, 3)]
    torch_params = []
    kernel_params = []
    ki = 0
    for (co, ci, kk) in conv_shapes:
        w = u(ks[ki], (co, ci, kk)); ki += 1        # torch: (Cout, Cin, K)
        b = u(ks[ki], (co,)); ki += 1
        torch_params += [w, b]
        kernel_params.append(jnp.transpose(w, (2, 1, 0)).reshape(kk, ci, co, 1))
        kernel_params.append(b.reshape(1, co, 1))

    w_fc1 = u(ks[10], (10, 8)); b_fc1 = u(ks[11], (10,))
    w_fc2 = u(ks[12], (1, 10)); b_fc2 = u(ks[13], (1,))
    torch_params += [w_fc1, b_fc1, w_fc2, b_fc2]
    # fc1: W[j, c*2+l] -> reshape (10,4,2) -> transpose -> (2,4,10,1) indexed [l,c,j]
    kernel_params.append(
        jnp.transpose(w_fc1.reshape(10, 4, 2), (2, 1, 0)).reshape(2, 4, 10, 1))
    kernel_params.append(b_fc1.reshape(10, 1))
    kernel_params.append(jnp.transpose(w_fc2, (1, 0)))      # (10, 1)
    kernel_params.append(b_fc2.reshape(1, 1))
    return kernel_params, torch_params


def reference_forward(x, torch_params):
    """Pure-JAX replica of the PyTorch forward (NCL layout), for verification."""
    (w1, b1, w2, b2, w3, b3, w4, b4, w5, b5, wf1, bf1, wf2, bf2) = torch_params

    def conv_relu(x, w, b):
        y = lax.conv_general_dilated(x, w, window_strides=(1,), padding=[(2, 2)],
                                     dimension_numbers=('NCH', 'OIH', 'NCH'))
        return jnp.maximum(y + b[None, :, None], 0.0)

    def pool(x):
        l = x.shape[-1]
        h = l // 2
        return x[..., :2 * h].reshape(x.shape[0], x.shape[1], h, 2).max(axis=-1)

    h = pool(conv_relu(x, w1, b1))
    h = pool(conv_relu(h, w2, b2))
    h = pool(conv_relu(h, w3, b3))
    h = pool(conv_relu(h, w4, b4))
    h = pool(conv_relu(h, w5, b5))
    h = h.reshape(x.shape[0], 8)
    y = jnp.maximum(h @ wf1.T + bf1, 0.0)
    z = y @ wf2.T + bf2
    return jax.nn.sigmoid(z)


if __name__ == "__main__":
    key = jax.random.PRNGKey(0)
    k_x, k_p = jax.random.split(key)
    x = jax.random.normal(k_x, (2, 1, L0), jnp.float32)   # PyTorch NCL input

    kernel_params, torch_params = init_params(k_p)

    out = cnn_forward(x, kernel_params)
    out = jax.block_until_ready(out)

    ref = jax.block_until_ready(reference_forward(x, torch_params))
    np.testing.assert_allclose(np.asarray(out), np.asarray(ref), rtol=1e-4, atol=1e-5)

    # NOTE: self.mean (AvgPool1d) is defined in __init__ but unused in forward; omitted.
    print("KERNEL_OK")
</pallas_src>

<mosaic_0001>
module attributes {stable_mosaic.version = 11 : i64} {
  func.func @_cnn_kernel(%arg0: i32, %arg1: memref<16x1x128xf32, #tpu.memory_space<vmem>>, %arg2: memref<3x1x4x1xf32, #tpu.memory_space<vmem>>, %arg3: memref<1x4x1xf32, #tpu.memory_space<vmem>>, %arg4: memref<3x4x8x1xf32, #tpu.memory_space<vmem>>, %arg5: memref<1x8x1xf32, #tpu.memory_space<vmem>>, %arg6: memref<3x8x10x1xf32, #tpu.memory_space<vmem>>, %arg7: memref<1x10x1xf32, #tpu.memory_space<vmem>>, %arg8: memref<3x10x8x1xf32, #tpu.memory_space<vmem>>, %arg9: memref<1x8x1xf32, #tpu.memory_space<vmem>>, %arg10: memref<3x8x4x1xf32, #tpu.memory_space<vmem>>, %arg11: memref<1x4x1xf32, #tpu.memory_space<vmem>>, %arg12: memref<2x4x10x1xf32, #tpu.memory_space<vmem>>, %arg13: memref<10x1xf32, #tpu.memory_space<vmem>>, %arg14: memref<10x1xf32, #tpu.memory_space<vmem>>, %arg15: memref<1x1xf32, #tpu.memory_space<vmem>>, %arg16: memref<1x128xf32, #tpu.memory_space<vmem>>) attributes {dimension_semantics = [#tpu.dimension_semantics<parallel>], iteration_bounds = array<i64: 1>, scalar_prefetch = 0 : i64, scratch_operands = 0 : i64, tpu.core_type = #tpu.core_type<tc>, window_params = [{transform_indices = @transform_0, window_bounds = array<i64: 16, 1, 128>}, {pipeline_mode = #tpu.pipeline_mode<synchronous>, transform_indices = @transform_1, window_bounds = array<i64: 3, 1, 4, 1>}, {pipeline_mode = #tpu.pipeline_mode<synchronous>, transform_indices = @transform_2, window_bounds = array<i64: 1, 4, 1>}, {pipeline_mode = #tpu.pipeline_mode<synchronous>, transform_indices = @transform_3, window_bounds = array<i64: 3, 4, 8, 1>}, {pipeline_mode = #tpu.pipeline_mode<synchronous>, transform_indices = @transform_4, window_bounds = array<i64: 1, 8, 1>}, {pipeline_mode = #tpu.pipeline_mode<synchronous>, transform_indices = @transform_5, window_bounds = array<i64: 3, 8, 10, 1>}, {pipeline_mode = #tpu.pipeline_mode<synchronous>, transform_indices = @transform_6, window_bounds = array<i64: 1, 10, 1>}, {pipeline_mode = #tpu.pipeline_mode<synchronous>, transform_indices = @transform_7, window_bounds = array<i64: 3, 10, 8, 1>}, {pipeline_mode = #tpu.pipeline_mode<synchronous>, transform_indices = @transform_8, window_bounds = array<i64: 1, 8, 1>}, {pipeline_mode = #tpu.pipeline_mode<synchronous>, transform_indices = @transform_9, window_bounds = array<i64: 3, 8, 4, 1>}, {pipeline_mode = #tpu.pipeline_mode<synchronous>, transform_indices = @transform_10, window_bounds = array<i64: 1, 4, 1>}, {pipeline_mode = #tpu.pipeline_mode<synchronous>, transform_indices = @transform_11, window_bounds = array<i64: 2, 4, 10, 1>}, {pipeline_mode = #tpu.pipeline_mode<synchronous>, transform_indices = @transform_12, window_bounds = array<i64: 10, 1>}, {pipeline_mode = #tpu.pipeline_mode<synchronous>, transform_indices = @transform_13, window_bounds = array<i64: 10, 1>}, {pipeline_mode = #tpu.pipeline_mode<synchronous>, transform_indices = @transform_14, window_bounds = array<i64: 1, 1>}, {transform_indices = @transform_15, window_bounds = array<i64: 1, 128>}]} {
    %c0 = arith.constant 0 : index
    %c0_0 = arith.constant 0 : index
    %c0_1 = arith.constant 0 : index
    %0 = vector.load %arg1[%c0, %c0_0, %c0_1] : memref<16x1x128xf32, #tpu.memory_space<vmem>>, vector<16x1x128xf32>
    %c0_2 = arith.constant 0 : index
    %c0_3 = arith.constant 0 : index
    %c0_4 = arith.constant 0 : index
    %c0_5 = arith.constant 0 : index
    %1 = vector.load %arg2[%c0_2, %c0_3, %c0_4, %c0_5] : memref<3x1x4x1xf32, #tpu.memory_space<vmem>>, vector<3x1x4x1xf32>
    %cst = arith.constant 0.000000e+00 : f32
    %2 = vector.broadcast %cst : f32 to vector<2x1x128xf32>
    %3 = tpu.concatenate %2, %0, %2 in 0 : vector<2x1x128xf32>, vector<16x1x128xf32>, vector<2x1x128xf32> -> vector<20x1x128xf32>
    %cst_6 = arith.constant 0.000000e+00 : f32
    %4 = vector.broadcast %cst_6 : f32 to vector<18x4x128xf32>
    %c0_7 = arith.constant 0 : index
    %c0_8 = arith.constant 0 : index
    %c0_9 = arith.constant 0 : index
    %5 = vector.load %arg3[%c0_7, %c0_8, %c0_9] : memref<1x4x1xf32, #tpu.memory_space<vmem>>, vector<1x4x1xf32>
    %6 = vector.broadcast %5 : vector<1x4x1xf32> to vector<18x4x128xf32>
    %7 = arith.addf %4, %6 : vector<18x4x128xf32>
    %8 = vector.extract_strided_slice %3 {offsets = [0, 0, 0], sizes = [18, 1, 128], strides = [1, 1, 1]} : vector<20x1x128xf32> to vector<18x1x128xf32>
    %9 = vector.extract_strided_slice %1 {offsets = [0, 0, 0, 0], sizes = [1, 1, 4, 1], strides = [1, 1, 1, 1]} : vector<3x1x4x1xf32> to vector<1x1x4x1xf32>
    %10 = vector.shape_cast %9 : vector<1x1x4x1xf32> to vector<4x1xf32>
    %11 = vector.shape_cast %10 : vector<4x1xf32> to vector<1x4x1xf32>
    %12 = vector.broadcast %8 : vector<18x1x128xf32> to vector<18x4x128xf32>
    %13 = vector.broadcast %11 : vector<1x4x1xf32> to vector<18x4x128xf32>
    %14 = arith.mulf %12, %13 : vector<18x4x128xf32>
    %15 = arith.addf %7, %14 : vector<18x4x128xf32>
    %16 = vector.extract_strided_slice %3 {offsets = [1, 0, 0], sizes = [18, 1, 128], strides = [1, 1, 1]} : vector<20x1x128xf32> to vector<18x1x128xf32>
    %17 = vector.extract_strided_slice %1 {offsets = [1, 0, 0, 0], sizes = [1, 1, 4, 1], strides = [1, 1, 1, 1]} : vector<3x1x4x1xf32> to vector<1x1x4x1xf32>
    %18 = vector.shape_cast %17 : vector<1x1x4x1xf32> to vector<4x1xf32>
    %19 = vector.shape_cast %18 : vector<4x1xf32> to vector<1x4x1xf32>
    %20 = vector.broadcast %16 : vector<18x1x128xf32> to vector<18x4x128xf32>
    %21 = vector.broadcast %19 : vector<1x4x1xf32> to vector<18x4x128xf32>
    %22 = arith.mulf %20, %21 : vector<18x4x128xf32>
    %23 = arith.addf %15, %22 : vector<18x4x128xf32>
    %24 = vector.extract_strided_slice %3 {offsets = [2, 0, 0], sizes = [18, 1, 128], strides = [1, 1, 1]} : vector<20x1x128xf32> to vector<18x1x128xf32>
    %25 = vector.extract_strided_slice %1 {offsets = [2, 0, 0, 0], sizes = [1, 1, 4, 1], strides = [1, 1, 1, 1]} : vector<3x1x4x1xf32> to vector<1x1x4x1xf32>
    %26 = vector.shape_cast %25 : vector<1x1x4x1xf32> to vector<4x1xf32>
    %27 = vector.shape_cast %26 : vector<4x1xf32> to vector<1x4x1xf32>
    %28 = vector.broadcast %24 : vector<18x1x128xf32> to vector<18x4x128xf32>
    %29 = vector.broadcast %27 : vector<1x4x1xf32> to vector<18x4x128xf32>
    %30 = arith.mulf %28, %29 : vector<18x4x128xf32>
    %31 = arith.addf %23, %30 : vector<18x4x128xf32>
    %cst_10 = arith.constant 0.000000e+00 : f32
    %32 = vector.broadcast %cst_10 : f32 to vector<18x4x128xf32>
    %33 = arith.maximumf %31, %32 : vector<18x4x128xf32>
    %34 = vector.shape_cast %33 : vector<18x4x128xf32> to vector<9x2x4x128xf32>
    %cst_11 = arith.constant dense<0xFF800000> : vector<9x4x128xf32>
    %35 = vector.multi_reduction <maximumf>, %34, %cst_11 [1] : vector<9x2x4x128xf32> to vector<9x4x128xf32>
    %c0_12 = arith.constant 0 : index
    %c0_13 = arith.constant 0 : index
    %c0_14 = arith.constant 0 : index
    %c0_15 = arith.constant 0 : index
    %36 = vector.load %arg4[%c0_12, %c0_13, %c0_14, %c0_15] : memref<3x4x8x1xf32, #tpu.memory_space<vmem>>, vector<3x4x8x1xf32>
    %cst_16 = arith.constant 0.000000e+00 : f32
    %37 = vector.broadcast %cst_16 : f32 to vector<2x4x128xf32>
    %38 = tpu.concatenate %37, %35, %37 in 0 : vector<2x4x128xf32>, vector<9x4x128xf32>, vector<2x4x128xf32> -> vector<13x4x128xf32>
    %cst_17 = arith.constant 0.000000e+00 : f32
    %39 = vector.broadcast %cst_17 : f32 to vector<11x8x128xf32>
    %c0_18 = arith.constant 0 : index
    %c0_19 = arith.constant 0 : index
    %c0_20 = arith.constant 0 : index
    %40 = vector.load %arg5[%c0_18, %c0_19, %c0_20] : memref<1x8x1xf32, #tpu.memory_space<vmem>>, vector<1x8x1xf32>
    %41 = vector.broadcast %40 : vector<1x8x1xf32> to vector<11x8x128xf32>
    %42 = arith.addf %39, %41 : vector<11x8x128xf32>
    %43 = vector.extract_strided_slice %38 {offsets = [0, 0, 0], sizes = [11, 4, 128], strides = [1, 1, 1]} : vector<13x4x128xf32> to vector<11x4x128xf32>
    %44 = vector.extract_strided_slice %43 {offsets = [0, 0, 0], sizes = [11, 1, 128], strides = [1, 1, 1]} : vector<11x4x128xf32> to vector<11x1x128xf32>
    %45 = vector.extract_strided_slice %36 {offsets = [0, 0, 0, 0], sizes = [1, 1, 8, 1], strides = [1, 1, 1, 1]} : vector<3x4x8x1xf32> to vector<1x1x8x1xf32>
    %46 = vector.shape_cast %45 : vector<1x1x8x1xf32> to vector<8x1xf32>
    %47 = vector.shape_cast %46 : vector<8x1xf32> to vector<1x8x1xf32>
    %48 = vector.broadcast %44 : vector<11x1x128xf32> to vector<11x8x128xf32>
    %49 = vector.broadcast %47 : vector<1x8x1xf32> to vector<11x8x128xf32>
    %50 = arith.mulf %48, %49 : vector<11x8x128xf32>
    %51 = arith.addf %42, %50 : vector<11x8x128xf32>
    %52 = vector.extract_strided_slice %43 {offsets = [0, 1, 0], sizes = [11, 1, 128], strides = [1, 1, 1]} : vector<11x4x128xf32> to vector<11x1x128xf32>
    %53 = vector.extract_strided_slice %36 {offsets = [0, 1, 0, 0], sizes = [1, 1, 8, 1], strides = [1, 1, 1, 1]} : vector<3x4x8x1xf32> to vector<1x1x8x1xf32>
    %54 = vector.shape_cast %53 : vector<1x1x8x1xf32> to vector<8x1xf32>
    %55 = vector.shape_cast %54 : vector<8x1xf32> to vector<1x8x1xf32>
    %56 = vector.broadcast %52 : vector<11x1x128xf32> to vector<11x8x128xf32>
    %57 = vector.broadcast %55 : vector<1x8x1xf32> to vector<11x8x128xf32>
    %58 = arith.mulf %56, %57 : vector<11x8x128xf32>
    %59 = arith.addf %51, %58 : vector<11x8x128xf32>
    %60 = vector.extract_strided_slice %43 {offsets = [0, 2, 0], sizes = [11, 1, 128], strides = [1, 1, 1]} : vector<11x4x128xf32> to vector<11x1x128xf32>
    %61 = vector.extract_strided_slice %36 {offsets = [0, 2, 0, 0], sizes = [1, 1, 8, 1], strides = [1, 1, 1, 1]} : vector<3x4x8x1xf32> to vector<1x1x8x1xf32>
    %62 = vector.shape_cast %61 : vector<1x1x8x1xf32> to vector<8x1xf32>
    %63 = vector.shape_cast %62 : vector<8x1xf32> to vector<1x8x1xf32>
    %64 = vector.broadcast %60 : vector<11x1x128xf32> to vector<11x8x128xf32>
    %65 = vector.broadcast %63 : vector<1x8x1xf32> to vector<11x8x128xf32>
    %66 = arith.mulf %64, %65 : vector<11x8x128xf32>
    %67 = arith.addf %59, %66 : vector<11x8x128xf32>
    %68 = vector.extract_strided_slice %43 {offsets = [0, 3, 0], sizes = [11, 1, 128], strides = [1, 1, 1]} : vector<11x4x128xf32> to vector<11x1x128xf32>
    %69 = vector.extract_strided_slice %36 {offsets = [0, 3, 0, 0], sizes = [1, 1, 8, 1], strides = [1, 1, 1, 1]} : vector<3x4x8x1xf32> to vector<1x1x8x1xf32>
    %70 = vector.shape_cast %69 : vector<1x1x8x1xf32> to vector<8x1xf32>
    %71 = vector.shape_cast %70 : vector<8x1xf32> to vector<1x8x1xf32>
    %72 = vector.broadcast %68 : vector<11x1x128xf32> to vector<11x8x128xf32>
    %73 = vector.broadcast %71 : vector<1x8x1xf32> to vector<11x8x128xf32>
    %74 = arith.mulf %72, %73 : vector<11x8x128xf32>
    %75 = arith.addf %67, %74 : vector<11x8x128xf32>
    %76 = vector.extract_strided_slice %38 {offsets = [1, 0, 0], sizes = [11, 4, 128], strides = [1, 1, 1]} : vector<13x4x128xf32> to vector<11x4x128xf32>
    %77 = vector.extract_strided_slice %76 {offsets = [0, 0, 0], sizes = [11, 1, 128], strides = [1, 1, 1]} : vector<11x4x128xf32> to vector<11x1x128xf32>
    %78 = vector.extract_strided_slice %36 {offsets = [1, 0, 0, 0], sizes = [1, 1, 8, 1], strides = [1, 1, 1, 1]} : vector<3x4x8x1xf32> to vector<1x1x8x1xf32>
    %79 = vector.shape_cast %78 : vector<1x1x8x1xf32> to vector<8x1xf32>
    %80 = vector.shape_cast %79 : vector<8x1xf32> to vector<1x8x1xf32>
    %81 = vector.broadcast %77 : vector<11x1x128xf32> to vector<11x8x128xf32>
    %82 = vector.broadcast %80 : vector<1x8x1xf32> to vector<11x8x128xf32>
    %83 = arith.mulf %81, %82 : vector<11x8x128xf32>
    %84 = arith.addf %75, %83 : vector<11x8x128xf32>
    %85 = vector.extract_strided_slice %76 {offsets = [0, 1, 0], sizes = [11, 1, 128], strides = [1, 1, 1]} : vector<11x4x128xf32> to vector<11x1x128xf32>
    %86 = vector.extract_strided_slice %36 {offsets = [1, 1, 0, 0], sizes = [1, 1, 8, 1], strides = [1, 1, 1, 1]} : vector<3x4x8x1xf32> to vector<1x1x8x1xf32>
    %87 = vector.shape_cast %86 : vector<1x1x8x1xf32> to vector<8x1xf32>
    %88 = vector.shape_cast %87 : vector<8x1xf32> to vector<1x8x1xf32>
    %89 = vector.broadcast %85 : vector<11x1x128xf32> to vector<11x8x128xf32>
    %90 = vector.broadcast %88 : vector<1x8x1xf32> to vector<11x8x128xf32>
    %91 = arith.mulf %89, %90 : vector<11x8x128xf32>
    %92 = arith.addf %84, %91 : vector<11x8x128xf32>
    %93 = vector.extract_strided_slice %76 {offsets = [0, 2, 0], sizes = [11, 1, 128], strides = [1, 1, 1]} : vector<11x4x128xf32> to vector<11x1x128xf32>
    %94 = vector.extract_strided_slice %36 {offsets = [1, 2, 0, 0], sizes = [1, 1, 8, 1], strides = [1, 1, 1, 1]} : vector<3x4x8x1xf32> to vector<1x1x8x1xf32>
    %95 = vector.shape_cast %94 : vector<1x1x8x1xf32> to vector<8x1xf32>
    %96 = vector.shape_cast %95 : vector<8x1xf32> to vector<1x8x1xf32>
    %97 = vector.broadcast %93 : vector<11x1x128xf32> to vector<11x8x128xf32>
    %98 = vector.broadcast %96 : vector<1x8x1xf32> to vector<11x8x128xf32>
    %99 = arith.mulf %97, %98 : vector<11x8x128xf32>
    %100 = arith.addf %92, %99 : vector<11x8x128xf32>
    %101 = vector.extract_strided_slice %76 {offsets = [0, 3, 0], sizes = [11, 1, 128], strides = [1, 1, 1]} : vector<11x4x128xf32> to vector<11x1x128xf32>
    %102 = vector.extract_strided_slice %36 {offsets = [1, 3, 0, 0], sizes = [1, 1, 8, 1], strides = [1, 1, 1, 1]} : vector<3x4x8x1xf32> to vector<1x1x8x1xf32>
    %103 = vector.shape_cast %102 : vector<1x1x8x1xf32> to vector<8x1xf32>
    %104 = vector.shape_cast %103 : vector<8x1xf32> to vector<1x8x1xf32>
    %105 = vector.broadcast %101 : vector<11x1x128xf32> to vector<11x8x128xf32>
    %106 = vector.broadcast %104 : vector<1x8x1xf32> to vector<11x8x128xf32>
    %107 = arith.mulf %105, %106 : vector<11x8x128xf32>
    %108 = arith.addf %100, %107 : vector<11x8x128xf32>
    %109 = vector.extract_strided_slice %38 {offsets = [2, 0, 0], sizes = [11, 4, 128], strides = [1, 1, 1]} : vector<13x4x128xf32> to vector<11x4x128xf32>
    %110 = vector.extract_strided_slice %109 {offsets = [0, 0, 0], sizes = [11, 1, 128], strides = [1, 1, 1]} : vector<11x4x128xf32> to vector<11x1x128xf32>
    %111 = vector.extract_strided_slice %36 {offsets = [2, 0, 0, 0], sizes = [1, 1, 8, 1], strides = [1, 1, 1, 1]} : vector<3x4x8x1xf32> to vector<1x1x8x1xf32>
    %112 = vector.shape_cast %111 : vector<1x1x8x1xf32> to vector<8x1xf32>
    %113 = vector.shape_cast %112 : vector<8x1xf32> to vector<1x8x1xf32>
    %114 = vector.broadcast %110 : vector<11x1x128xf32> to vector<11x8x128xf32>
    %115 = vector.broadcast %113 : vector<1x8x1xf32> to vector<11x8x128xf32>
    %116 = arith.mulf %114, %115 : vector<11x8x128xf32>
    %117 = arith.addf %108, %116 : vector<11x8x128xf32>
    %118 = vector.extract_strided_slice %109 {offsets = [0, 1, 0], sizes = [11, 1, 128], strides = [1, 1, 1]} : vector<11x4x128xf32> to vector<11x1x128xf32>
    %119 = vector.extract_strided_slice %36 {offsets = [2, 1, 0, 0], sizes = [1, 1, 8, 1], strides = [1, 1, 1, 1]} : vector<3x4x8x1xf32> to vector<1x1x8x1xf32>
    %120 = vector.shape_cast %119 : vector<1x1x8x1xf32> to vector<8x1xf32>
    %121 = vector.shape_cast %120 : vector<8x1xf32> to vector<1x8x1xf32>
    %122 = vector.broadcast %118 : vector<11x1x128xf32> to vector<11x8x128xf32>
    %123 = vector.broadcast %121 : vector<1x8x1xf32> to vector<11x8x128xf32>
    %124 = arith.mulf %122, %123 : vector<11x8x128xf32>
    %125 = arith.addf %117, %124 : vector<11x8x128xf32>
    %126 = vector.extract_strided_slice %109 {offsets = [0, 2, 0], sizes = [11, 1, 128], strides = [1, 1, 1]} : vector<11x4x128xf32> to vector<11x1x128xf32>
    %127 = vector.extract_strided_slice %36 {offsets = [2, 2, 0, 0], sizes = [1, 1, 8, 1], strides = [1, 1, 1, 1]} : vector<3x4x8x1xf32> to vector<1x1x8x1xf32>
    %128 = vector.shape_cast %127 : vector<1x1x8x1xf32> to vector<8x1xf32>
    %129 = vector.shape_cast %128 : vector<8x1xf32> to vector<1x8x1xf32>
    %130 = vector.broadcast %126 : vector<11x1x128xf32> to vector<11x8x128xf32>
    %131 = vector.broadcast %129 : vector<1x8x1xf32> to vector<11x8x128xf32>
    %132 = arith.mulf %130, %131 : vector<11x8x128xf32>
    %133 = arith.addf %125, %132 : vector<11x8x128xf32>
    %134 = vector.extract_strided_slice %109 {offsets = [0, 3, 0], sizes = [11, 1, 128], strides = [1, 1, 1]} : vector<11x4x128xf32> to vector<11x1x128xf32>
    %135 = vector.extract_strided_slice %36 {offsets = [2, 3, 0, 0], sizes = [1, 1, 8, 1], strides = [1, 1, 1, 1]} : vector<3x4x8x1xf32> to vector<1x1x8x1xf32>
    %136 = vector.shape_cast %135 : vector<1x1x8x1xf32> to vector<8x1xf32>
    %137 = vector.shape_cast %136 : vector<8x1xf32> to vector<1x8x1xf32>
    %138 = vector.broadcast %134 : vector<11x1x128xf32> to vector<11x8x128xf32>
    %139 = vector.broadcast %137 : vector<1x8x1xf32> to vector<11x8x128xf32>
    %140 = arith.mulf %138, %139 : vector<11x8x128xf32>
    %141 = arith.addf %133, %140 : vector<11x8x128xf32>
    %cst_21 = arith.constant 0.000000e+00 : f32
    %142 = vector.broadcast %cst_21 : f32 to vector<11x8x128xf32>
    %143 = arith.maximumf %141, %142 : vector<11x8x128xf32>
    %144 = vector.extract_strided_slice %143 {offsets = [0, 0, 0], sizes = [10, 8, 128], strides = [1, 1, 1]} : vector<11x8x128xf32> to vector<10x8x128xf32>
    %145 = vector.shape_cast %144 : vector<10x8x128xf32> to vector<5x2x8x128xf32>
    %cst_22 = arith.constant dense<0xFF800000> : vector<5x8x128xf32>
    %146 = vector.multi_reduction <maximumf>, %145, %cst_22 [1] : vector<5x2x8x128xf32> to vector<5x8x128xf32>
    %c0_23 = arith.constant 0 : index
    %c0_24 = arith.constant 0 : index
    %c0_25 = arith.constant 0 : index
    %c0_26 = arith.constant 0 : index
    %147 = vector.load %arg6[%c0_23, %c0_24, %c0_25, %c0_26] : memref<3x8x10x1xf32, #tpu.memory_space<vmem>>, vector<3x8x10x1xf32>
    %cst_27 = arith.constant 0.000000e+00 : f32
    %148 = vector.broadcast %cst_27 : f32 to vector<2x8x128xf32>
    %149 = tpu.concatenate %148, %146, %148 in 0 : vector<2x8x128xf32>, vector<5x8x128xf32>, vector<2x8x128xf32> -> vector<9x8x128xf32>
    %cst_28 = arith.constant 0.000000e+00 : f32
    %150 = vector.broadcast %cst_28 : f32 to vector<7x10x128xf32>
    %c0_29 = arith.constant 0 : index
    %c0_30 = arith.constant 0 : index
    %c0_31 = arith.constant 0 : index
    %151 = vector.load %arg7[%c0_29, %c0_30, %c0_31] : memref<1x10x1xf32, #tpu.memory_space<vmem>>, vector<1x10x1xf32>
    %152 = vector.broadcast %151 : vector<1x10x1xf32> to vector<7x10x128xf32>
    %153 = arith.addf %150, %152 : vector<7x10x128xf32>
    %154 = vector.extract_strided_slice %149 {offsets = [0, 0, 0], sizes = [7, 8, 128], strides = [1, 1, 1]} : vector<9x8x128xf32> to vector<7x8x128xf32>
    %155 = vector.extract_strided_slice %154 {offsets = [0, 0, 0], sizes = [7, 1, 128], strides = [1, 1, 1]} : vector<7x8x128xf32> to vector<7x1x128xf32>
    %156 = vector.extract_strided_slice %147 {offsets = [0, 0, 0, 0], sizes = [1, 1, 10, 1], strides = [1, 1, 1, 1]} : vector<3x8x10x1xf32> to vector<1x1x10x1xf32>
    %157 = vector.shape_cast %156 : vector<1x1x10x1xf32> to vector<10x1xf32>
    %158 = vector.shape_cast %157 : vector<10x1xf32> to vector<1x10x1xf32>
    %159 = vector.broadcast %155 : vector<7x1x128xf32> to vector<7x10x128xf32>
    %160 = vector.broadcast %158 : vector<1x10x1xf32> to vector<7x10x128xf32>
    %161 = arith.mulf %159, %160 : vector<7x10x128xf32>
    %162 = arith.addf %153, %161 : vector<7x10x128xf32>
    %163 = vector.extract_strided_slice %154 {offsets = [0, 1, 0], sizes = [7, 1, 128], strides = [1, 1, 1]} : vector<7x8x128xf32> to vector<7x1x128xf32>
    %164 = vector.extract_strided_slice %147 {offsets = [0, 1, 0, 0], sizes = [1, 1, 10, 1], strides = [1, 1, 1, 1]} : vector<3x8x10x1xf32> to vector<1x1x10x1xf32>
    %165 = vector.shape_cast %164 : vector<1x1x10x1xf32> to vector<10x1xf32>
    %166 = vector.shape_cast %165 : vector<10x1xf32> to vector<1x10x1xf32>
    %167 = vector.broadcast %163 : vector<7x1x128xf32> to vector<7x10x128xf32>
    %168 = vector.broadcast %166 : vector<1x10x1xf32> to vector<7x10x128xf32>
    %169 = arith.mulf %167, %168 : vector<7x10x128xf32>
    %170 = arith.addf %162, %169 : vector<7x10x128xf32>
    %171 = vector.extract_strided_slice %154 {offsets = [0, 2, 0], sizes = [7, 1, 128], strides = [1, 1, 1]} : vector<7x8x128xf32> to vector<7x1x128xf32>
    %172 = vector.extract_strided_slice %147 {offsets = [0, 2, 0, 0], sizes = [1, 1, 10, 1], strides = [1, 1, 1, 1]} : vector<3x8x10x1xf32> to vector<1x1x10x1xf32>
    %173 = vector.shape_cast %172 : vector<1x1x10x1xf32> to vector<10x1xf32>
    %174 = vector.shape_cast %173 : vector<10x1xf32> to vector<1x10x1xf32>
    %175 = vector.broadcast %171 : vector<7x1x128xf32> to vector<7x10x128xf32>
    %176 = vector.broadcast %174 : vector<1x10x1xf32> to vector<7x10x128xf32>
    %177 = arith.mulf %175, %176 : vector<7x10x128xf32>
    %178 = arith.addf %170, %177 : vector<7x10x128xf32>
    %179 = vector.extract_strided_slice %154 {offsets = [0, 3, 0], sizes = [7, 1, 128], strides = [1, 1, 1]} : vector<7x8x128xf32> to vector<7x1x128xf32>
    %180 = vector.extract_strided_slice %147 {offsets = [0, 3, 0, 0], sizes = [1, 1, 10, 1], strides = [1, 1, 1, 1]} : vector<3x8x10x1xf32> to vector<1x1x10x1xf32>
    %181 = vector.shape_cast %180 : vector<1x1x10x1xf32> to vector<10x1xf32>
    %182 = vector.shape_cast %181 : vector<10x1xf32> to vector<1x10x1xf32>
    %183 = vector.broadcast %179 : vector<7x1x128xf32> to vector<7x10x128xf32>
    %184 = vector.broadcast %182 : vector<1x10x1xf32> to vector<7x10x128xf32>
    %185 = arith.mulf %183, %184 : vector<7x10x128xf32>
    %186 = arith.addf %178, %185 : vector<7x10x128xf32>
    %187 = vector.extract_strided_slice %154 {offsets = [0, 4, 0], sizes = [7, 1, 128], strides = [1, 1, 1]} : vector<7x8x128xf32> to vector<7x1x128xf32>
    %188 = vector.extract_strided_slice %147 {offsets = [0, 4, 0, 0], sizes = [1, 1, 10, 1], strides = [1, 1, 1, 1]} : vector<3x8x10x1xf32> to vector<1x1x10x1xf32>
    %189 = vector.shape_cast %188 : vector<1x1x10x1xf32> to vector<10x1xf32>
    %190 = vector.shape_cast %189 : vector<10x1xf32> to vector<1x10x1xf32>
    %191 = vector.broadcast %187 : vector<7x1x128xf32> to vector<7x10x128xf32>
    %192 = vector.broadcast %190 : vector<1x10x1xf32> to vector<7x10x128xf32>
    %193 = arith.mulf %191, %192 : vector<7x10x128xf32>
    %194 = arith.addf %186, %193 : vector<7x10x128xf32>
    %195 = vector.extract_strided_slice %154 {offsets = [0, 5, 0], sizes = [7, 1, 128], strides = [1, 1, 1]} : vector<7x8x128xf32> to vector<7x1x128xf32>
    %196 = vector.extract_strided_slice %147 {offsets = [0, 5, 0, 0], sizes = [1, 1, 10, 1], strides = [1, 1, 1, 1]} : vector<3x8x10x1xf32> to vector<1x1x10x1xf32>
    %197 = vector.shape_cast %196 : vector<1x1x10x1xf32> to vector<10x1xf32>
    %198 = vector.shape_cast %197 : vector<10x1xf32> to vector<1x10x1xf32>
    %199 = vector.broadcast %195 : vector<7x1x128xf32> to vector<7x10x128xf32>
    %200 = vector.broadcast %198 : vector<1x10x1xf32> to vector<7x10x128xf32>
    %201 = arith.mulf %199, %200 : vector<7x10x128xf32>
    %202 = arith.addf %194, %201 : vector<7x10x128xf32>
    %203 = vector.extract_strided_slice %154 {offsets = [0, 6, 0], sizes = [7, 1, 128], strides = [1, 1, 1]} : vector<7x8x128xf32> to vector<7x1x128xf32>
    %204 = vector.extract_strided_slice %147 {offsets = [0, 6, 0, 0], sizes = [1, 1, 10, 1], strides = [1, 1, 1, 1]} : vector<3x8x10x1xf32> to vector<1x1x10x1xf32>
    %205 = vector.shape_cast %204 : vector<1x1x10x1xf32> to vector<10x1xf32>
    %206 = vector.shape_cast %205 : vector<10x1xf32> to vector<1x10x1xf32>
    %207 = vector.broadcast %203 : vector<7x1x128xf32> to vector<7x10x128xf32>
    %208 = vector.broadcast %206 : vector<1x10x1xf32> to vector<7x10x128xf32>
    %209 = arith.mulf %207, %208 : vector<7x10x128xf32>
    %210 = arith.addf %202, %209 : vector<7x10x128xf32>
    %211 = vector.extract_strided_slice %154 {offsets = [0, 7, 0], sizes = [7, 1, 128], strides = [1, 1, 1]} : vector<7x8x128xf32> to vector<7x1x128xf32>
    %212 = vector.extract_strided_slice %147 {offsets = [0, 7, 0, 0], sizes = [1, 1, 10, 1], strides = [1, 1, 1, 1]} : vector<3x8x10x1xf32> to vector<1x1x10x1xf32>
    %213 = vector.shape_cast %212 : vector<1x1x10x1xf32> to vector<10x1xf32>
    %214 = vector.shape_cast %213 : vector<10x1xf32> to vector<1x10x1xf32>
    %215 = vector.broadcast %211 : vector<7x1x128xf32> to vector<7x10x128xf32>
    %216 = vector.broadcast %214 : vector<1x10x1xf32> to vector<7x10x128xf32>
    %217 = arith.mulf %215, %216 : vector<7x10x128xf32>
    %218 = arith.addf %210, %217 : vector<7x10x128xf32>
    %219 = vector.extract_strided_slice %149 {offsets = [1, 0, 0], sizes = [7, 8, 128], strides = [1, 1, 1]} : vector<9x8x128xf32> to vector<7x8x128xf32>
    %220 = vector.extract_strided_slice %219 {offsets = [0, 0, 0], sizes = [7, 1, 128], strides = [1, 1, 1]} : vector<7x8x128xf32> to vector<7x1x128xf32>
    %221 = vector.extract_strided_slice %147 {offsets = [1, 0, 0, 0], sizes = [1, 1, 10, 1], strides = [1, 1, 1, 1]} : vector<3x8x10x1xf32> to vector<1x1x10x1xf32>
    %222 = vector.shape_cast %221 : vector<1x1x10x1xf32> to vector<10x1xf32>
    %223 = vector.shape_cast %222 : vector<10x1xf32> to vector<1x10x1xf32>
    %224 = vector.broadcast %220 : vector<7x1x128xf32> to vector<7x10x128xf32>
    %225 = vector.broadcast %223 : vector<1x10x1xf32> to vector<7x10x128xf32>
    %226 = arith.mulf %224, %225 : vector<7x10x128xf32>
    %227 = arith.addf %218, %226 : vector<7x10x128xf32>
    %228 = vector.extract_strided_slice %219 {offsets = [0, 1, 0], sizes = [7, 1, 128], strides = [1, 1, 1]} : vector<7x8x128xf32> to vector<7x1x128xf32>
    %229 = vector.extract_strided_slice %147 {offsets = [1, 1, 0, 0], sizes = [1, 1, 10, 1], strides = [1, 1, 1, 1]} : vector<3x8x10x1xf32> to vector<1x1x10x1xf32>
    %230 = vector.shape_cast %229 : vector<1x1x10x1xf32> to vector<10x1xf32>
    %231 = vector.shape_cast %230 : vector<10x1xf32> to vector<1x10x1xf32>
    %232 = vector.broadcast %228 : vector<7x1x128xf32> to vector<7x10x128xf32>
    %233 = vector.broadcast %231 : vector<1x10x1xf32> to vector<7x10x128xf32>
    %234 = arith.mulf %232, %233 : vector<7x10x128xf32>
    %235 = arith.addf %227, %234 : vector<7x10x128xf32>
    %236 = vector.extract_strided_slice %219 {offsets = [0, 2, 0], sizes = [7, 1, 128], strides = [1, 1, 1]} : vector<7x8x128xf32> to vector<7x1x128xf32>
    %237 = vector.extract_strided_slice %147 {offsets = [1, 2, 0, 0], sizes = [1, 1, 10, 1], strides = [1, 1, 1, 1]} : vector<3x8x10x1xf32> to vector<1x1x10x1xf32>
    %238 = vector.shape_cast %237 : vector<1x1x10x1xf32> to vector<10x1xf32>
    %239 = vector.shape_cast %238 : vector<10x1xf32> to vector<1x10x1xf32>
    %240 = vector.broadcast %236 : vector<7x1x128xf32> to vector<7x10x128xf32>
    %241 = vector.broadcast %239 : vector<1x10x1xf32> to vector<7x10x128xf32>
    %242 = arith.mulf %240, %241 : vector<7x10x128xf32>
    %243 = arith.addf %235, %242 : vector<7x10x128xf32>
    %244 = vector.extract_strided_slice %219 {offsets = [0, 3, 0], sizes = [7, 1, 128], strides = [1, 1, 1]} : vector<7x8x128xf32> to vector<7x1x128xf32>
    %245 = vector.extract_strided_slice %147 {offsets = [1, 3, 0, 0], sizes = [1, 1, 10, 1], strides = [1, 1, 1, 1]} : vector<3x8x10x1xf32> to vector<1x1x10x1xf32>
    %246 = vector.shape_cast %245 : vector<1x1x10x1xf32> to vector<10x1xf32>
    %247 = vector.shape_cast %246 : vector<10x1xf32> to vector<1x10x1xf32>
    %248 = vector.broadcast %244 : vector<7x1x128xf32> to vector<7x10x128xf32>
    %249 = vector.broadcast %247 : vector<1x10x1xf32> to vector<7x10x128xf32>
    %250 = arith.mulf %248, %249 : vector<7x10x128xf32>
    %251 = arith.addf %243, %250 : vector<7x10x128xf32>
    %252 = vector.extract_strided_slice %219 {offsets = [0, 4, 0], sizes = [7, 1, 128], strides = [1, 1, 1]} : vector<7x8x128xf32> to vector<7x1x128xf32>
    %253 = vector.extract_strided_slice %147 {offsets = [1, 4, 0, 0], sizes = [1, 1, 10, 1], strides = [1, 1, 1, 1]} : vector<3x8x10x1xf32> to vector<1x1x10x1xf32>
    %254 = vector.shape_cast %253 : vector<1x1x10x1xf32> to vector<10x1xf32>
    %255 = vector.shape_cast %254 : vector<10x1xf32> to vector<1x10x1xf32>
    %256 = vector.broadcast %252 : vector<7x1x128xf32> to vector<7x10x128xf32>
    %257 = vector.broadcast %255 : vector<1x10x1xf32> to vector<7x10x128xf32>
    %258 = arith.mulf %256, %257 : vector<7x10x128xf32>
    %259 = arith.addf %251, %258 : vector<7x10x128xf32>
    %260 = vector.extract_strided_slice %219 {offsets = [0, 5, 0], sizes = [7, 1, 128], strides = [1, 1, 1]} : vector<7x8x128xf32> to vector<7x1x128xf32>
    %261 = vector.extract_strided_slice %147 {offsets = [1, 5, 0, 0], sizes = [1, 1, 10, 1], strides = [1, 1, 1, 1]} : vector<3x8x10x1xf32> to vector<1x1x10x1xf32>
    %262 = vector.shape_cast %261 : vector<1x1x10x1xf32> to vector<10x1xf32>
    %263 = vector.shape_cast %262 : vector<10x1xf32> to vector<1x10x1xf32>
    %264 = vector.broadcast %260 : vector<7x1x128xf32> to vector<7x10x128xf32>
    %265 = vector.broadcast %263 : vector<1x10x1xf32> to vector<7x10x128xf32>
    %266 = arith.mulf %264, %265 : vector<7x10x128xf32>
    %267 = arith.addf %259, %266 : vector<7x10x128xf32>
    %268 = vector.extract_strided_slice %219 {offsets = [0, 6, 0], sizes = [7, 1, 128], strides = [1, 1, 1]} : vector<7x8x128xf32> to vector<7x1x128xf32>
    %269 = vector.extract_strided_slice %147 {offsets = [1, 6, 0, 0], sizes = [1, 1, 10, 1], strides = [1, 1, 1, 1]} : vector<3x8x10x1xf32> to vector<1x1x10x1xf32>
    %270 = vector.shape_cast %269 : vector<1x1x10x1xf32> to vector<10x1xf32>
    %271 = vector.shape_cast %270 : vector<10x1xf32> to vector<1x10x1xf32>
    %272 = vector.broadcast %268 : vector<7x1x128xf32> to vector<7x10x128xf32>
    %273 = vector.broadcast %271 : vector<1x10x1xf32> to vector<7x10x128xf32>
    %274 = arith.mulf %272, %273 : vector<7x10x128xf32>
    %275 = arith.addf %267, %274 : vector<7x10x128xf32>
    %276 = vector.extract_strided_slice %219 {offsets = [0, 7, 0], sizes = [7, 1, 128], strides = [1, 1, 1]} : vector<7x8x128xf32> to vector<7x1x128xf32>
    %277 = vector.extract_strided_slice %147 {offsets = [1, 7, 0, 0], sizes = [1, 1, 10, 1], strides = [1, 1, 1, 1]} : vector<3x8x10x1xf32> to vector<1x1x10x1xf32>
    %278 = vector.shape_cast %277 : vector<1x1x10x1xf32> to vector<10x1xf32>
    %279 = vector.shape_cast %278 : vector<10x1xf32> to vector<1x10x1xf32>
    %280 = vector.broadcast %276 : vector<7x1x128xf32> to vector<7x10x128xf32>
    %281 = vector.broadcast %279 : vector<1x10x1xf32> to vector<7x10x128xf32>
    %282 = arith.mulf %280, %281 : vector<7x10x128xf32>
    %283 = arith.addf %275, %282 : vector<7x10x128xf32>
    %284 = vector.extract_strided_slice %149 {offsets = [2, 0, 0], sizes = [7, 8, 128], strides = [1, 1, 1]} : vector<9x8x128xf32> to vector<7x8x128xf32>
    %285 = vector.extract_strided_slice %284 {offsets = [0, 0, 0], sizes = [7, 1, 128], strides = [1, 1, 1]} : vector<7x8x128xf32> to vector<7x1x128xf32>
    %286 = vector.extract_strided_slice %147 {offsets = [2, 0, 0, 0], sizes = [1, 1, 10, 1], strides = [1, 1, 1, 1]} : vector<3x8x10x1xf32> to vector<1x1x10x1xf32>
    %287 = vector.shape_cast %286 : vector<1x1x10x1xf32> to vector<10x1xf32>
    %288 = vector.shape_cast %287 : vector<10x1xf32> to vector<1x10x1xf32>
    %289 = vector.broadcast %285 : vector<7x1x128xf32> to vector<7x10x128xf32>
    %290 = vector.broadcast %288 : vector<1x10x1xf32> to vector<7x10x128xf32>
    %291 = arith.mulf %289, %290 : vector<7x10x128xf32>
    %292 = arith.addf %283, %291 : vector<7x10x128xf32>
    %293 = vector.extract_strided_slice %284 {offsets = [0, 1, 0], sizes = [7, 1, 128], strides = [1, 1, 1]} : vector<7x8x128xf32> to vector<7x1x128xf32>
    %294 = vector.extract_strided_slice %147 {offsets = [2, 1, 0, 0], sizes = [1, 1, 10, 1], strides = [1, 1, 1, 1]} : vector<3x8x10x1xf32> to vector<1x1x10x1xf32>
    %295 = vector.shape_cast %294 : vector<1x1x10x1xf32> to vector<10x1xf32>
    %296 = vector.shape_cast %295 : vector<10x1xf32> to vector<1x10x1xf32>
    %297 = vector.broadcast %293 : vector<7x1x128xf32> to vector<7x10x128xf32>
    %298 = vector.broadcast %296 : vector<1x10x1xf32> to vector<7x10x128xf32>
    %299 = arith.mulf %297, %298 : vector<7x10x128xf32>
    %300 = arith.addf %292, %299 : vector<7x10x128xf32>
    %301 = vector.extract_strided_slice %284 {offsets = [0, 2, 0], sizes = [7, 1, 128], strides = [1, 1, 1]} : vector<7x8x128xf32> to vector<7x1x128xf32>
    %302 = vector.extract_strided_slice %147 {offsets = [2, 2, 0, 0], sizes = [1, 1, 10, 1], strides = [1, 1, 1, 1]} : vector<3x8x10x1xf32> to vector<1x1x10x1xf32>
    %303 = vector.shape_cast %302 : vector<1x1x10x1xf32> to vector<10x1xf32>
    %304 = vector.shape_cast %303 : vector<10x1xf32> to vector<1x10x1xf32>
    %305 = vector.broadcast %301 : vector<7x1x128xf32> to vector<7x10x128xf32>
    %306 = vector.broadcast %304 : vector<1x10x1xf32> to vector<7x10x128xf32>
    %307 = arith.mulf %305, %306 : vector<7x10x128xf32>
    %308 = arith.addf %300, %307 : vector<7x10x128xf32>
    %309 = vector.extract_strided_slice %284 {offsets = [0, 3, 0], sizes = [7, 1, 128], strides = [1, 1, 1]} : vector<7x8x128xf32> to vector<7x1x128xf32>
    %310 = vector.extract_strided_slice %147 {offsets = [2, 3, 0, 0], sizes = [1, 1, 10, 1], strides = [1, 1, 1, 1]} : vector<3x8x10x1xf32> to vector<1x1x10x1xf32>
    %311 = vector.shape_cast %310 : vector<1x1x10x1xf32> to vector<10x1xf32>
    %312 = vector.shape_cast %311 : vector<10x1xf32> to vector<1x10x1xf32>
    %313 = vector.broadcast %309 : vector<7x1x128xf32> to vector<7x10x128xf32>
    %314 = vector.broadcast %312 : vector<1x10x1xf32> to vector<7x10x128xf32>
    %315 = arith.mulf %313, %314 : vector<7x10x128xf32>
    %316 = arith.addf %308, %315 : vector<7x10x128xf32>
    %317 = vector.extract_strided_slice %284 {offsets = [0, 4, 0], sizes = [7, 1, 128], strides = [1, 1, 1]} : vector<7x8x128xf32> to vector<7x1x128xf32>
    %318 = vector.extract_strided_slice %147 {offsets = [2, 4, 0, 0], sizes = [1, 1, 10, 1], strides = [1, 1, 1, 1]} : vector<3x8x10x1xf32> to vector<1x1x10x1xf32>
    %319 = vector.shape_cast %318 : vector<1x1x10x1xf32> to vector<10x1xf32>
    %320 = vector.shape_cast %319 : vector<10x1xf32> to vector<1x10x1xf32>
    %321 = vector.broadcast %317 : vector<7x1x128xf32> to vector<7x10x128xf32>
    %322 = vector.broadcast %320 : vector<1x10x1xf32> to vector<7x10x128xf32>
    %323 = arith.mulf %321, %322 : vector<7x10x128xf32>
    %324 = arith.addf %316, %323 : vector<7x10x128xf32>
    %325 = vector.extract_strided_slice %284 {offsets = [0, 5, 0], sizes = [7, 1, 128], strides = [1, 1, 1]} : vector<7x8x128xf32> to vector<7x1x128xf32>
    %326 = vector.extract_strided_slice %147 {offsets = [2, 5, 0, 0], sizes = [1, 1, 10, 1], strides = [1, 1, 1, 1]} : vector<3x8x10x1xf32> to vector<1x1x10x1xf32>
    %327 = vector.shape_cast %326 : vector<1x1x10x1xf32> to vector<10x1xf32>
    %328 = vector.shape_cast %327 : vector<10x1xf32> to vector<1x10x1xf32>
    %329 = vector.broadcast %325 : vector<7x1x128xf32> to vector<7x10x128xf32>
    %330 = vector.broadcast %328 : vector<1x10x1xf32> to vector<7x10x128xf32>
    %331 = arith.mulf %329, %330 : vector<7x10x128xf32>
    %332 = arith.addf %324, %331 : vector<7x10x128xf32>
    %333 = vector.extract_strided_slice %284 {offsets = [0, 6, 0], sizes = [7, 1, 128], strides = [1, 1, 1]} : vector<7x8x128xf32> to vector<7x1x128xf32>
    %334 = vector.extract_strided_slice %147 {offsets = [2, 6, 0, 0], sizes = [1, 1, 10, 1], strides = [1, 1, 1, 1]} : vector<3x8x10x1xf32> to vector<1x1x10x1xf32>
    %335 = vector.shape_cast %334 : vector<1x1x10x1xf32> to vector<10x1xf32>
    %336 = vector.shape_cast %335 : vector<10x1xf32> to vector<1x10x1xf32>
    %337 = vector.broadcast %333 : vector<7x1x128xf32> to vector<7x10x128xf32>
    %338 = vector.broadcast %336 : vector<1x10x1xf32> to vector<7x10x128xf32>
    %339 = arith.mulf %337, %338 : vector<7x10x128xf32>
    %340 = arith.addf %332, %339 : vector<7x10x128xf32>
    %341 = vector.extract_strided_slice %284 {offsets = [0, 7, 0], sizes = [7, 1, 128], strides = [1, 1, 1]} : vector<7x8x128xf32> to vector<7x1x128xf32>
    %342 = vector.extract_strided_slice %147 {offsets = [2, 7, 0, 0], sizes = [1, 1, 10, 1], strides = [1, 1, 1, 1]} : vector<3x8x10x1xf32> to vector<1x1x10x1xf32>
    %343 = vector.shape_cast %342 : vector<1x1x10x1xf32> to vector<10x1xf32>
    %344 = vector.shape_cast %343 : vector<10x1xf32> to vector<1x10x1xf32>
    %345 = vector.broadcast %341 : vector<7x1x128xf32> to vector<7x10x128xf32>
    %346 = vector.broadcast %344 : vector<1x10x1xf32> to vector<7x10x128xf32>
    %347 = arith.mulf %345, %346 : vector<7x10x128xf32>
    %348 = arith.addf %340, %347 : vector<7x10x128xf32>
    %cst_32 = arith.constant 0.000000e+00 : f32
    %349 = vector.broadcast %cst_32 : f32 to vector<7x10x128xf32>
    %350 = arith.maximumf %348, %349 : vector<7x10x128xf32>
    %351 = vector.extract_strided_slice %350 {offsets = [0, 0, 0], sizes = [6, 10, 128], strides = [1, 1, 1]} : vector<7x10x128xf32> to vector<6x10x128xf32>
    %352 = vector.shape_cast %351 : vector<6x10x128xf32> to vector<3x2x10x128xf32>
    %cst_33 = arith.constant dense<0xFF800000> : vector<3x10x128xf32>
    %353 = vector.multi_reduction <maximumf>, %352, %cst_33 [1] : vector<3x2x10x128xf32> to vector<3x10x128xf32>
    %c0_34 = arith.constant 0 : index
    %c0_35 = arith.constant 0 : index
    %c0_36 = arith.constant 0 : index
    %c0_37 = arith.constant 0 : index
    %354 = vector.load %arg8[%c0_34, %c0_35, %c0_36, %c0_37] : memref<3x10x8x1xf32, #tpu.memory_space<vmem>>, vector<3x10x8x1xf32>
    %cst_38 = arith.constant 0.000000e+00 : f32
    %355 = vector.broadcast %cst_38 : f32 to vector<2x10x128xf32>
    %356 = tpu.concatenate %355, %353, %355 in 0 : vector<2x10x128xf32>, vector<3x10x128xf32>, vector<2x10x128xf32> -> vector<7x10x128xf32>
    %cst_39 = arith.constant 0.000000e+00 : f32
    %357 = vector.broadcast %cst_39 : f32 to vector<5x8x128xf32>
    %c0_40 = arith.constant 0 : index
    %c0_41 = arith.constant 0 : index
    %c0_42 = arith.constant 0 : index
    %358 = vector.load %arg9[%c0_40, %c0_41, %c0_42] : memref<1x8x1xf32, #tpu.memory_space<vmem>>, vector<1x8x1xf32>
    %359 = vector.broadcast %358 : vector<1x8x1xf32> to vector<5x8x128xf32>
    %360 = arith.addf %357, %359 : vector<5x8x128xf32>
    %361 = vector.extract_strided_slice %356 {offsets = [0, 0, 0], sizes = [5, 10, 128], strides = [1, 1, 1]} : vector<7x10x128xf32> to vector<5x10x128xf32>
    %362 = vector.extract_strided_slice %361 {offsets = [0, 0, 0], sizes = [5, 1, 128], strides = [1, 1, 1]} : vector<5x10x128xf32> to vector<5x1x128xf32>
    %363 = vector.extract_strided_slice %354 {offsets = [0, 0, 0, 0], sizes = [1, 1, 8, 1], strides = [1, 1, 1, 1]} : vector<3x10x8x1xf32> to vector<1x1x8x1xf32>
    %364 = vector.shape_cast %363 : vector<1x1x8x1xf32> to vector<8x1xf32>
    %365 = vector.shape_cast %364 : vector<8x1xf32> to vector<1x8x1xf32>
    %366 = vector.broadcast %362 : vector<5x1x128xf32> to vector<5x8x128xf32>
    %367 = vector.broadcast %365 : vector<1x8x1xf32> to vector<5x8x128xf32>
    %368 = arith.mulf %366, %367 : vector<5x8x128xf32>
    %369 = arith.addf %360, %368 : vector<5x8x128xf32>
    %370 = vector.extract_strided_slice %361 {offsets = [0, 1, 0], sizes = [5, 1, 128], strides = [1, 1, 1]} : vector<5x10x128xf32> to vector<5x1x128xf32>
    %371 = vector.extract_strided_slice %354 {offsets = [0, 1, 0, 0], sizes = [1, 1, 8, 1], strides = [1, 1, 1, 1]} : vector<3x10x8x1xf32> to vector<1x1x8x1xf32>
    %372 = vector.shape_cast %371 : vector<1x1x8x1xf32> to vector<8x1xf32>
    %373 = vector.shape_cast %372 : vector<8x1xf32> to vector<1x8x1xf32>
    %374 = vector.broadcast %370 : vector<5x1x128xf32> to vector<5x8x128xf32>
    %375 = vector.broadcast %373 : vector<1x8x1xf32> to vector<5x8x128xf32>
    %376 = arith.mulf %374, %375 : vector<5x8x128xf32>
    %377 = arith.addf %369, %376 : vector<5x8x128xf32>
    %378 = vector.extract_strided_slice %361 {offsets = [0, 2, 0], sizes = [5, 1, 128], strides = [1, 1, 1]} : vector<5x10x128xf32> to vector<5x1x128xf32>
    %379 = vector.extract_strided_slice %354 {offsets = [0, 2, 0, 0], sizes = [1, 1, 8, 1], strides = [1, 1, 1, 1]} : vector<3x10x8x1xf32> to vector<1x1x8x1xf32>
    %380 = vector.shape_cast %379 : vector<1x1x8x1xf32> to vector<8x1xf32>
    %381 = vector.shape_cast %380 : vector<8x1xf32> to vector<1x8x1xf32>
    %382 = vector.broadcast %378 : vector<5x1x128xf32> to vector<5x8x128xf32>
    %383 = vector.broadcast %381 : vector<1x8x1xf32> to vector<5x8x128xf32>
    %384 = arith.mulf %382, %383 : vector<5x8x128xf32>
    %385 = arith.addf %377, %384 : vector<5x8x128xf32>
    %386 = vector.extract_strided_slice %361 {offsets = [0, 3, 0], sizes = [5, 1, 128], strides = [1, 1, 1]} : vector<5x10x128xf32> to vector<5x1x128xf32>
    %387 = vector.extract_strided_slice %354 {offsets = [0, 3, 0, 0], sizes = [1, 1, 8, 1], strides = [1, 1, 1, 1]} : vector<3x10x8x1xf32> to vector<1x1x8x1xf32>
    %388 = vector.shape_cast %387 : vector<1x1x8x1xf32> to vector<8x1xf32>
    %389 = vector.shape_cast %388 : vector<8x1xf32> to vector<1x8x1xf32>
    %390 = vector.broadcast %386 : vector<5x1x128xf32> to vector<5x8x128xf32>
    %391 = vector.broadcast %389 : vector<1x8x1xf32> to vector<5x8x128xf32>
    %392 = arith.mulf %390, %391 : vector<5x8x128xf32>
    %393 = arith.addf %385, %392 : vector<5x8x128xf32>
    %394 = vector.extract_strided_slice %361 {offsets = [0, 4, 0], sizes = [5, 1, 128], strides = [1, 1, 1]} : vector<5x10x128xf32> to vector<5x1x128xf32>
    %395 = vector.extract_strided_slice %354 {offsets = [0, 4, 0, 0], sizes = [1, 1, 8, 1], strides = [1, 1, 1, 1]} : vector<3x10x8x1xf32> to vector<1x1x8x1xf32>
    %396 = vector.shape_cast %395 : vector<1x1x8x1xf32> to vector<8x1xf32>
    %397 = vector.shape_cast %396 : vector<8x1xf32> to vector<1x8x1xf32>
    %398 = vector.broadcast %394 : vector<5x1x128xf32> to vector<5x8x128xf32>
    %399 = vector.broadcast %397 : vector<1x8x1xf32> to vector<5x8x128xf32>
    %400 = arith.mulf %398, %399 : vector<5x8x128xf32>
    %401 = arith.addf %393, %400 : vector<5x8x128xf32>
    %402 = vector.extract_strided_slice %361 {offsets = [0, 5, 0], sizes = [5, 1, 128], strides = [1, 1, 1]} : vector<5x10x128xf32> to vector<5x1x128xf32>
    %403 = vector.extract_strided_slice %354 {offsets = [0, 5, 0, 0], sizes = [1, 1, 8, 1], strides = [1, 1, 1, 1]} : vector<3x10x8x1xf32> to vector<1x1x8x1xf32>
    %404 = vector.shape_cast %403 : vector<1x1x8x1xf32> to vector<8x1xf32>
    %405 = vector.shape_cast %404 : vector<8x1xf32> to vector<1x8x1xf32>
    %406 = vector.broadcast %402 : vector<5x1x128xf32> to vector<5x8x128xf32>
    %407 = vector.broadcast %405 : vector<1x8x1xf32> to vector<5x8x128xf32>
    %408 = arith.mulf %406, %407 : vector<5x8x128xf32>
    %409 = arith.addf %401, %408 : vector<5x8x128xf32>
    %410 = vector.extract_strided_slice %361 {offsets = [0, 6, 0], sizes = [5, 1, 128], strides = [1, 1, 1]} : vector<5x10x128xf32> to vector<5x1x128xf32>
    %411 = vector.extract_strided_slice %354 {offsets = [0, 6, 0, 0], sizes = [1, 1, 8, 1], strides = [1, 1, 1, 1]} : vector<3x10x8x1xf32> to vector<1x1x8x1xf32>
    %412 = vector.shape_cast %411 : vector<1x1x8x1xf32> to vector<8x1xf32>
    %413 = vector.shape_cast %412 : vector<8x1xf32> to vector<1x8x1xf32>
    %414 = vector.broadcast %410 : vector<5x1x128xf32> to vector<5x8x128xf32>
    %415 = vector.broadcast %413 : vector<1x8x1xf32> to vector<5x8x128xf32>
    %416 = arith.mulf %414, %415 : vector<5x8x128xf32>
    %417 = arith.addf %409, %416 : vector<5x8x128xf32>
    %418 = vector.extract_strided_slice %361 {offsets = [0, 7, 0], sizes = [5, 1, 128], strides = [1, 1, 1]} : vector<5x10x128xf32> to vector<5x1x128xf32>
    %419 = vector.extract_strided_slice %354 {offsets = [0, 7, 0, 0], sizes = [1, 1, 8, 1], strides = [1, 1, 1, 1]} : vector<3x10x8x1xf32> to vector<1x1x8x1xf32>
    %420 = vector.shape_cast %419 : vector<1x1x8x1xf32> to vector<8x1xf32>
    %421 = vector.shape_cast %420 : vector<8x1xf32> to vector<1x8x1xf32>
    %422 = vector.broadcast %418 : vector<5x1x128xf32> to vector<5x8x128xf32>
    %423 = vector.broadcast %421 : vector<1x8x1xf32> to vector<5x8x128xf32>
    %424 = arith.mulf %422, %423 : vector<5x8x128xf32>
    %425 = arith.addf %417, %424 : vector<5x8x128xf32>
    %426 = vector.extract_strided_slice %361 {offsets = [0, 8, 0], sizes = [5, 1, 128], strides = [1, 1, 1]} : vector<5x10x128xf32> to vector<5x1x128xf32>
    %427 = vector.extract_strided_slice %354 {offsets = [0, 8, 0, 0], sizes = [1, 1, 8, 1], strides = [1, 1, 1, 1]} : vector<3x10x8x1xf32> to vector<1x1x8x1xf32>
    %428 = vector.shape_cast %427 : vector<1x1x8x1xf32> to vector<8x1xf32>
    %429 = vector.shape_cast %428 : vector<8x1xf32> to vector<1x8x1xf32>
    %430 = vector.broadcast %426 : vector<5x1x128xf32> to vector<5x8x128xf32>
    %431 = vector.broadcast %429 : vector<1x8x1xf32> to vector<5x8x128xf32>
    %432 = arith.mulf %430, %431 : vector<5x8x128xf32>
    %433 = arith.addf %425, %432 : vector<5x8x128xf32>
    %434 = vector.extract_strided_slice %361 {offsets = [0, 9, 0], sizes = [5, 1, 128], strides = [1, 1, 1]} : vector<5x10x128xf32> to vector<5x1x128xf32>
    %435 = vector.extract_strided_slice %354 {offsets = [0, 9, 0, 0], sizes = [1, 1, 8, 1], strides = [1, 1, 1, 1]} : vector<3x10x8x1xf32> to vector<1x1x8x1xf32>
    %436 = vector.shape_cast %435 : vector<1x1x8x1xf32> to vector<8x1xf32>
    %437 = vector.shape_cast %436 : vector<8x1xf32> to vector<1x8x1xf32>
    %438 = vector.broadcast %434 : vector<5x1x128xf32> to vector<5x8x128xf32>
    %439 = vector.broadcast %437 : vector<1x8x1xf32> to vector<5x8x128xf32>
    %440 = arith.mulf %438, %439 : vector<5x8x128xf32>
    %441 = arith.addf %433, %440 : vector<5x8x128xf32>
    %442 = vector.extract_strided_slice %356 {offsets = [1, 0, 0], sizes = [5, 10, 128], strides = [1, 1, 1]} : vector<7x10x128xf32> to vector<5x10x128xf32>
    %443 = vector.extract_strided_slice %442 {offsets = [0, 0, 0], sizes = [5, 1, 128], strides = [1, 1, 1]} : vector<5x10x128xf32> to vector<5x1x128xf32>
    %444 = vector.extract_strided_slice %354 {offsets = [1, 0, 0, 0], sizes = [1, 1, 8, 1], strides = [1, 1, 1, 1]} : vector<3x10x8x1xf32> to vector<1x1x8x1xf32>
    %445 = vector.shape_cast %444 : vector<1x1x8x1xf32> to vector<8x1xf32>
    %446 = vector.shape_cast %445 : vector<8x1xf32> to vector<1x8x1xf32>
    %447 = vector.broadcast %443 : vector<5x1x128xf32> to vector<5x8x128xf32>
    %448 = vector.broadcast %446 : vector<1x8x1xf32> to vector<5x8x128xf32>
    %449 = arith.mulf %447, %448 : vector<5x8x128xf32>
    %450 = arith.addf %441, %449 : vector<5x8x128xf32>
    %451 = vector.extract_strided_slice %442 {offsets = [0, 1, 0], sizes = [5, 1, 128], strides = [1, 1, 1]} : vector<5x10x128xf32> to vector<5x1x128xf32>
    %452 = vector.extract_strided_slice %354 {offsets = [1, 1, 0, 0], sizes = [1, 1, 8, 1], strides = [1, 1, 1, 1]} : vector<3x10x8x1xf32> to vector<1x1x8x1xf32>
    %453 = vector.shape_cast %452 : vector<1x1x8x1xf32> to vector<8x1xf32>
    %454 = vector.shape_cast %453 : vector<8x1xf32> to vector<1x8x1xf32>
    %455 = vector.broadcast %451 : vector<5x1x128xf32> to vector<5x8x128xf32>
    %456 = vector.broadcast %454 : vector<1x8x1xf32> to vector<5x8x128xf32>
    %457 = arith.mulf %455, %456 : vector<5x8x128xf32>
    %458 = arith.addf %450, %457 : vector<5x8x128xf32>
    %459 = vector.extract_strided_slice %442 {offsets = [0, 2, 0], sizes = [5, 1, 128], strides = [1, 1, 1]} : vector<5x10x128xf32> to vector<5x1x128xf32>
    %460 = vector.extract_strided_slice %354 {offsets = [1, 2, 0, 0], sizes = [1, 1, 8, 1], strides = [1, 1, 1, 1]} : vector<3x10x8x1xf32> to vector<1x1x8x1xf32>
    %461 = vector.shape_cast %460 : vector<1x1x8x1xf32> to vector<8x1xf32>
    %462 = vector.shape_cast %461 : vector<8x1xf32> to vector<1x8x1xf32>
    %463 = vector.broadcast %459 : vector<5x1x128xf32> to vector<5x8x128xf32>
    %464 = vector.broadcast %462 : vector<1x8x1xf32> to vector<5x8x128xf32>
    %465 = arith.mulf %463, %464 : vector<5x8x128xf32>
    %466 = arith.addf %458, %465 : vector<5x8x128xf32>
    %467 = vector.extract_strided_slice %442 {offsets = [0, 3, 0], sizes = [5, 1, 128], strides = [1, 1, 1]} : vector<5x10x128xf32> to vector<5x1x128xf32>
    %468 = vector.extract_strided_slice %354 {offsets = [1, 3, 0, 0], sizes = [1, 1, 8, 1], strides = [1, 1, 1, 1]} : vector<3x10x8x1xf32> to vector<1x1x8x1xf32>
    %469 = vector.shape_cast %468 : vector<1x1x8x1xf32> to vector<8x1xf32>
    %470 = vector.shape_cast %469 : vector<8x1xf32> to vector<1x8x1xf32>
    %471 = vector.broadcast %467 : vector<5x1x128xf32> to vector<5x8x128xf32>
    %472 = vector.broadcast %470 : vector<1x8x1xf32> to vector<5x8x128xf32>
    %473 = arith.mulf %471, %472 : vector<5x8x128xf32>
    %474 = arith.addf %466, %473 : vector<5x8x128xf32>
    %475 = vector.extract_strided_slice %442 {offsets = [0, 4, 0], sizes = [5, 1, 128], strides = [1, 1, 1]} : vector<5x10x128xf32> to vector<5x1x128xf32>
    %476 = vector.extract_strided_slice %354 {offsets = [1, 4, 0, 0], sizes = [1, 1, 8, 1], strides = [1, 1, 1, 1]} : vector<3x10x8x1xf32> to vector<1x1x8x1xf32>
    %477 = vector.shape_cast %476 : vector<1x1x8x1xf32> to vector<8x1xf32>
    %478 = vector.shape_cast %477 : vector<8x1xf32> to vector<1x8x1xf32>
    %479 = vector.broadcast %475 : vector<5x1x128xf32> to vector<5x8x128xf32>
    %480 = vector.broadcast %478 : vector<1x8x1xf32> to vector<5x8x128xf32>
    %481 = arith.mulf %479, %480 : vector<5x8x128xf32>
    %482 = arith.addf %474, %481 : vector<5x8x128xf32>
    %483 = vector.extract_strided_slice %442 {offsets = [0, 5, 0], sizes = [5, 1, 128], strides = [1, 1, 1]} : vector<5x10x128xf32> to vector<5x1x128xf32>
    %484 = vector.extract_strided_slice %354 {offsets = [1, 5, 0, 0], sizes = [1, 1, 8, 1], strides = [1, 1, 1, 1]} : vector<3x10x8x1xf32> to vector<1x1x8x1xf32>
    %485 = vector.shape_cast %484 : vector<1x1x8x1xf32> to vector<8x1xf32>
    %486 = vector.shape_cast %485 : vector<8x1xf32> to vector<1x8x1xf32>
    %487 = vector.broadcast %483 : vector<5x1x128xf32> to vector<5x8x128xf32>
    %488 = vector.broadcast %486 : vector<1x8x1xf32> to vector<5x8x128xf32>
    %489 = arith.mulf %487, %488 : vector<5x8x128xf32>
    %490 = arith.addf %482, %489 : vector<5x8x128xf32>
    %491 = vector.extract_strided_slice %442 {offsets = [0, 6, 0], sizes = [5, 1, 128], strides = [1, 1, 1]} : vector<5x10x128xf32> to vector<5x1x128xf32>
    %492 = vector.extract_strided_slice %354 {offsets = [1, 6, 0, 0], sizes = [1, 1, 8, 1], strides = [1, 1, 1, 1]} : vector<3x10x8x1xf32> to vector<1x1x8x1xf32>
    %493 = vector.shape_cast %492 : vector<1x1x8x1xf32> to vector<8x1xf32>
    %494 = vector.shape_cast %493 : vector<8x1xf32> to vector<1x8x1xf32>
    %495 = vector.broadcast %491 : vector<5x1x128xf32> to vector<5x8x128xf32>
    %496 = vector.broadcast %494 : vector<1x8x1xf32> to vector<5x8x128xf32>
    %497 = arith.mulf %495, %496 : vector<5x8x128xf32>
    %498 = arith.addf %490, %497 : vector<5x8x128xf32>
    %499 = vector.extract_strided_slice %442 {offsets = [0, 7, 0], sizes = [5, 1, 128], strides = [1, 1, 1]} : vector<5x10x128xf32> to vector<5x1x128xf32>
    %500 = vector.extract_strided_slice %354 {offsets = [1, 7, 0, 0], sizes = [1, 1, 8, 1], strides = [1, 1, 1, 1]} : vector<3x10x8x1xf32> to vector<1x1x8x1xf32>
    %501 = vector.shape_cast %500 : vector<1x1x8x1xf32> to vector<8x1xf32>
    %502 = vector.shape_cast %501 : vector<8x1xf32> to vector<1x8x1xf32>
    %503 = vector.broadcast %499 : vector<5x1x128xf32> to vector<5x8x128xf32>
    %504 = vector.broadcast %502 : vector<1x8x1xf32> to vector<5x8x128xf32>
    %505 = arith.mulf %503, %504 : vector<5x8x128xf32>
    %506 = arith.addf %498, %505 : vector<5x8x128xf32>
    %507 = vector.extract_strided_slice %442 {offsets = [0, 8, 0], sizes = [5, 1, 128], strides = [1, 1, 1]} : vector<5x10x128xf32> to vector<5x1x128xf32>
    %508 = vector.extract_strided_slice %354 {offsets = [1, 8, 0, 0], sizes = [1, 1, 8, 1], strides = [1, 1, 1, 1]} : vector<3x10x8x1xf32> to vector<1x1x8x1xf32>
    %509 = vector.shape_cast %508 : vector<1x1x8x1xf32> to vector<8x1xf32>
    %510 = vector.shape_cast %509 : vector<8x1xf32> to vector<1x8x1xf32>
    %511 = vector.broadcast %507 : vector<5x1x128xf32> to vector<5x8x128xf32>
    %512 = vector.broadcast %510 : vector<1x8x1xf32> to vector<5x8x128xf32>
    %513 = arith.mulf %511, %512 : vector<5x8x128xf32>
    %514 = arith.addf %506, %513 : vector<5x8x128xf32>
    %515 = vector.extract_strided_slice %442 {offsets = [0, 9, 0], sizes = [5, 1, 128], strides = [1, 1, 1]} : vector<5x10x128xf32> to vector<5x1x128xf32>
    %516 = vector.extract_strided_slice %354 {offsets = [1, 9, 0, 0], sizes = [1, 1, 8, 1], strides = [1, 1, 1, 1]} : vector<3x10x8x1xf32> to vector<1x1x8x1xf32>
    %517 = vector.shape_cast %516 : vector<1x1x8x1xf32> to vector<8x1xf32>
    %518 = vector.shape_cast %517 : vector<8x1xf32> to vector<1x8x1xf32>
    %519 = vector.broadcast %515 : vector<5x1x128xf32> to vector<5x8x128xf32>
    %520 = vector.broadcast %518 : vector<1x8x1xf32> to vector<5x8x128xf32>
    %521 = arith.mulf %519, %520 : vector<5x8x128xf32>
    %522 = arith.addf %514, %521 : vector<5x8x128xf32>
    %523 = vector.extract_strided_slice %356 {offsets = [2, 0, 0], sizes = [5, 10, 128], strides = [1, 1, 1]} : vector<7x10x128xf32> to vector<5x10x128xf32>
    %524 = vector.extract_strided_slice %523 {offsets = [0, 0, 0], sizes = [5, 1, 128], strides = [1, 1, 1]} : vector<5x10x128xf32> to vector<5x1x128xf32>
    %525 = vector.extract_strided_slice %354 {offsets = [2, 0, 0, 0], sizes = [1, 1, 8, 1], strides = [1, 1, 1, 1]} : vector<3x10x8x1xf32> to vector<1x1x8x1xf32>
    %526 = vector.shape_cast %525 : vector<1x1x8x1xf32> to vector<8x1xf32>
    %527 = vector.shape_cast %526 : vector<8x1xf32> to vector<1x8x1xf32>
    %528 = vector.broadcast %524 : vector<5x1x128xf32> to vector<5x8x128xf32>
    %529 = vector.broadcast %527 : vector<1x8x1xf32> to vector<5x8x128xf32>
    %530 = arith.mulf %528, %529 : vector<5x8x128xf32>
    %531 = arith.addf %522, %530 : vector<5x8x128xf32>
    %532 = vector.extract_strided_slice %523 {offsets = [0, 1, 0], sizes = [5, 1, 128], strides = [1, 1, 1]} : vector<5x10x128xf32> to vector<5x1x128xf32>
    %533 = vector.extract_strided_slice %354 {offsets = [2, 1, 0, 0], sizes = [1, 1, 8, 1], strides = [1, 1, 1, 1]} : vector<3x10x8x1xf32> to vector<1x1x8x1xf32>
    %534 = vector.shape_cast %533 : vector<1x1x8x1xf32> to vector<8x1xf32>
    %535 = vector.shape_cast %534 : vector<8x1xf32> to vector<1x8x1xf32>
    %536 = vector.broadcast %532 : vector<5x1x128xf32> to vector<5x8x128xf32>
    %537 = vector.broadcast %535 : vector<1x8x1xf32> to vector<5x8x128xf32>
    %538 = arith.mulf %536, %537 : vector<5x8x128xf32>
    %539 = arith.addf %531, %538 : vector<5x8x128xf32>
    %540 = vector.extract_strided_slice %523 {offsets = [0, 2, 0], sizes = [5, 1, 128], strides = [1, 1, 1]} : vector<5x10x128xf32> to vector<5x1x128xf32>
    %541 = vector.extract_strided_slice %354 {offsets = [2, 2, 0, 0], sizes = [1, 1, 8, 1], strides = [1, 1, 1, 1]} : vector<3x10x8x1xf32> to vector<1x1x8x1xf32>
    %542 = vector.shape_cast %541 : vector<1x1x8x1xf32> to vector<8x1xf32>
    %543 = vector.shape_cast %542 : vector<8x1xf32> to vector<1x8x1xf32>
    %544 = vector.broadcast %540 : vector<5x1x128xf32> to vector<5x8x128xf32>
    %545 = vector.broadcast %543 : vector<1x8x1xf32> to vector<5x8x128xf32>
    %546 = arith.mulf %544, %545 : vector<5x8x128xf32>
    %547 = arith.addf %539, %546 : vector<5x8x128xf32>
    %548 = vector.extract_strided_slice %523 {offsets = [0, 3, 0], sizes = [5, 1, 128], strides = [1, 1, 1]} : vector<5x10x128xf32> to vector<5x1x128xf32>
    %549 = vector.extract_strided_slice %354 {offsets = [2, 3, 0, 0], sizes = [1, 1, 8, 1], strides = [1, 1, 1, 1]} : vector<3x10x8x1xf32> to vector<1x1x8x1xf32>
    %550 = vector.shape_cast %549 : vector<1x1x8x1xf32> to vector<8x1xf32>
    %551 = vector.shape_cast %550 : vector<8x1xf32> to vector<1x8x1xf32>
    %552 = vector.broadcast %548 : vector<5x1x128xf32> to vector<5x8x128xf32>
    %553 = vector.broadcast %551 : vector<1x8x1xf32> to vector<5x8x128xf32>
    %554 = arith.mulf %552, %553 : vector<5x8x128xf32>
    %555 = arith.addf %547, %554 : vector<5x8x128xf32>
    %556 = vector.extract_strided_slice %523 {offsets = [0, 4, 0], sizes = [5, 1, 128], strides = [1, 1, 1]} : vector<5x10x128xf32> to vector<5x1x128xf32>
    %557 = vector.extract_strided_slice %354 {offsets = [2, 4, 0, 0], sizes = [1, 1, 8, 1], strides = [1, 1, 1, 1]} : vector<3x10x8x1xf32> to vector<1x1x8x1xf32>
    %558 = vector.shape_cast %557 : vector<1x1x8x1xf32> to vector<8x1xf32>
    %559 = vector.shape_cast %558 : vector<8x1xf32> to vector<1x8x1xf32>
    %560 = vector.broadcast %556 : vector<5x1x128xf32> to vector<5x8x128xf32>
    %561 = vector.broadcast %559 : vector<1x8x1xf32> to vector<5x8x128xf32>
    %562 = arith.mulf %560, %561 : vector<5x8x128xf32>
    %563 = arith.addf %555, %562 : vector<5x8x128xf32>
    %564 = vector.extract_strided_slice %523 {offsets = [0, 5, 0], sizes = [5, 1, 128], strides = [1, 1, 1]} : vector<5x10x128xf32> to vector<5x1x128xf32>
    %565 = vector.extract_strided_slice %354 {offsets = [2, 5, 0, 0], sizes = [1, 1, 8, 1], strides = [1, 1, 1, 1]} : vector<3x10x8x1xf32> to vector<1x1x8x1xf32>
    %566 = vector.shape_cast %565 : vector<1x1x8x1xf32> to vector<8x1xf32>
    %567 = vector.shape_cast %566 : vector<8x1xf32> to vector<1x8x1xf32>
    %568 = vector.broadcast %564 : vector<5x1x128xf32> to vector<5x8x128xf32>
    %569 = vector.broadcast %567 : vector<1x8x1xf32> to vector<5x8x128xf32>
    %570 = arith.mulf %568, %569 : vector<5x8x128xf32>
    %571 = arith.addf %563, %570 : vector<5x8x128xf32>
    %572 = vector.extract_strided_slice %523 {offsets = [0, 6, 0], sizes = [5, 1, 128], strides = [1, 1, 1]} : vector<5x10x128xf32> to vector<5x1x128xf32>
    %573 = vector.extract_strided_slice %354 {offsets = [2, 6, 0, 0], sizes = [1, 1, 8, 1], strides = [1, 1, 1, 1]} : vector<3x10x8x1xf32> to vector<1x1x8x1xf32>
    %574 = vector.shape_cast %573 : vector<1x1x8x1xf32> to vector<8x1xf32>
    %575 = vector.shape_cast %574 : vector<8x1xf32> to vector<1x8x1xf32>
    %576 = vector.broadcast %572 : vector<5x1x128xf32> to vector<5x8x128xf32>
    %577 = vector.broadcast %575 : vector<1x8x1xf32> to vector<5x8x128xf32>
    %578 = arith.mulf %576, %577 : vector<5x8x128xf32>
    %579 = arith.addf %571, %578 : vector<5x8x128xf32>
    %580 = vector.extract_strided_slice %523 {offsets = [0, 7, 0], sizes = [5, 1, 128], strides = [1, 1, 1]} : vector<5x10x128xf32> to vector<5x1x128xf32>
    %581 = vector.extract_strided_slice %354 {offsets = [2, 7, 0, 0], sizes = [1, 1, 8, 1], strides = [1, 1, 1, 1]} : vector<3x10x8x1xf32> to vector<1x1x8x1xf32>
    %582 = vector.shape_cast %581 : vector<1x1x8x1xf32> to vector<8x1xf32>
    %583 = vector.shape_cast %582 : vector<8x1xf32> to vector<1x8x1xf32>
    %584 = vector.broadcast %580 : vector<5x1x128xf32> to vector<5x8x128xf32>
    %585 = vector.broadcast %583 : vector<1x8x1xf32> to vector<5x8x128xf32>
    %586 = arith.mulf %584, %585 : vector<5x8x128xf32>
    %587 = arith.addf %579, %586 : vector<5x8x128xf32>
    %588 = vector.extract_strided_slice %523 {offsets = [0, 8, 0], sizes = [5, 1, 128], strides = [1, 1, 1]} : vector<5x10x128xf32> to vector<5x1x128xf32>
    %589 = vector.extract_strided_slice %354 {offsets = [2, 8, 0, 0], sizes = [1, 1, 8, 1], strides = [1, 1, 1, 1]} : vector<3x10x8x1xf32> to vector<1x1x8x1xf32>
    %590 = vector.shape_cast %589 : vector<1x1x8x1xf32> to vector<8x1xf32>
    %591 = vector.shape_cast %590 : vector<8x1xf32> to vector<1x8x1xf32>
    %592 = vector.broadcast %588 : vector<5x1x128xf32> to vector<5x8x128xf32>
    %593 = vector.broadcast %591 : vector<1x8x1xf32> to vector<5x8x128xf32>
    %594 = arith.mulf %592, %593 : vector<5x8x128xf32>
    %595 = arith.addf %587, %594 : vector<5x8x128xf32>
    %596 = vector.extract_strided_slice %523 {offsets = [0, 9, 0], sizes = [5, 1, 128], strides = [1, 1, 1]} : vector<5x10x128xf32> to vector<5x1x128xf32>
    %597 = vector.extract_strided_slice %354 {offsets = [2, 9, 0, 0], sizes = [1, 1, 8, 1], strides = [1, 1, 1, 1]} : vector<3x10x8x1xf32> to vector<1x1x8x1xf32>
    %598 = vector.shape_cast %597 : vector<1x1x8x1xf32> to vector<8x1xf32>
    %599 = vector.shape_cast %598 : vector<8x1xf32> to vector<1x8x1xf32>
    %600 = vector.broadcast %596 : vector<5x1x128xf32> to vector<5x8x128xf32>
    %601 = vector.broadcast %599 : vector<1x8x1xf32> to vector<5x8x128xf32>
    %602 = arith.mulf %600, %601 : vector<5x8x128xf32>
    %603 = arith.addf %595, %602 : vector<5x8x128xf32>
    %cst_43 = arith.constant 0.000000e+00 : f32
    %604 = vector.broadcast %cst_43 : f32 to vector<5x8x128xf32>
    %605 = arith.maximumf %603, %604 : vector<5x8x128xf32>
    %606 = vector.extract_strided_slice %605 {offsets = [0, 0, 0], sizes = [4, 8, 128], strides = [1, 1, 1]} : vector<5x8x128xf32> to vector<4x8x128xf32>
    %607 = vector.shape_cast %606 : vector<4x8x128xf32> to vector<2x2x8x128xf32>
    %cst_44 = arith.constant dense<0xFF800000> : vector<2x8x128xf32>
    %608 = vector.multi_reduction <maximumf>, %607, %cst_44 [1] : vector<2x2x8x128xf32> to vector<2x8x128xf32>
    %c0_45 = arith.constant 0 : index
    %c0_46 = arith.constant 0 : index
    %c0_47 = arith.constant 0 : index
    %c0_48 = arith.constant 0 : index
    %609 = vector.load %arg10[%c0_45, %c0_46, %c0_47, %c0_48] : memref<3x8x4x1xf32, #tpu.memory_space<vmem>>, vector<3x8x4x1xf32>
    %cst_49 = arith.constant 0.000000e+00 : f32
    %610 = vector.broadcast %cst_49 : f32 to vector<2x8x128xf32>
    %611 = tpu.concatenate %610, %608, %610 in 0 : vector<2x8x128xf32>, vector<2x8x128xf32>, vector<2x8x128xf32> -> vector<6x8x128xf32>
    %cst_50 = arith.constant 0.000000e+00 : f32
    %612 = vector.broadcast %cst_50 : f32 to vector<4x4x128xf32>
    %c0_51 = arith.constant 0 : index
    %c0_52 = arith.constant 0 : index
    %c0_53 = arith.constant 0 : index
    %613 = vector.load %arg11[%c0_51, %c0_52, %c0_53] : memref<1x4x1xf32, #tpu.memory_space<vmem>>, vector<1x4x1xf32>
    %614 = vector.broadcast %613 : vector<1x4x1xf32> to vector<4x4x128xf32>
    %615 = arith.addf %612, %614 : vector<4x4x128xf32>
    %616 = vector.extract_strided_slice %611 {offsets = [0, 0, 0], sizes = [4, 8, 128], strides = [1, 1, 1]} : vector<6x8x128xf32> to vector<4x8x128xf32>
    %617 = vector.extract_strided_slice %616 {offsets = [0, 0, 0], sizes = [4, 1, 128], strides = [1, 1, 1]} : vector<4x8x128xf32> to vector<4x1x128xf32>
    %618 = vector.extract_strided_slice %609 {offsets = [0, 0, 0, 0], sizes = [1, 1, 4, 1], strides = [1, 1, 1, 1]} : vector<3x8x4x1xf32> to vector<1x1x4x1xf32>
    %619 = vector.shape_cast %618 : vector<1x1x4x1xf32> to vector<4x1xf32>
    %620 = vector.shape_cast %619 : vector<4x1xf32> to vector<1x4x1xf32>
    %621 = vector.broadcast %617 : vector<4x1x128xf32> to vector<4x4x128xf32>
    %622 = vector.broadcast %620 : vector<1x4x1xf32> to vector<4x4x128xf32>
    %623 = arith.mulf %621, %622 : vector<4x4x128xf32>
    %624 = arith.addf %615, %623 : vector<4x4x128xf32>
    %625 = vector.extract_strided_slice %616 {offsets = [0, 1, 0], sizes = [4, 1, 128], strides = [1, 1, 1]} : vector<4x8x128xf32> to vector<4x1x128xf32>
    %626 = vector.extract_strided_slice %609 {offsets = [0, 1, 0, 0], sizes = [1, 1, 4, 1], strides = [1, 1, 1, 1]} : vector<3x8x4x1xf32> to vector<1x1x4x1xf32>
    %627 = vector.shape_cast %626 : vector<1x1x4x1xf32> to vector<4x1xf32>
    %628 = vector.shape_cast %627 : vector<4x1xf32> to vector<1x4x1xf32>
    %629 = vector.broadcast %625 : vector<4x1x128xf32> to vector<4x4x128xf32>
    %630 = vector.broadcast %628 : vector<1x4x1xf32> to vector<4x4x128xf32>
    %631 = arith.mulf %629, %630 : vector<4x4x128xf32>
    %632 = arith.addf %624, %631 : vector<4x4x128xf32>
    %633 = vector.extract_strided_slice %616 {offsets = [0, 2, 0], sizes = [4, 1, 128], strides = [1, 1, 1]} : vector<4x8x128xf32> to vector<4x1x128xf32>
    %634 = vector.extract_strided_slice %609 {offsets = [0, 2, 0, 0], sizes = [1, 1, 4, 1], strides = [1, 1, 1, 1]} : vector<3x8x4x1xf32> to vector<1x1x4x1xf32>
    %635 = vector.shape_cast %634 : vector<1x1x4x1xf32> to vector<4x1xf32>
    %636 = vector.shape_cast %635 : vector<4x1xf32> to vector<1x4x1xf32>
    %637 = vector.broadcast %633 : vector<4x1x128xf32> to vector<4x4x128xf32>
    %638 = vector.broadcast %636 : vector<1x4x1xf32> to vector<4x4x128xf32>
    %639 = arith.mulf %637, %638 : vector<4x4x128xf32>
    %640 = arith.addf %632, %639 : vector<4x4x128xf32>
    %641 = vector.extract_strided_slice %616 {offsets = [0, 3, 0], sizes = [4, 1, 128], strides = [1, 1, 1]} : vector<4x8x128xf32> to vector<4x1x128xf32>
    %642 = vector.extract_strided_slice %609 {offsets = [0, 3, 0, 0], sizes = [1, 1, 4, 1], strides = [1, 1, 1, 1]} : vector<3x8x4x1xf32> to vector<1x1x4x1xf32>
    %643 = vector.shape_cast %642 : vector<1x1x4x1xf32> to vector<4x1xf32>
    %644 = vector.shape_cast %643 : vector<4x1xf32> to vector<1x4x1xf32>
    %645 = vector.broadcast %641 : vector<4x1x128xf32> to vector<4x4x128xf32>
    %646 = vector.broadcast %644 : vector<1x4x1xf32> to vector<4x4x128xf32>
    %647 = arith.mulf %645, %646 : vector<4x4x128xf32>
    %648 = arith.addf %640, %647 : vector<4x4x128xf32>
    %649 = vector.extract_strided_slice %616 {offsets = [0, 4, 0], sizes = [4, 1, 128], strides = [1, 1, 1]} : vector<4x8x128xf32> to vector<4x1x128xf32>
    %650 = vector.extract_strided_slice %609 {offsets = [0, 4, 0, 0], sizes = [1, 1, 4, 1], strides = [1, 1, 1, 1]} : vector<3x8x4x1xf32> to vector<1x1x4x1xf32>
    %651 = vector.shape_cast %650 : vector<1x1x4x1xf32> to vector<4x1xf32>
    %652 = vector.shape_cast %651 : vector<4x1xf32> to vector<1x4x1xf32>
    %653 = vector.broadcast %649 : vector<4x1x128xf32> to vector<4x4x128xf32>
    %654 = vector.broadcast %652 : vector<1x4x1xf32> to vector<4x4x128xf32>
    %655 = arith.mulf %653, %654 : vector<4x4x128xf32>
    %656 = arith.addf %648, %655 : vector<4x4x128xf32>
    %657 = vector.extract_strided_slice %616 {offsets = [0, 5, 0], sizes = [4, 1, 128], strides = [1, 1, 1]} : vector<4x8x128xf32> to vector<4x1x128xf32>
    %658 = vector.extract_strided_slice %609 {offsets = [0, 5, 0, 0], sizes = [1, 1, 4, 1], strides = [1, 1, 1, 1]} : vector<3x8x4x1xf32> to vector<1x1x4x1xf32>
    %659 = vector.shape_cast %658 : vector<1x1x4x1xf32> to vector<4x1xf32>
    %660 = vector.shape_cast %659 : vector<4x1xf32> to vector<1x4x1xf32>
    %661 = vector.broadcast %657 : vector<4x1x128xf32> to vector<4x4x128xf32>
    %662 = vector.broadcast %660 : vector<1x4x1xf32> to vector<4x4x128xf32>
    %663 = arith.mulf %661, %662 : vector<4x4x128xf32>
    %664 = arith.addf %656, %663 : vector<4x4x128xf32>
    %665 = vector.extract_strided_slice %616 {offsets = [0, 6, 0], sizes = [4, 1, 128], strides = [1, 1, 1]} : vector<4x8x128xf32> to vector<4x1x128xf32>
    %666 = vector.extract_strided_slice %609 {offsets = [0, 6, 0, 0], sizes = [1, 1, 4, 1], strides = [1, 1, 1, 1]} : vector<3x8x4x1xf32> to vector<1x1x4x1xf32>
    %667 = vector.shape_cast %666 : vector<1x1x4x1xf32> to vector<4x1xf32>
    %668 = vector.shape_cast %667 : vector<4x1xf32> to vector<1x4x1xf32>
    %669 = vector.broadcast %665 : vector<4x1x128xf32> to vector<4x4x128xf32>
    %670 = vector.broadcast %668 : vector<1x4x1xf32> to vector<4x4x128xf32>
    %671 = arith.mulf %669, %670 : vector<4x4x128xf32>
    %672 = arith.addf %664, %671 : vector<4x4x128xf32>
    %673 = vector.extract_strided_slice %616 {offsets = [0, 7, 0], sizes = [4, 1, 128], strides = [1, 1, 1]} : vector<4x8x128xf32> to vector<4x1x128xf32>
    %674 = vector.extract_strided_slice %609 {offsets = [0, 7, 0, 0], sizes = [1, 1, 4, 1], strides = [1, 1, 1, 1]} : vector<3x8x4x1xf32> to vector<1x1x4x1xf32>
    %675 = vector.shape_cast %674 : vector<1x1x4x1xf32> to vector<4x1xf32>
    %676 = vector.shape_cast %675 : vector<4x1xf32> to vector<1x4x1xf32>
    %677 = vector.broadcast %673 : vector<4x1x128xf32> to vector<4x4x128xf32>
    %678 = vector.broadcast %676 : vector<1x4x1xf32> to vector<4x4x128xf32>
    %679 = arith.mulf %677, %678 : vector<4x4x128xf32>
    %680 = arith.addf %672, %679 : vector<4x4x128xf32>
    %681 = vector.extract_strided_slice %611 {offsets = [1, 0, 0], sizes = [4, 8, 128], strides = [1, 1, 1]} : vector<6x8x128xf32> to vector<4x8x128xf32>
    %682 = vector.extract_strided_slice %681 {offsets = [0, 0, 0], sizes = [4, 1, 128], strides = [1, 1, 1]} : vector<4x8x128xf32> to vector<4x1x128xf32>
    %683 = vector.extract_strided_slice %609 {offsets = [1, 0, 0, 0], sizes = [1, 1, 4, 1], strides = [1, 1, 1, 1]} : vector<3x8x4x1xf32> to vector<1x1x4x1xf32>
    %684 = vector.shape_cast %683 : vector<1x1x4x1xf32> to vector<4x1xf32>
    %685 = vector.shape_cast %684 : vector<4x1xf32> to vector<1x4x1xf32>
    %686 = vector.broadcast %682 : vector<4x1x128xf32> to vector<4x4x128xf32>
    %687 = vector.broadcast %685 : vector<1x4x1xf32> to vector<4x4x128xf32>
    %688 = arith.mulf %686, %687 : vector<4x4x128xf32>
    %689 = arith.addf %680, %688 : vector<4x4x128xf32>
    %690 = vector.extract_strided_slice %681 {offsets = [0, 1, 0], sizes = [4, 1, 128], strides = [1, 1, 1]} : vector<4x8x128xf32> to vector<4x1x128xf32>
    %691 = vector.extract_strided_slice %609 {offsets = [1, 1, 0, 0], sizes = [1, 1, 4, 1], strides = [1, 1, 1, 1]} : vector<3x8x4x1xf32> to vector<1x1x4x1xf32>
    %692 = vector.shape_cast %691 : vector<1x1x4x1xf32> to vector<4x1xf32>
    %693 = vector.shape_cast %692 : vector<4x1xf32> to vector<1x4x1xf32>
    %694 = vector.broadcast %690 : vector<4x1x128xf32> to vector<4x4x128xf32>
    %695 = vector.broadcast %693 : vector<1x4x1xf32> to vector<4x4x128xf32>
    %696 = arith.mulf %694, %695 : vector<4x4x128xf32>
    %697 = arith.addf %689, %696 : vector<4x4x128xf32>
    %698 = vector.extract_strided_slice %681 {offsets = [0, 2, 0], sizes = [4, 1, 128], strides = [1, 1, 1]} : vector<4x8x128xf32> to vector<4x1x128xf32>
    %699 = vector.extract_strided_slice %609 {offsets = [1, 2, 0, 0], sizes = [1, 1, 4, 1], strides = [1, 1, 1, 1]} : vector<3x8x4x1xf32> to vector<1x1x4x1xf32>
    %700 = vector.shape_cast %699 : vector<1x1x4x1xf32> to vector<4x1xf32>
    %701 = vector.shape_cast %700 : vector<4x1xf32> to vector<1x4x1xf32>
    %702 = vector.broadcast %698 : vector<4x1x128xf32> to vector<4x4x128xf32>
    %703 = vector.broadcast %701 : vector<1x4x1xf32> to vector<4x4x128xf32>
    %704 = arith.mulf %702, %703 : vector<4x4x128xf32>
    %705 = arith.addf %697, %704 : vector<4x4x128xf32>
    %706 = vector.extract_strided_slice %681 {offsets = [0, 3, 0], sizes = [4, 1, 128], strides = [1, 1, 1]} : vector<4x8x128xf32> to vector<4x1x128xf32>
    %707 = vector.extract_strided_slice %609 {offsets = [1, 3, 0, 0], sizes = [1, 1, 4, 1], strides = [1, 1, 1, 1]} : vector<3x8x4x1xf32> to vector<1x1x4x1xf32>
    %708 = vector.shape_cast %707 : vector<1x1x4x1xf32> to vector<4x1xf32>
    %709 = vector.shape_cast %708 : vector<4x1xf32> to vector<1x4x1xf32>
    %710 = vector.broadcast %706 : vector<4x1x128xf32> to vector<4x4x128xf32>
    %711 = vector.broadcast %709 : vector<1x4x1xf32> to vector<4x4x128xf32>
    %712 = arith.mulf %710, %711 : vector<4x4x128xf32>
    %713 = arith.addf %705, %712 : vector<4x4x128xf32>
    %714 = vector.extract_strided_slice %681 {offsets = [0, 4, 0], sizes = [4, 1, 128], strides = [1, 1, 1]} : vector<4x8x128xf32> to vector<4x1x128xf32>
    %715 = vector.extract_strided_slice %609 {offsets = [1, 4, 0, 0], sizes = [1, 1, 4, 1], strides = [1, 1, 1, 1]} : vector<3x8x4x1xf32> to vector<1x1x4x1xf32>
    %716 = vector.shape_cast %715 : vector<1x1x4x1xf32> to vector<4x1xf32>
    %717 = vector.shape_cast %716 : vector<4x1xf32> to vector<1x4x1xf32>
    %718 = vector.broadcast %714 : vector<4x1x128xf32> to vector<4x4x128xf32>
    %719 = vector.broadcast %717 : vector<1x4x1xf32> to vector<4x4x128xf32>
    %720 = arith.mulf %718, %719 : vector<4x4x128xf32>
    %721 = arith.addf %713, %720 : vector<4x4x128xf32>
    %722 = vector.extract_strided_slice %681 {offsets = [0, 5, 0], sizes = [4, 1, 128], strides = [1, 1, 1]} : vector<4x8x128xf32> to vector<4x1x128xf32>
    %723 = vector.extract_strided_slice %609 {offsets = [1, 5, 0, 0], sizes = [1, 1, 4, 1], strides = [1, 1, 1, 1]} : vector<3x8x4x1xf32> to vector<1x1x4x1xf32>
    %724 = vector.shape_cast %723 : vector<1x1x4x1xf32> to vector<4x1xf32>
    %725 = vector.shape_cast %724 : vector<4x1xf32> to vector<1x4x1xf32>
    %726 = vector.broadcast %722 : vector<4x1x128xf32> to vector<4x4x128xf32>
    %727 = vector.broadcast %725 : vector<1x4x1xf32> to vector<4x4x128xf32>
    %728 = arith.mulf %726, %727 : vector<4x4x128xf32>
    %729 = arith.addf %721, %728 : vector<4x4x128xf32>
    %730 = vector.extract_strided_slice %681 {offsets = [0, 6, 0], sizes = [4, 1, 128], strides = [1, 1, 1]} : vector<4x8x128xf32> to vector<4x1x128xf32>
    %731 = vector.extract_strided_slice %609 {offsets = [1, 6, 0, 0], sizes = [1, 1, 4, 1], strides = [1, 1, 1, 1]} : vector<3x8x4x1xf32> to vector<1x1x4x1xf32>
    %732 = vector.shape_cast %731 : vector<1x1x4x1xf32> to vector<4x1xf32>
    %733 = vector.shape_cast %732 : vector<4x1xf32> to vector<1x4x1xf32>
    %734 = vector.broadcast %730 : vector<4x1x128xf32> to vector<4x4x128xf32>
    %735 = vector.broadcast %733 : vector<1x4x1xf32> to vector<4x4x128xf32>
    %736 = arith.mulf %734, %735 : vector<4x4x128xf32>
    %737 = arith.addf %729, %736 : vector<4x4x128xf32>
    %738 = vector.extract_strided_slice %681 {offsets = [0, 7, 0], sizes = [4, 1, 128], strides = [1, 1, 1]} : vector<4x8x128xf32> to vector<4x1x128xf32>
    %739 = vector.extract_strided_slice %609 {offsets = [1, 7, 0, 0], sizes = [1, 1, 4, 1], strides = [1, 1, 1, 1]} : vector<3x8x4x1xf32> to vector<1x1x4x1xf32>
    %740 = vector.shape_cast %739 : vector<1x1x4x1xf32> to vector<4x1xf32>
    %741 = vector.shape_cast %740 : vector<4x1xf32> to vector<1x4x1xf32>
    %742 = vector.broadcast %738 : vector<4x1x128xf32> to vector<4x4x128xf32>
    %743 = vector.broadcast %741 : vector<1x4x1xf32> to vector<4x4x128xf32>
    %744 = arith.mulf %742, %743 : vector<4x4x128xf32>
    %745 = arith.addf %737, %744 : vector<4x4x128xf32>
    %746 = vector.extract_strided_slice %611 {offsets = [2, 0, 0], sizes = [4, 8, 128], strides = [1, 1, 1]} : vector<6x8x128xf32> to vector<4x8x128xf32>
    %747 = vector.extract_strided_slice %746 {offsets = [0, 0, 0], sizes = [4, 1, 128], strides = [1, 1, 1]} : vector<4x8x128xf32> to vector<4x1x128xf32>
    %748 = vector.extract_strided_slice %609 {offsets = [2, 0, 0, 0], sizes = [1, 1, 4, 1], strides = [1, 1, 1, 1]} : vector<3x8x4x1xf32> to vector<1x1x4x1xf32>
    %749 = vector.shape_cast %748 : vector<1x1x4x1xf32> to vector<4x1xf32>
    %750 = vector.shape_cast %749 : vector<4x1xf32> to vector<1x4x1xf32>
    %751 = vector.broadcast %747 : vector<4x1x128xf32> to vector<4x4x128xf32>
    %752 = vector.broadcast %750 : vector<1x4x1xf32> to vector<4x4x128xf32>
    %753 = arith.mulf %751, %752 : vector<4x4x128xf32>
    %754 = arith.addf %745, %753 : vector<4x4x128xf32>
    %755 = vector.extract_strided_slice %746 {offsets = [0, 1, 0], sizes = [4, 1, 128], strides = [1, 1, 1]} : vector<4x8x128xf32> to vector<4x1x128xf32>
    %756 = vector.extract_strided_slice %609 {offsets = [2, 1, 0, 0], sizes = [1, 1, 4, 1], strides = [1, 1, 1, 1]} : vector<3x8x4x1xf32> to vector<1x1x4x1xf32>
    %757 = vector.shape_cast %756 : vector<1x1x4x1xf32> to vector<4x1xf32>
    %758 = vector.shape_cast %757 : vector<4x1xf32> to vector<1x4x1xf32>
    %759 = vector.broadcast %755 : vector<4x1x128xf32> to vector<4x4x128xf32>
    %760 = vector.broadcast %758 : vector<1x4x1xf32> to vector<4x4x128xf32>
    %761 = arith.mulf %759, %760 : vector<4x4x128xf32>
    %762 = arith.addf %754, %761 : vector<4x4x128xf32>
    %763 = vector.extract_strided_slice %746 {offsets = [0, 2, 0], sizes = [4, 1, 128], strides = [1, 1, 1]} : vector<4x8x128xf32> to vector<4x1x128xf32>
    %764 = vector.extract_strided_slice %609 {offsets = [2, 2, 0, 0], sizes = [1, 1, 4, 1], strides = [1, 1, 1, 1]} : vector<3x8x4x1xf32> to vector<1x1x4x1xf32>
    %765 = vector.shape_cast %764 : vector<1x1x4x1xf32> to vector<4x1xf32>
    %766 = vector.shape_cast %765 : vector<4x1xf32> to vector<1x4x1xf32>
    %767 = vector.broadcast %763 : vector<4x1x128xf32> to vector<4x4x128xf32>
    %768 = vector.broadcast %766 : vector<1x4x1xf32> to vector<4x4x128xf32>
    %769 = arith.mulf %767, %768 : vector<4x4x128xf32>
    %770 = arith.addf %762, %769 : vector<4x4x128xf32>
    %771 = vector.extract_strided_slice %746 {offsets = [0, 3, 0], sizes = [4, 1, 128], strides = [1, 1, 1]} : vector<4x8x128xf32> to vector<4x1x128xf32>
    %772 = vector.extract_strided_slice %609 {offsets = [2, 3, 0, 0], sizes = [1, 1, 4, 1], strides = [1, 1, 1, 1]} : vector<3x8x4x1xf32> to vector<1x1x4x1xf32>
    %773 = vector.shape_cast %772 : vector<1x1x4x1xf32> to vector<4x1xf32>
    %774 = vector.shape_cast %773 : vector<4x1xf32> to vector<1x4x1xf32>
    %775 = vector.broadcast %771 : vector<4x1x128xf32> to vector<4x4x128xf32>
    %776 = vector.broadcast %774 : vector<1x4x1xf32> to vector<4x4x128xf32>
    %777 = arith.mulf %775, %776 : vector<4x4x128xf32>
    %778 = arith.addf %770, %777 : vector<4x4x128xf32>
    %779 = vector.extract_strided_slice %746 {offsets = [0, 4, 0], sizes = [4, 1, 128], strides = [1, 1, 1]} : vector<4x8x128xf32> to vector<4x1x128xf32>
    %780 = vector.extract_strided_slice %609 {offsets = [2, 4, 0, 0], sizes = [1, 1, 4, 1], strides = [1, 1, 1, 1]} : vector<3x8x4x1xf32> to vector<1x1x4x1xf32>
    %781 = vector.shape_cast %780 : vector<1x1x4x1xf32> to vector<4x1xf32>
    %782 = vector.shape_cast %781 : vector<4x1xf32> to vector<1x4x1xf32>
    %783 = vector.broadcast %779 : vector<4x1x128xf32> to vector<4x4x128xf32>
    %784 = vector.broadcast %782 : vector<1x4x1xf32> to vector<4x4x128xf32>
    %785 = arith.mulf %783, %784 : vector<4x4x128xf32>
    %786 = arith.addf %778, %785 : vector<4x4x128xf32>
    %787 = vector.extract_strided_slice %746 {offsets = [0, 5, 0], sizes = [4, 1, 128], strides = [1, 1, 1]} : vector<4x8x128xf32> to vector<4x1x128xf32>
    %788 = vector.extract_strided_slice %609 {offsets = [2, 5, 0, 0], sizes = [1, 1, 4, 1], strides = [1, 1, 1, 1]} : vector<3x8x4x1xf32> to vector<1x1x4x1xf32>
    %789 = vector.shape_cast %788 : vector<1x1x4x1xf32> to vector<4x1xf32>
    %790 = vector.shape_cast %789 : vector<4x1xf32> to vector<1x4x1xf32>
    %791 = vector.broadcast %787 : vector<4x1x128xf32> to vector<4x4x128xf32>
    %792 = vector.broadcast %790 : vector<1x4x1xf32> to vector<4x4x128xf32>
    %793 = arith.mulf %791, %792 : vector<4x4x128xf32>
    %794 = arith.addf %786, %793 : vector<4x4x128xf32>
    %795 = vector.extract_strided_slice %746 {offsets = [0, 6, 0], sizes = [4, 1, 128], strides = [1, 1, 1]} : vector<4x8x128xf32> to vector<4x1x128xf32>
    %796 = vector.extract_strided_slice %609 {offsets = [2, 6, 0, 0], sizes = [1, 1, 4, 1], strides = [1, 1, 1, 1]} : vector<3x8x4x1xf32> to vector<1x1x4x1xf32>
    %797 = vector.shape_cast %796 : vector<1x1x4x1xf32> to vector<4x1xf32>
    %798 = vector.shape_cast %797 : vector<4x1xf32> to vector<1x4x1xf32>
    %799 = vector.broadcast %795 : vector<4x1x128xf32> to vector<4x4x128xf32>
    %800 = vector.broadcast %798 : vector<1x4x1xf32> to vector<4x4x128xf32>
    %801 = arith.mulf %799, %800 : vector<4x4x128xf32>
    %802 = arith.addf %794, %801 : vector<4x4x128xf32>
    %803 = vector.extract_strided_slice %746 {offsets = [0, 7, 0], sizes = [4, 1, 128], strides = [1, 1, 1]} : vector<4x8x128xf32> to vector<4x1x128xf32>
    %804 = vector.extract_strided_slice %609 {offsets = [2, 7, 0, 0], sizes = [1, 1, 4, 1], strides = [1, 1, 1, 1]} : vector<3x8x4x1xf32> to vector<1x1x4x1xf32>
    %805 = vector.shape_cast %804 : vector<1x1x4x1xf32> to vector<4x1xf32>
    %806 = vector.shape_cast %805 : vector<4x1xf32> to vector<1x4x1xf32>
    %807 = vector.broadcast %803 : vector<4x1x128xf32> to vector<4x4x128xf32>
    %808 = vector.broadcast %806 : vector<1x4x1xf32> to vector<4x4x128xf32>
    %809 = arith.mulf %807, %808 : vector<4x4x128xf32>
    %810 = arith.addf %802, %809 : vector<4x4x128xf32>
    %cst_54 = arith.constant 0.000000e+00 : f32
    %811 = vector.broadcast %cst_54 : f32 to vector<4x4x128xf32>
    %812 = arith.maximumf %810, %811 : vector<4x4x128xf32>
    %813 = vector.shape_cast %812 : vector<4x4x128xf32> to vector<2x2x4x128xf32>
    %cst_55 = arith.constant dense<0xFF800000> : vector<2x4x128xf32>
    %814 = vector.multi_reduction <maximumf>, %813, %cst_55 [1] : vector<2x2x4x128xf32> to vector<2x4x128xf32>
    %c0_56 = arith.constant 0 : index
    %c0_57 = arith.constant 0 : index
    %c0_58 = arith.constant 0 : index
    %c0_59 = arith.constant 0 : index
    %815 = vector.load %arg12[%c0_56, %c0_57, %c0_58, %c0_59] : memref<2x4x10x1xf32, #tpu.memory_space<vmem>>, vector<2x4x10x1xf32>
    %cst_60 = arith.constant 0.000000e+00 : f32
    %816 = vector.broadcast %cst_60 : f32 to vector<10x128xf32>
    %c0_61 = arith.constant 0 : index
    %c0_62 = arith.constant 0 : index
    %817 = vector.load %arg13[%c0_61, %c0_62] : memref<10x1xf32, #tpu.memory_space<vmem>>, vector<10x1xf32>
    %818 = vector.broadcast %817 : vector<10x1xf32> to vector<10x128xf32>
    %819 = arith.addf %816, %818 : vector<10x128xf32>
    %820 = vector.extract_strided_slice %814 {offsets = [0, 0, 0], sizes = [1, 1, 128], strides = [1, 1, 1]} : vector<2x4x128xf32> to vector<1x1x128xf32>
    %821 = vector.shape_cast %820 : vector<1x1x128xf32> to vector<1x128xf32>
    %822 = vector.extract_strided_slice %815 {offsets = [0, 0, 0, 0], sizes = [1, 1, 10, 1], strides = [1, 1, 1, 1]} : vector<2x4x10x1xf32> to vector<1x1x10x1xf32>
    %823 = vector.shape_cast %822 : vector<1x1x10x1xf32> to vector<10x1xf32>
    %824 = vector.broadcast %821 : vector<1x128xf32> to vector<10x128xf32>
    %825 = vector.broadcast %823 : vector<10x1xf32> to vector<10x128xf32>
    %826 = arith.mulf %824, %825 : vector<10x128xf32>
    %827 = arith.addf %819, %826 : vector<10x128xf32>
    %828 = vector.extract_strided_slice %814 {offsets = [0, 1, 0], sizes = [1, 1, 128], strides = [1, 1, 1]} : vector<2x4x128xf32> to vector<1x1x128xf32>
    %829 = vector.shape_cast %828 : vector<1x1x128xf32> to vector<1x128xf32>
    %830 = vector.extract_strided_slice %815 {offsets = [0, 1, 0, 0], sizes = [1, 1, 10, 1], strides = [1, 1, 1, 1]} : vector<2x4x10x1xf32> to vector<1x1x10x1xf32>
    %831 = vector.shape_cast %830 : vector<1x1x10x1xf32> to vector<10x1xf32>
    %832 = vector.broadcast %829 : vector<1x128xf32> to vector<10x128xf32>
    %833 = vector.broadcast %831 : vector<10x1xf32> to vector<10x128xf32>
    %834 = arith.mulf %832, %833 : vector<10x128xf32>
    %835 = arith.addf %827, %834 : vector<10x128xf32>
    %836 = vector.extract_strided_slice %814 {offsets = [0, 2, 0], sizes = [1, 1, 128], strides = [1, 1, 1]} : vector<2x4x128xf32> to vector<1x1x128xf32>
    %837 = vector.shape_cast %836 : vector<1x1x128xf32> to vector<1x128xf32>
    %838 = vector.extract_strided_slice %815 {offsets = [0, 2, 0, 0], sizes = [1, 1, 10, 1], strides = [1, 1, 1, 1]} : vector<2x4x10x1xf32> to vector<1x1x10x1xf32>
    %839 = vector.shape_cast %838 : vector<1x1x10x1xf32> to vector<10x1xf32>
    %840 = vector.broadcast %837 : vector<1x128xf32> to vector<10x128xf32>
    %841 = vector.broadcast %839 : vector<10x1xf32> to vector<10x128xf32>
    %842 = arith.mulf %840, %841 : vector<10x128xf32>
    %843 = arith.addf %835, %842 : vector<10x128xf32>
    %844 = vector.extract_strided_slice %814 {offsets = [0, 3, 0], sizes = [1, 1, 128], strides = [1, 1, 1]} : vector<2x4x128xf32> to vector<1x1x128xf32>
    %845 = vector.shape_cast %844 : vector<1x1x128xf32> to vector<1x128xf32>
    %846 = vector.extract_strided_slice %815 {offsets = [0, 3, 0, 0], sizes = [1, 1, 10, 1], strides = [1, 1, 1, 1]} : vector<2x4x10x1xf32> to vector<1x1x10x1xf32>
    %847 = vector.shape_cast %846 : vector<1x1x10x1xf32> to vector<10x1xf32>
    %848 = vector.broadcast %845 : vector<1x128xf32> to vector<10x128xf32>
    %849 = vector.broadcast %847 : vector<10x1xf32> to vector<10x128xf32>
    %850 = arith.mulf %848, %849 : vector<10x128xf32>
    %851 = arith.addf %843, %850 : vector<10x128xf32>
    %852 = vector.extract_strided_slice %814 {offsets = [1, 0, 0], sizes = [1, 1, 128], strides = [1, 1, 1]} : vector<2x4x128xf32> to vector<1x1x128xf32>
    %853 = vector.shape_cast %852 : vector<1x1x128xf32> to vector<1x128xf32>
    %854 = vector.extract_strided_slice %815 {offsets = [1, 0, 0, 0], sizes = [1, 1, 10, 1], strides = [1, 1, 1, 1]} : vector<2x4x10x1xf32> to vector<1x1x10x1xf32>
    %855 = vector.shape_cast %854 : vector<1x1x10x1xf32> to vector<10x1xf32>
    %856 = vector.broadcast %853 : vector<1x128xf32> to vector<10x128xf32>
    %857 = vector.broadcast %855 : vector<10x1xf32> to vector<10x128xf32>
    %858 = arith.mulf %856, %857 : vector<10x128xf32>
    %859 = arith.addf %851, %858 : vector<10x128xf32>
    %860 = vector.extract_strided_slice %814 {offsets = [1, 1, 0], sizes = [1, 1, 128], strides = [1, 1, 1]} : vector<2x4x128xf32> to vector<1x1x128xf32>
    %861 = vector.shape_cast %860 : vector<1x1x128xf32> to vector<1x128xf32>
    %862 = vector.extract_strided_slice %815 {offsets = [1, 1, 0, 0], sizes = [1, 1, 10, 1], strides = [1, 1, 1, 1]} : vector<2x4x10x1xf32> to vector<1x1x10x1xf32>
    %863 = vector.shape_cast %862 : vector<1x1x10x1xf32> to vector<10x1xf32>
    %864 = vector.broadcast %861 : vector<1x128xf32> to vector<10x128xf32>
    %865 = vector.broadcast %863 : vector<10x1xf32> to vector<10x128xf32>
    %866 = arith.mulf %864, %865 : vector<10x128xf32>
    %867 = arith.addf %859, %866 : vector<10x128xf32>
    %868 = vector.extract_strided_slice %814 {offsets = [1, 2, 0], sizes = [1, 1, 128], strides = [1, 1, 1]} : vector<2x4x128xf32> to vector<1x1x128xf32>
    %869 = vector.shape_cast %868 : vector<1x1x128xf32> to vector<1x128xf32>
    %870 = vector.extract_strided_slice %815 {offsets = [1, 2, 0, 0], sizes = [1, 1, 10, 1], strides = [1, 1, 1, 1]} : vector<2x4x10x1xf32> to vector<1x1x10x1xf32>
    %871 = vector.shape_cast %870 : vector<1x1x10x1xf32> to vector<10x1xf32>
    %872 = vector.broadcast %869 : vector<1x128xf32> to vector<10x128xf32>
    %873 = vector.broadcast %871 : vector<10x1xf32> to vector<10x128xf32>
    %874 = arith.mulf %872, %873 : vector<10x128xf32>
    %875 = arith.addf %867, %874 : vector<10x128xf32>
    %876 = vector.extract_strided_slice %814 {offsets = [1, 3, 0], sizes = [1, 1, 128], strides = [1, 1, 1]} : vector<2x4x128xf32> to vector<1x1x128xf32>
    %877 = vector.shape_cast %876 : vector<1x1x128xf32> to vector<1x128xf32>
    %878 = vector.extract_strided_slice %815 {offsets = [1, 3, 0, 0], sizes = [1, 1, 10, 1], strides = [1, 1, 1, 1]} : vector<2x4x10x1xf32> to vector<1x1x10x1xf32>
    %879 = vector.shape_cast %878 : vector<1x1x10x1xf32> to vector<10x1xf32>
    %880 = vector.broadcast %877 : vector<1x128xf32> to vector<10x128xf32>
    %881 = vector.broadcast %879 : vector<10x1xf32> to vector<10x128xf32>
    %882 = arith.mulf %880, %881 : vector<10x128xf32>
    %883 = arith.addf %875, %882 : vector<10x128xf32>
    %cst_63 = arith.constant 0.000000e+00 : f32
    %884 = vector.broadcast %cst_63 : f32 to vector<10x128xf32>
    %885 = arith.maximumf %883, %884 : vector<10x128xf32>
    %c0_64 = arith.constant 0 : index
    %c0_65 = arith.constant 0 : index
    %886 = vector.load %arg14[%c0_64, %c0_65] : memref<10x1xf32, #tpu.memory_space<vmem>>, vector<10x1xf32>
    %887 = vector.broadcast %886 : vector<10x1xf32> to vector<10x128xf32>
    %888 = arith.mulf %885, %887 : vector<10x128xf32>
    %cst_66 = arith.constant dense<0.000000e+00> : vector<128xf32>
    %889 = vector.multi_reduction <add>, %888, %cst_66 [0] : vector<10x128xf32> to vector<128xf32>
    %890 = vector.shape_cast %889 : vector<128xf32> to vector<1x128xf32>
    %c0_67 = arith.constant 0 : index
    %c0_68 = arith.constant 0 : index
    %891 = vector.load %arg15[%c0_67, %c0_68] : memref<1x1xf32, #tpu.memory_space<vmem>>, vector<1x1xf32>
    %892 = vector.broadcast %891 : vector<1x1xf32> to vector<1x128xf32>
    %893 = arith.addf %890, %892 : vector<1x128xf32>
    %cst_69 = arith.constant 0.000000e+00 : f32
    %894 = vector.broadcast %cst_69 : f32 to vector<1x128xf32>
    %895 = arith.subf %894, %893 : vector<1x128xf32>
    %896 = math.exp %895 : vector<1x128xf32>
    %cst_70 = arith.constant 1.000000e+00 : f32
    %897 = vector.broadcast %cst_70 : f32 to vector<1x128xf32>
    %898 = arith.addf %897, %896 : vector<1x128xf32>
    %cst_71 = arith.constant 1.000000e+00 : f32
    %899 = vector.broadcast %cst_71 : f32 to vector<1x128xf32>
    %900 = arith.divf %899, %898 : vector<1x128xf32>
    %c0_72 = arith.constant 0 : index
    %c0_73 = arith.constant 0 : index
    %901 = vector.load %arg16[%c0_72, %c0_73] : memref<1x128xf32, #tpu.memory_space<vmem>>, vector<1x128xf32>
    tpu.vector_store %arg16[%c0_72, %c0_73], %900 {strides = array<i32>} : memref<1x128xf32, #tpu.memory_space<vmem>>, vector<1x128xf32>,
    return
  }
  func.func @transform_0(%arg0: i32) -> (i32, i32, i32) {
    %c0_i32 = arith.constant 0 : i32
    %c0_i32_0 = arith.constant 0 : i32
    %c0_i32_1 = arith.constant 0 : i32
    return %c0_i32, %c0_i32_0, %arg0 : i32, i32, i32
  }
  func.func @transform_1(%arg0: i32) -> (i32, i32, i32, i32) {
    %c0_i32 = arith.constant 0 : i32
    %c0_i32_0 = arith.constant 0 : i32
    %c0_i32_1 = arith.constant 0 : i32
    %c0_i32_2 = arith.constant 0 : i32
    %c0_i32_3 = arith.constant 0 : i32
    return %c0_i32, %c0_i32_0, %c0_i32_1, %c0_i32_2 : i32, i32, i32, i32
  }
  func.func @transform_2(%arg0: i32) -> (i32, i32, i32) {
    %c0_i32 = arith.constant 0 : i32
    %c0_i32_0 = arith.constant 0 : i32
    %c0_i32_1 = arith.constant 0 : i32
    %c0_i32_2 = arith.constant 0 : i32
    return %c0_i32, %c0_i32_0, %c0_i32_1 : i32, i32, i32
  }
  func.func @transform_3(%arg0: i32) -> (i32, i32, i32, i32) {
    %c0_i32 = arith.constant 0 : i32
    %c0_i32_0 = arith.constant 0 : i32
    %c0_i32_1 = arith.constant 0 : i32
    %c0_i32_2 = arith.constant 0 : i32
    %c0_i32_3 = arith.constant 0 : i32
    return %c0_i32, %c0_i32_0, %c0_i32_1, %c0_i32_2 : i32, i32, i32, i32
  }
  func.func @transform_4(%arg0: i32) -> (i32, i32, i32) {
    %c0_i32 = arith.constant 0 : i32
    %c0_i32_0 = arith.constant 0 : i32
    %c0_i32_1 = arith.constant 0 : i32
    %c0_i32_2 = arith.constant 0 : i32
    return %c0_i32, %c0_i32_0, %c0_i32_1 : i32, i32, i32
  }
  func.func @transform_5(%arg0: i32) -> (i32, i32, i32, i32) {
    %c0_i32 = arith.constant 0 : i32
    %c0_i32_0 = arith.constant 0 : i32
    %c0_i32_1 = arith.constant 0 : i32
    %c0_i32_2 = arith.constant 0 : i32
    %c0_i32_3 = arith.constant 0 : i32
    return %c0_i32, %c0_i32_0, %c0_i32_1, %c0_i32_2 : i32, i32, i32, i32
  }
  func.func @transform_6(%arg0: i32) -> (i32, i32, i32) {
    %c0_i32 = arith.constant 0 : i32
    %c0_i32_0 = arith.constant 0 : i32
    %c0_i32_1 = arith.constant 0 : i32
    %c0_i32_2 = arith.constant 0 : i32
    return %c0_i32, %c0_i32_0, %c0_i32_1 : i32, i32, i32
  }
  func.func @transform_7(%arg0: i32) -> (i32, i32, i32, i32) {
    %c0_i32 = arith.constant 0 : i32
    %c0_i32_0 = arith.constant 0 : i32
    %c0_i32_1 = arith.constant 0 : i32
    %c0_i32_2 = arith.constant 0 : i32
    %c0_i32_3 = arith.constant 0 : i32
    return %c0_i32, %c0_i32_0, %c0_i32_1, %c0_i32_2 : i32, i32, i32, i32
  }
  func.func @transform_8(%arg0: i32) -> (i32, i32, i32) {
    %c0_i32 = arith.constant 0 : i32
    %c0_i32_0 = arith.constant 0 : i32
    %c0_i32_1 = arith.constant 0 : i32
    %c0_i32_2 = arith.constant 0 : i32
    return %c0_i32, %c0_i32_0, %c0_i32_1 : i32, i32, i32
  }
  func.func @transform_9(%arg0: i32) -> (i32, i32, i32, i32) {
    %c0_i32 = arith.constant 0 : i32
    %c0_i32_0 = arith.constant 0 : i32
    %c0_i32_1 = arith.constant 0 : i32
    %c0_i32_2 = arith.constant 0 : i32
    %c0_i32_3 = arith.constant 0 : i32
    return %c0_i32, %c0_i32_0, %c0_i32_1, %c0_i32_2 : i32, i32, i32, i32
  }
  func.func @transform_10(%arg0: i32) -> (i32, i32, i32) {
    %c0_i32 = arith.constant 0 : i32
    %c0_i32_0 = arith.constant 0 : i32
    %c0_i32_1 = arith.constant 0 : i32
    %c0_i32_2 = arith.constant 0 : i32
    return %c0_i32, %c0_i32_0, %c0_i32_1 : i32, i32, i32
  }
  func.func @transform_11(%arg0: i32) -> (i32, i32, i32, i32) {
    %c0_i32 = arith.constant 0 : i32
    %c0_i32_0 = arith.constant 0 : i32
    %c0_i32_1 = arith.constant 0 : i32
    %c0_i32_2 = arith.constant 0 : i32
    %c0_i32_3 = arith.constant 0 : i32
    return %c0_i32, %c0_i32_0, %c0_i32_1, %c0_i32_2 : i32, i32, i32, i32
  }
  func.func @transform_12(%arg0: i32) -> (i32, i32) {
    %c0_i32 = arith.constant 0 : i32
    %c0_i32_0 = arith.constant 0 : i32
    %c0_i32_1 = arith.constant 0 : i32
    return %c0_i32, %c0_i32_0 : i32, i32
  }
  func.func @transform_13(%arg0: i32) -> (i32, i32) {
    %c0_i32 = arith.constant 0 : i32
    %c0_i32_0 = arith.constant 0 : i32
    %c0_i32_1 = arith.constant 0 : i32
    return %c0_i32, %c0_i32_0 : i32, i32
  }
  func.func @transform_14(%arg0: i32) -> (i32, i32) {
    %c0_i32 = arith.constant 0 : i32
    %c0_i32_0 = arith.constant 0 : i32
    %c0_i32_1 = arith.constant 0 : i32
    return %c0_i32, %c0_i32_0 : i32, i32
  }
  func.func @transform_15(%arg0: i32) -> (i32, i32) {
    %c0_i32 = arith.constant 0 : i32
    %c0_i32_0 = arith.constant 0 : i32
    return %c0_i32, %arg0 : i32, i32
  }
}

</mosaic_0001>

<llo_original>
// kernel: tpu_custom_call.1
$region0: #{tpu_custom_call.1}
  #allocation0 [shape = 'u32[]', space=smem, size = 0x4, offset = 0x4, fixed_abs, tag = 'smem constant byte address 0x4 - core index']
  #allocation1 [shape = 'u32[144,128]{1,0:T(1,128)}', space=vmem, size = 0x12000, scoped, tag = 'internal scratch']
  #allocation2 [shape = 'f32[1,1]{1,0:T(1,128)S(1)}', space=vmem, size = 0x200, scoped, tag = 'scoped memory for tpu_custom_call.1']
  %s0 = inlined_call_operand.vmem [shape: f32[16,1,128], index: 0, kind: input, shape index: {}]
  %s1 = inlined_call_operand.vmem [shape: f32[3,1,4,1], index: 1, kind: input, shape index: {}]
  %s2 = inlined_call_operand.vmem [shape: f32[1,4,1], index: 2, kind: input, shape index: {}]
  %s3 = inlined_call_operand.vmem [shape: f32[3,4,8,1], index: 3, kind: input, shape index: {}]
  %s4 = inlined_call_operand.vmem [shape: f32[1,8,1], index: 4, kind: input, shape index: {}]
  %s5 = inlined_call_operand.vmem [shape: f32[3,8,10,1], index: 5, kind: input, shape index: {}]
  %s6 = inlined_call_operand.vmem [shape: f32[1,10,1], index: 6, kind: input, shape index: {}]
  %s7 = inlined_call_operand.vmem [shape: f32[3,10,8,1], index: 7, kind: input, shape index: {}]
  %s8 = inlined_call_operand.vmem [shape: f32[1,8,1], index: 8, kind: input, shape index: {}]
  %s9 = inlined_call_operand.vmem [shape: f32[3,8,4,1], index: 9, kind: input, shape index: {}]
  %s10 = inlined_call_operand.vmem [shape: f32[1,4,1], index: 10, kind: input, shape index: {}]
  %s11 = inlined_call_operand.vmem [shape: f32[2,4,10,1], index: 11, kind: input, shape index: {}]
  %s12 = inlined_call_operand.vmem [shape: f32[10,1], index: 12, kind: input, shape index: {}]
  %s13 = inlined_call_operand.vmem [shape: f32[10,1], index: 13, kind: input, shape index: {}]
  %s14 = inlined_call_operand.<no memory space> [shape: f32[1,1], index: 14, kind: input, shape index: {}]
  %s15 = inlined_call_operand.hbm [shape: f32[1,128], index: 15, kind: output, shape index: {}]
  %s16 = sld [smem:[#allocation0]]
  $region70: #{tpu_custom_call.1} parent=0
    _
  %s18 = ssub.s32 1, %s16
  %s19 = scalar_select 0, %s18, %s16
  %v20 = vstv %s14
  %21 = vst [vmem:[#allocation2] sm:$0x1] %v20
  $region1: #{tpu_custom_call.1} parent=0
    #allocation3 [shape = 'u8[512]{0}', space=vmem, size = 0x400, scoped, tag = 'output window, operand 0, single buffered']
    #allocation4 [shape = 's32[1]{0}', space=sflag, size = 0x4, scoped, tag = 'scoped memory for tpu_custom_call.1']
    %22 = vsyncpa [#allocation4], 0
    // Predicated region
    $region2: #{tpu_custom_call.1} parent=1 // pred_check
      _
    $region3: #{tpu_custom_call.1} parent=1 // pred_check_branch
      %24 = sbr.rel (0) target = $region5
    $region4: #{tpu_custom_call.1} parent=1 // pred_region
      _
    $region5: #{tpu_custom_call.1} parent=1 // pred_fallthru
      _
    // Predicated region
    $region6: #{tpu_custom_call.1} parent=1 // pred_check
      _
    $region7: #{tpu_custom_call.1} parent=1 // pred_check_branch
      %26 = sbr.rel (0) target = $region9
    $region8: #{tpu_custom_call.1} parent=1 // pred_region
      _
    $region9: #{tpu_custom_call.1} parent=1 // pred_fallthru
      _
    // Predicated region
    $region10: #{tpu_custom_call.1} parent=1 // pred_check
      _
    $region11: #{tpu_custom_call.1} parent=1 // pred_check_branch
      %28 = sbr.rel (0) target = $region13
    $region12: #{tpu_custom_call.1} parent=1 // pred_region
      _
    $region13: #{tpu_custom_call.1} parent=1 // pred_fallthru
      _
    // Predicated region
    $region14: #{tpu_custom_call.1} parent=1 // pred_check
      _
    $region15: #{tpu_custom_call.1} parent=1 // pred_check_branch
      %30 = sbr.rel (0) target = $region17
    $region16: #{tpu_custom_call.1} parent=1 // pred_region
      _
    $region17: #{tpu_custom_call.1} parent=1 // pred_fallthru
      _
    // Predicated region
    $region18: #{tpu_custom_call.1} parent=1 // pred_check
      _
    $region19: #{tpu_custom_call.1} parent=1 // pred_check_branch
      %32 = sbr.rel (0) target = $region21
    $region20: #{tpu_custom_call.1} parent=1 // pred_region
      _
    $region21: #{tpu_custom_call.1} parent=1 // pred_fallthru
      _
    // Predicated region
    $region22: #{tpu_custom_call.1} parent=1 // pred_check
      _
    $region23: #{tpu_custom_call.1} parent=1 // pred_check_branch
      %34 = sbr.rel (0) target = $region25
    $region24: #{tpu_custom_call.1} parent=1 // pred_region
      _
    $region25: #{tpu_custom_call.1} parent=1 // pred_fallthru
      _
    // Predicated region
    $region26: #{tpu_custom_call.1} parent=1 // pred_check
      _
    $region27: #{tpu_custom_call.1} parent=1 // pred_check_branch
      %36 = sbr.rel (0) target = $region29
    $region28: #{tpu_custom_call.1} parent=1 // pred_region
      _
    $region29: #{tpu_custom_call.1} parent=1 // pred_fallthru
      _
    // Predicated region
    $region30: #{tpu_custom_call.1} parent=1 // pred_check
      _
    $region31: #{tpu_custom_call.1} parent=1 // pred_check_branch
      %38 = sbr.rel (0) target = $region33
    $region32: #{tpu_custom_call.1} parent=1 // pred_region
      _
    $region33: #{tpu_custom_call.1} parent=1 // pred_fallthru
      _
    // Predicated region
    $region34: #{tpu_custom_call.1} parent=1 // pred_check
      _
    $region35: #{tpu_custom_call.1} parent=1 // pred_check_branch
      %40 = sbr.rel (0) target = $region37
    $region36: #{tpu_custom_call.1} parent=1 // pred_region
      _
    $region37: #{tpu_custom_call.1} parent=1 // pred_fallthru
      _
    // Predicated region
    $region38: #{tpu_custom_call.1} parent=1 // pred_check
      _
    $region39: #{tpu_custom_call.1} parent=1 // pred_check_branch
      %42 = sbr.rel (0) target = $region41
    $region40: #{tpu_custom_call.1} parent=1 // pred_region
      _
    $region41: #{tpu_custom_call.1} parent=1 // pred_fallthru
      _
    // Predicated region
    $region42: #{tpu_custom_call.1} parent=1 // pred_check
      _
    $region43: #{tpu_custom_call.1} parent=1 // pred_check_branch
      %44 = sbr.rel (0) target = $region45
    $region44: #{tpu_custom_call.1} parent=1 // pred_region
      _
    $region45: #{tpu_custom_call.1} parent=1 // pred_fallthru
      _
    // Predicated region
    $region46: #{tpu_custom_call.1} parent=1 // pred_check
      _
    $region47: #{tpu_custom_call.1} parent=1 // pred_check_branch
      %46 = sbr.rel (0) target = $region49
    $region48: #{tpu_custom_call.1} parent=1 // pred_region
      _
    $region49: #{tpu_custom_call.1} parent=1 // pred_fallthru
      _
    // Predicated region
    $region50: #{tpu_custom_call.1} parent=1 // pred_check
      _
    $region51: #{tpu_custom_call.1} parent=1 // pred_check_branch
      %48 = sbr.rel (0) target = $region53
    $region52: #{tpu_custom_call.1} parent=1 // pred_region
      _
    $region53: #{tpu_custom_call.1} parent=1 // pred_fallthru
      _
    // Predicated region
    $region54: #{tpu_custom_call.1} parent=1 // pred_check
      _
    $region55: #{tpu_custom_call.1} parent=1 // pred_check_branch
      %50 = sbr.rel (0) target = $region57
    $region56: #{tpu_custom_call.1} parent=1 // pred_region
      _
    $region57: #{tpu_custom_call.1} parent=1 // pred_fallthru
      _
    // Predicated region
    $region58: #{tpu_custom_call.1} parent=1 // pred_check
      _
    $region59: #{tpu_custom_call.1} parent=1 // pred_check_branch
      %52 = sbr.rel (0) target = $region61
    $region60: #{tpu_custom_call.1} parent=1 // pred_region
      _
    $region61: #{tpu_custom_call.1} parent=1 // pred_fallthru
      _
    %v53 = vld [vmem:[%s0] sm:$0x1]
    %v54 = vld [vmem:[%s0 + $0x1] sm:$0x1]
    %v55 = vld [vmem:[%s0 + $0x2] sm:$0x1]
    %v56 = vld [vmem:[%s0 + $0x3] sm:$0x1]
    %v57 = vld [vmem:[%s0 + $0x4] sm:$0x1]
    %v58 = vld [vmem:[%s0 + $0x5] sm:$0x1]
    %v59 = vld [vmem:[%s0 + $0x6] sm:$0x1]
    %v60 = vld [vmem:[%s0 + $0x7] sm:$0x1]
    %v61 = vld [vmem:[%s0 + $0x8] sm:$0x1]
    %v62 = vld [vmem:[%s0 + $0x9] sm:$0x1]
    %v63 = vld [vmem:[%s0 + $0xa] sm:$0x1]
    %v64 = vld [vmem:[%s0 + $0xb] sm:$0x1]
    %v65 = vld [vmem:[%s0 + $0xc] sm:$0x1]
    %v66 = vld [vmem:[%s0 + $0xd] sm:$0x1]
    %v67 = vld [vmem:[%s0 + $0xe] sm:$0x1]
    %v68 = vld [vmem:[%s0 + $0xf] sm:$0x1]
    %v69 = vld [vmem:[%s1] sm:$0xf]
    %v70 = vld [vmem:[%s1 + $0x4] sm:$0xf]
    %v71 = vld [vmem:[%s1 + $0x8] sm:$0xf]
    %v72 = vld [vmem:[%s2] sm:$0xf]
    %74 = vset.pattern.permute.xlu0 0
    %75 = vperm.xlu0 %74, %v72
    %v76 = vpop.permute.xlu0 %75
    %v78 = vadd.f32 %v76, 0.0
    %v79 = vlaneseq
    %v80 = vshrl.u32 %v79, 7
    %v81 = vsub.s32 0, %v80
    %v82 = vlaneseq
    %v83 = vshrl.u32 %v82, 7
    %v84 = vsub.s32 0, %v83
    %v85 = vrot.slane %v53, %v84
    %v86 = vlaneseq
    %v87 = vshrl.u32 %v86, 7
    %v88 = vsub.s32 0, %v87
    %v89 = vrot.slane %v54, %v88
    %v90 = vlaneseq
    %v91 = vshrl.u32 %v90, 7
    %v92 = vsub.s32 0, %v91
    %v93 = vrot.slane %v55, %v92
    %v94 = vlaneseq
    %v95 = vshrl.u32 %v94, 7
    %v96 = vsub.s32 0, %v95
    %v97 = vrot.slane %v56, %v96
    %v98 = vlaneseq
    %v99 = vshrl.u32 %v98, 7
    %v100 = vsub.s32 0, %v99
    %v101 = vrot.slane %v57, %v100
    %v102 = vlaneseq
    %v103 = vshrl.u32 %v102, 7
    %v104 = vsub.s32 0, %v103
    %v105 = vrot.slane %v58, %v104
    %v106 = vlaneseq
    %v107 = vshrl.u32 %v106, 7
    %v108 = vsub.s32 0, %v107
    %v109 = vrot.slane %v59, %v108
    %v110 = vlaneseq
    %v111 = vshrl.u32 %v110, 7
    %v112 = vsub.s32 0, %v111
    %v113 = vrot.slane %v60, %v112
    %v114 = vlaneseq
    %v115 = vshrl.u32 %v114, 7
    %v116 = vsub.s32 0, %v115
    %v117 = vrot.slane %v61, %v116
    %v118 = vlaneseq
    %v119 = vshrl.u32 %v118, 7
    %v120 = vsub.s32 0, %v119
    %v121 = vrot.slane %v62, %v120
    %v122 = vlaneseq
    %v123 = vshrl.u32 %v122, 7
    %v124 = vsub.s32 0, %v123
    %v125 = vrot.slane %v63, %v124
    %v126 = vlaneseq
    %v127 = vshrl.u32 %v126, 7
    %v128 = vsub.s32 0, %v127
    %v129 = vrot.slane %v64, %v128
    %v130 = vlaneseq
    %v131 = vshrl.u32 %v130, 7
    %v132 = vsub.s32 0, %v131
    %v133 = vrot.slane %v65, %v132
    %v134 = vlaneseq
    %v135 = vshrl.u32 %v134, 7
    %v136 = vsub.s32 0, %v135
    %v137 = vrot.slane %v66, %v136
    %v138 = vlaneseq
    %v139 = vshrl.u32 %v138, 7
    %v140 = vsub.s32 0, %v139
    %v141 = vrot.slane %v67, %v140
    %v142 = vlaneseq
    %v143 = vshrl.u32 %v142, 7
    %v144 = vsub.s32 0, %v143
    %v145 = vrot.slane %v68, %v144
    %147 = vset.pattern.permute.xlu0 0
    %148 = vperm.xlu0 %147, %v69
    %v149 = vpop.permute.xlu0 %148
    %v151 = vmul.f32 0.0, %v149
    %v152 = vmul.f32 %v85, %v149
    %v153 = vmul.f32 %v89, %v149
    %v154 = vmul.f32 %v93, %v149
    %v155 = vmul.f32 %v97, %v149
    %v156 = vmul.f32 %v101, %v149
    %v157 = vmul.f32 %v105, %v149
    %v158 = vmul.f32 %v109, %v149
    %v159 = vmul.f32 %v113, %v149
    %v160 = vmul.f32 %v117, %v149
    %v161 = vmul.f32 %v121, %v149
    %v162 = vmul.f32 %v125, %v149
    %v163 = vmul.f32 %v129, %v149
    %v164 = vmul.f32 %v133, %v149
    %v165 = vmul.f32 %v137, %v149
    %v166 = vmul.f32 %v141, %v149
    %v167 = vmul.f32 %v145, %v149
    %v168 = vadd.f32 %v78, %v151
    %v169 = vadd.f32 %v78, %v152
    %v170 = vadd.f32 %v78, %v153
    %v171 = vadd.f32 %v78, %v154
    %v172 = vadd.f32 %v78, %v155
    %v173 = vadd.f32 %v78, %v156
    %v174 = vadd.f32 %v78, %v157
    %v175 = vadd.f32 %v78, %v158
    %v176 = vadd.f32 %v78, %v159
    %v177 = vadd.f32 %v78, %v160
    %v178 = vadd.f32 %v78, %v161
    %v179 = vadd.f32 %v78, %v162
    %v180 = vadd.f32 %v78, %v163
    %v181 = vadd.f32 %v78, %v164
    %v182 = vadd.f32 %v78, %v165
    %v183 = vadd.f32 %v78, %v166
    %v184 = vadd.f32 %v78, %v167
    %186 = vset.pattern.permute.xlu0 0
    %187 = vperm.xlu0 %186, %v70
    %v188 = vpop.permute.xlu0 %187
    %v190 = vmul.f32 0.0, %v188
    %v191 = vmul.f32 %v85, %v188
    %v192 = vmul.f32 %v89, %v188
    %v193 = vmul.f32 %v93, %v188
    %v194 = vmul.f32 %v97, %v188
    %v195 = vmul.f32 %v101, %v188
    %v196 = vmul.f32 %v105, %v188
    %v197 = vmul.f32 %v109, %v188
    %v198 = vmul.f32 %v113, %v188
    %v199 = vmul.f32 %v117, %v188
    %v200 = vmul.f32 %v121, %v188
    %v201 = vmul.f32 %v125, %v188
    %v202 = vmul.f32 %v129, %v188
    %v203 = vmul.f32 %v133, %v188
    %v204 = vmul.f32 %v137, %v188
    %v205 = vmul.f32 %v141, %v188
    %v206 = vmul.f32 %v145, %v188
    %v207 = vadd.f32 %v168, %v190
    %v208 = vadd.f32 %v168, %v191
    %v209 = vadd.f32 %v169, %v192
    %v210 = vadd.f32 %v170, %v193
    %v211 = vadd.f32 %v171, %v194
    %v212 = vadd.f32 %v172, %v195
    %v213 = vadd.f32 %v173, %v196
    %v214 = vadd.f32 %v174, %v197
    %v215 = vadd.f32 %v175, %v198
    %v216 = vadd.f32 %v176, %v199
    %v217 = vadd.f32 %v177, %v200
    %v218 = vadd.f32 %v178, %v201
    %v219 = vadd.f32 %v179, %v202
    %v220 = vadd.f32 %v180, %v203
    %v221 = vadd.f32 %v181, %v204
    %v222 = vadd.f32 %v182, %v205
    %v223 = vadd.f32 %v183, %v206
    %v224 = vadd.f32 %v184, %v190
    %226 = vset.pattern.permute.xlu0 0
    %227 = vperm.xlu0 %226, %v71
    %v228 = vpop.permute.xlu0 %227
    %v230 = vmul.f32 %v85, %v228
    %v231 = vmul.f32 %v89, %v228
    %v232 = vmul.f32 %v93, %v228
    %v233 = vmul.f32 %v97, %v228
    %v234 = vmul.f32 %v101, %v228
    %v235 = vmul.f32 %v105, %v228
    %v236 = vmul.f32 %v109, %v228
    %v237 = vmul.f32 %v113, %v228
    %v238 = vmul.f32 %v117, %v228
    %v239 = vmul.f32 %v121, %v228
    %v240 = vmul.f32 %v125, %v228
    %v241 = vmul.f32 %v129, %v228
    %v242 = vmul.f32 %v133, %v228
    %v243 = vmul.f32 %v137, %v228
    %v244 = vmul.f32 %v141, %v228
    %v245 = vmul.f32 %v145, %v228
    %v246 = vmul.f32 0.0, %v228
    %v247 = vadd.f32 %v207, %v230
    %v248 = vadd.f32 %v208, %v231
    %v249 = vadd.f32 %v209, %v232
    %v250 = vadd.f32 %v210, %v233
    %v251 = vadd.f32 %v211, %v234
    %v252 = vadd.f32 %v212, %v235
    %v253 = vadd.f32 %v213, %v236
    %v254 = vadd.f32 %v214, %v237
    %v255 = vadd.f32 %v215, %v238
    %v256 = vadd.f32 %v216, %v239
    %v257 = vadd.f32 %v217, %v240
    %v258 = vadd.f32 %v218, %v241
    %v259 = vadd.f32 %v219, %v242
    %v260 = vadd.f32 %v220, %v243
    %v261 = vadd.f32 %v221, %v244
    %v262 = vadd.f32 %v222, %v245
    %v263 = vadd.f32 %v223, %v246
    %v264 = vadd.f32 %v224, %v246
    %v265 = vmax.f32 %v247, 0.0
    %v266 = vmax.f32 %v248, 0.0
    %v267 = vmax.f32 %v249, 0.0
    %v268 = vmax.f32 %v250, 0.0
    %v269 = vmax.f32 %v251, 0.0
    %v270 = vmax.f32 %v252, 0.0
    %v271 = vmax.f32 %v253, 0.0
    %v272 = vmax.f32 %v254, 0.0
    %v273 = vmax.f32 %v255, 0.0
    %v274 = vmax.f32 %v256, 0.0
    %v275 = vmax.f32 %v257, 0.0
    %v276 = vmax.f32 %v258, 0.0
    %v277 = vmax.f32 %v259, 0.0
    %v278 = vmax.f32 %v260, 0.0
    %v279 = vmax.f32 %v261, 0.0
    %v280 = vmax.f32 %v262, 0.0
    %v281 = vmax.f32 %v263, 0.0
    %v282 = vmax.f32 %v264, 0.0
    %vm283 = vcmask 1043456
    %v284 = vsel %vm283, %v265, -inf
    %v285 = vsel %vm283, %v266, -inf
    %v286 = vmax.f32 %v284, %v285
    %v287 = vsel %vm283, %v267, -inf
    %v288 = vsel %vm283, %v268, -inf
    %v289 = vmax.f32 %v287, %v288
    %v290 = vsel %vm283, %v269, -inf
    %v291 = vsel %vm283, %v270, -inf
    %v292 = vmax.f32 %v290, %v291
    %v293 = vsel %vm283, %v271, -inf
    %v294 = vsel %vm283, %v272, -inf
    %v295 = vmax.f32 %v293, %v294
    %v296 = vsel %vm283, %v273, -inf
    %v297 = vsel %vm283, %v274, -inf
    %v298 = vmax.f32 %v296, %v297
    %v299 = vsel %vm283, %v275, -inf
    %v300 = vsel %vm283, %v276, -inf
    %v301 = vmax.f32 %v299, %v300
    %v302 = vsel %vm283, %v277, -inf
    %v303 = vsel %vm283, %v278, -inf
    %v304 = vmax.f32 %v302, %v303
    %v305 = vsel %vm283, %v279, -inf
    %v306 = vsel %vm283, %v280, -inf
    %v307 = vmax.f32 %v305, %v306
    %v308 = vsel %vm283, %v281, -inf
    %v309 = vsel %vm283, %v282, -inf
    %v310 = vmax.f32 %v308, %v309
    %v311 = vld [vmem:[%s3] sm:$0xff]
    %v312 = vld [vmem:[%s3 + $0x8] sm:$0xff]
    %v313 = vld [vmem:[%s3 + $0x10] sm:$0xff]
    %v314 = vld [vmem:[%s3 + $0x18] sm:$0xff]
    %v315 = vld [vmem:[%s3 + $0x20] sm:$0xff]
    %v316 = vld [vmem:[%s3 + $0x28] sm:$0xff]
    %v317 = vld [vmem:[%s3 + $0x30] sm:$0xff]
    %v318 = vld [vmem:[%s3 + $0x38] sm:$0xff]
    %v319 = vld [vmem:[%s3 + $0x40] sm:$0xff]
    %v320 = vld [vmem:[%s3 + $0x48] sm:$0xff]
    %v321 = vld [vmem:[%s3 + $0x50] sm:$0xff]
    %v322 = vld [vmem:[%s3 + $0x58] sm:$0xff]
    %v323 = vld [vmem:[%s4] sm:$0xff]
    %325 = vset.pattern.permute.xlu0 0
    %326 = vperm.xlu0 %325, %v323
    %v327 = vpop.permute.xlu0 %326
    %v329 = vadd.f32 %v327, 0.0
    %v330 = vlaneseq
    %v331 = vshrl.u32 %v330, 7
    %v332 = vsub.s32 0, %v331
    %v333 = vrot.slane %v286, %v332
    %v334 = vlaneseq
    %v335 = vshrl.u32 %v334, 7
    %v336 = vsub.s32 0, %v335
    %v337 = vrot.slane %v289, %v336
    %v338 = vlaneseq
    %v339 = vshrl.u32 %v338, 7
    %v340 = vsub.s32 0, %v339
    %v341 = vrot.slane %v292, %v340
    %v342 = vlaneseq
    %v343 = vshrl.u32 %v342, 7
    %v344 = vsub.s32 0, %v343
    %v345 = vrot.slane %v295, %v344
    %v346 = vlaneseq
    %v347 = vshrl.u32 %v346, 7
    %v348 = vsub.s32 0, %v347
    %v349 = vrot.slane %v298, %v348
    %v350 = vlaneseq
    %v351 = vshrl.u32 %v350, 7
    %v352 = vsub.s32 0, %v351
    %v353 = vrot.slane %v301, %v352
    %v354 = vlaneseq
    %v355 = vshrl.u32 %v354, 7
    %v356 = vsub.s32 0, %v355
    %v357 = vrot.slane %v304, %v356
    %v358 = vlaneseq
    %v359 = vshrl.u32 %v358, 7
    %v360 = vsub.s32 0, %v359
    %v361 = vrot.slane %v307, %v360
    %363 = vset.pattern.permute.xlu0 0
    %364 = vperm.xlu0 %363, %v311
    %v365 = vpop.permute.xlu0 %364
    %v367 = vmul.f32 0.0, %v365
    %v368 = vmul.f32 %v333, %v365
    %v369 = vmul.f32 %v337, %v365
    %v370 = vmul.f32 %v341, %v365
    %v371 = vmul.f32 %v345, %v365
    %v372 = vmul.f32 %v349, %v365
    %v373 = vmul.f32 %v353, %v365
    %v374 = vmul.f32 %v357, %v365
    %v375 = vmul.f32 %v361, %v365
    %v376 = vadd.f32 %v329, %v367
    %v377 = vadd.f32 %v329, %v368
    %v378 = vadd.f32 %v329, %v369
    %v379 = vadd.f32 %v329, %v370
    %v380 = vadd.f32 %v329, %v371
    %v381 = vadd.f32 %v329, %v372
    %v382 = vadd.f32 %v329, %v373
    %v383 = vadd.f32 %v329, %v374
    %v384 = vadd.f32 %v329, %v375
    %v385 = vlaneseq
    %v386 = vshrl.u32 %v385, 7
    %v387 = vsub.s32 1, %v386
    %v388 = vlaneseq
    %v389 = vshrl.u32 %v388, 7
    %v390 = vsub.s32 1, %v389
    %v391 = vrot.slane %v286, %v390
    %v392 = vlaneseq
    %v393 = vshrl.u32 %v392, 7
    %v394 = vsub.s32 1, %v393
    %v395 = vrot.slane %v289, %v394
    %v396 = vlaneseq
    %v397 = vshrl.u32 %v396, 7
    %v398 = vsub.s32 1, %v397
    %v399 = vrot.slane %v292, %v398
    %v400 = vlaneseq
    %v401 = vshrl.u32 %v400, 7
    %v402 = vsub.s32 1, %v401
    %v403 = vrot.slane %v295, %v402
    %v404 = vlaneseq
    %v405 = vshrl.u32 %v404, 7
    %v406 = vsub.s32 1, %v405
    %v407 = vrot.slane %v298, %v406
    %v408 = vlaneseq
    %v409 = vshrl.u32 %v408, 7
    %v410 = vsub.s32 1, %v409
    %v411 = vrot.slane %v301, %v410
    %v412 = vlaneseq
    %v413 = vshrl.u32 %v412, 7
    %v414 = vsub.s32 1, %v413
    %v415 = vrot.slane %v304, %v414
    %v416 = vlaneseq
    %v417 = vshrl.u32 %v416, 7
    %v418 = vsub.s32 1, %v417
    %v419 = vrot.slane %v307, %v418
    %421 = vset.pattern.permute.xlu0 0
    %422 = vperm.xlu0 %421, %v312
    %v423 = vpop.permute.xlu0 %422
    %v425 = vmul.f32 0.0, %v423
    %v426 = vmul.f32 %v391, %v423
    %v427 = vmul.f32 %v395, %v423
    %v428 = vmul.f32 %v399, %v423
    %v429 = vmul.f32 %v403, %v423
    %v430 = vmul.f32 %v407, %v423
    %v431 = vmul.f32 %v411, %v423
    %v432 = vmul.f32 %v415, %v423
    %v433 = vmul.f32 %v419, %v423
    %v434 = vadd.f32 %v376, %v425
    %v435 = vadd.f32 %v377, %v426
    %v436 = vadd.f32 %v378, %v427
    %v437 = vadd.f32 %v379, %v428
    %v438 = vadd.f32 %v380, %v429
    %v439 = vadd.f32 %v381, %v430
    %v440 = vadd.f32 %v382, %v431
    %v441 = vadd.f32 %v383, %v432
    %v442 = vadd.f32 %v384, %v433
    %v443 = vlaneseq
    %v444 = vshrl.u32 %v443, 7
    %v445 = vsub.s32 2, %v444
    %v446 = vlaneseq
    %v447 = vshrl.u32 %v446, 7
    %v448 = vsub.s32 2, %v447
    %v449 = vrot.slane %v286, %v448
    %v450 = vlaneseq
    %v451 = vshrl.u32 %v450, 7
    %v452 = vsub.s32 2, %v451
    %v453 = vrot.slane %v289, %v452
    %v454 = vlaneseq
    %v455 = vshrl.u32 %v454, 7
    %v456 = vsub.s32 2, %v455
    %v457 = vrot.slane %v292, %v456
    %v458 = vlaneseq
    %v459 = vshrl.u32 %v458, 7
    %v460 = vsub.s32 2, %v459
    %v461 = vrot.slane %v295, %v460
    %v462 = vlaneseq
    %v463 = vshrl.u32 %v462, 7
    %v464 = vsub.s32 2, %v463
    %v465 = vrot.slane %v298, %v464
    %v466 = vlaneseq
    %v467 = vshrl.u32 %v466, 7
    %v468 = vsub.s32 2, %v467
    %v469 = vrot.slane %v301, %v468
    %v470 = vlaneseq
    %v471 = vshrl.u32 %v470, 7
    %v472 = vsub.s32 2, %v471
    %v473 = vrot.slane %v304, %v472
    %v474 = vlaneseq
    %v475 = vshrl.u32 %v474, 7
    %v476 = vsub.s32 2, %v475
    %v477 = vrot.slane %v307, %v476
    %479 = vset.pattern.permute.xlu0 0
    %480 = vperm.xlu0 %479, %v313
    %v481 = vpop.permute.xlu0 %480
    %v483 = vmul.f32 0.0, %v481
    %v484 = vmul.f32 %v449, %v481
    %v485 = vmul.f32 %v453, %v481
    %v486 = vmul.f32 %v457, %v481
    %v487 = vmul.f32 %v461, %v481
    %v488 = vmul.f32 %v465, %v481
    %v489 = vmul.f32 %v469, %v481
    %v490 = vmul.f32 %v473, %v481
    %v491 = vmul.f32 %v477, %v481
    %v492 = vadd.f32 %v434, %v483
    %v493 = vadd.f32 %v435, %v484
    %v494 = vadd.f32 %v436, %v485
    %v495 = vadd.f32 %v437, %v486
    %v496 = vadd.f32 %v438, %v487
    %v497 = vadd.f32 %v439, %v488
    %v498 = vadd.f32 %v440, %v489
    %v499 = vadd.f32 %v441, %v490
    %v500 = vadd.f32 %v442, %v491
    %v501 = vlaneseq
    %v502 = vshrl.u32 %v501, 7
    %v503 = vsub.s32 3, %v502
    %v504 = vlaneseq
    %v505 = vshrl.u32 %v504, 7
    %v506 = vsub.s32 3, %v505
    %v507 = vrot.slane %v286, %v506
    %v508 = vlaneseq
    %v509 = vshrl.u32 %v508, 7
    %v510 = vsub.s32 3, %v509
    %v511 = vrot.slane %v289, %v510
    %v512 = vlaneseq
    %v513 = vshrl.u32 %v512, 7
    %v514 = vsub.s32 3, %v513
    %v515 = vrot.slane %v292, %v514
    %v516 = vlaneseq
    %v517 = vshrl.u32 %v516, 7
    %v518 = vsub.s32 3, %v517
    %v519 = vrot.slane %v295, %v518
    %v520 = vlaneseq
    %v521 = vshrl.u32 %v520, 7
    %v522 = vsub.s32 3, %v521
    %v523 = vrot.slane %v298, %v522
    %v524 = vlaneseq
    %v525 = vshrl.u32 %v524, 7
    %v526 = vsub.s32 3, %v525
    %v527 = vrot.slane %v301, %v526
    %v528 = vlaneseq
    %v529 = vshrl.u32 %v528, 7
    %v530 = vsub.s32 3, %v529
    %v531 = vrot.slane %v304, %v530
    %v532 = vlaneseq
    %v533 = vshrl.u32 %v532, 7
    %v534 = vsub.s32 3, %v533
    %v535 = vrot.slane %v307, %v534
    %537 = vset.pattern.permute.xlu0 0
    %538 = vperm.xlu0 %537, %v314
    %v539 = vpop.permute.xlu0 %538
    %v541 = vmul.f32 0.0, %v539
    %v542 = vmul.f32 %v507, %v539
    %v543 = vmul.f32 %v511, %v539
    %v544 = vmul.f32 %v515, %v539
    %v545 = vmul.f32 %v519, %v539
    %v546 = vmul.f32 %v523, %v539
    %v547 = vmul.f32 %v527, %v539
    %v548 = vmul.f32 %v531, %v539
    %v549 = vmul.f32 %v535, %v539
    %v550 = vadd.f32 %v492, %v541
    %v551 = vadd.f32 %v493, %v542
    %v552 = vadd.f32 %v494, %v543
    %v553 = vadd.f32 %v495, %v544
    %v554 = vadd.f32 %v496, %v545
    %v555 = vadd.f32 %v497, %v546
    %v556 = vadd.f32 %v498, %v547
    %v557 = vadd.f32 %v499, %v548
    %v558 = vadd.f32 %v500, %v549
    %v559 = vlaneseq
    %v560 = vshrl.u32 %v559, 7
    %v561 = vsub.s32 0, %v560
    %v562 = vrot.slane %v310, %v561
    %564 = vset.pattern.permute.xlu0 0
    %565 = vperm.xlu0 %564, %v315
    %v566 = vpop.permute.xlu0 %565
    %v568 = vmul.f32 0.0, %v566
    %v569 = vmul.f32 %v333, %v566
    %v570 = vmul.f32 %v337, %v566
    %v571 = vmul.f32 %v341, %v566
    %v572 = vmul.f32 %v345, %v566
    %v573 = vmul.f32 %v349, %v566
    %v574 = vmul.f32 %v353, %v566
    %v575 = vmul.f32 %v357, %v566
    %v576 = vmul.f32 %v361, %v566
    %v577 = vmul.f32 %v562, %v566
    %v578 = vadd.f32 %v550, %v568
    %v579 = vadd.f32 %v550, %v569
    %v580 = vadd.f32 %v551, %v570
    %v581 = vadd.f32 %v552, %v571
    %v582 = vadd.f32 %v553, %v572
    %v583 = vadd.f32 %v554, %v573
    %v584 = vadd.f32 %v555, %v574
    %v585 = vadd.f32 %v556, %v575
    %v586 = vadd.f32 %v557, %v576
    %v587 = vadd.f32 %v558, %v577
    %v588 = vlaneseq
    %v589 = vshrl.u32 %v588, 7
    %v590 = vsub.s32 1, %v589
    %v591 = vrot.slane %v310, %v590
    %593 = vset.pattern.permute.xlu0 0
    %594 = vperm.xlu0 %593, %v316
    %v595 = vpop.permute.xlu0 %594
    %v597 = vmul.f32 0.0, %v595
    %v598 = vmul.f32 %v391, %v595
    %v599 = vmul.f32 %v395, %v595
    %v600 = vmul.f32 %v399, %v595
    %v601 = vmul.f32 %v403, %v595
    %v602 = vmul.f32 %v407, %v595
    %v603 = vmul.f32 %v411, %v595
    %v604 = vmul.f32 %v415, %v595
    %v605 = vmul.f32 %v419, %v595
    %v606 = vmul.f32 %v591, %v595
    %v607 = vadd.f32 %v578, %v597
    %v608 = vadd.f32 %v579, %v598
    %v609 = vadd.f32 %v580, %v599
    %v610 = vadd.f32 %v581, %v600
    %v611 = vadd.f32 %v582, %v601
    %v612 = vadd.f32 %v583, %v602
    %v613 = vadd.f32 %v584, %v603
    %v614 = vadd.f32 %v585, %v604
    %v615 = vadd.f32 %v586, %v605
    %v616 = vadd.f32 %v587, %v606
    %v617 = vlaneseq
    %v618 = vshrl.u32 %v617, 7
    %v619 = vsub.s32 2, %v618
    %v620 = vrot.slane %v310, %v619
    %622 = vset.pattern.permute.xlu0 0
    %623 = vperm.xlu0 %622, %v317
    %v624 = vpop.permute.xlu0 %623
    %v626 = vmul.f32 0.0, %v624
    %v627 = vmul.f32 %v449, %v624
    %v628 = vmul.f32 %v453, %v624
    %v629 = vmul.f32 %v457, %v624
    %v630 = vmul.f32 %v461, %v624
    %v631 = vmul.f32 %v465, %v624
    %v632 = vmul.f32 %v469, %v624
    %v633 = vmul.f32 %v473, %v624
    %v634 = vmul.f32 %v477, %v624
    %v635 = vmul.f32 %v620, %v624
    %v636 = vadd.f32 %v607, %v626
    %v637 = vadd.f32 %v608, %v627
    %v638 = vadd.f32 %v609, %v628
    %v639 = vadd.f32 %v610, %v629
    %v640 = vadd.f32 %v611, %v630
    %v641 = vadd.f32 %v612, %v631
    %v642 = vadd.f32 %v613, %v632
    %v643 = vadd.f32 %v614, %v633
    %v644 = vadd.f32 %v615, %v634
    %v645 = vadd.f32 %v616, %v635
    %v646 = vlaneseq
    %v647 = vshrl.u32 %v646, 7
    %v648 = vsub.s32 3, %v647
    %v649 = vrot.slane %v310, %v648
    %651 = vset.pattern.permute.xlu0 0
    %652 = vperm.xlu0 %651, %v318
    %v653 = vpop.permute.xlu0 %652
    %v655 = vmul.f32 0.0, %v653
    %v656 = vmul.f32 %v507, %v653
    %v657 = vmul.f32 %v511, %v653
    %v658 = vmul.f32 %v515, %v653
    %v659 = vmul.f32 %v519, %v653
    %v660 = vmul.f32 %v523, %v653
    %v661 = vmul.f32 %v527, %v653
    %v662 = vmul.f32 %v531, %v653
    %v663 = vmul.f32 %v535, %v653
    %v664 = vmul.f32 %v649, %v653
    %v665 = vadd.f32 %v636, %v655
    %v666 = vadd.f32 %v637, %v656
    %v667 = vadd.f32 %v638, %v657
    %v668 = vadd.f32 %v639, %v658
    %v669 = vadd.f32 %v640, %v659
    %v670 = vadd.f32 %v641, %v660
    %v671 = vadd.f32 %v642, %v661
    %v672 = vadd.f32 %v643, %v662
    %v673 = vadd.f32 %v644, %v663
    %v674 = vadd.f32 %v645, %v664
    %676 = vset.pattern.permute.xlu0 0
    %677 = vperm.xlu0 %676, %v319
    %v678 = vpop.permute.xlu0 %677
    %v680 = vmul.f32 %v333, %v678
    %v681 = vmul.f32 %v337, %v678
    %v682 = vmul.f32 %v341, %v678
    %v683 = vmul.f32 %v345, %v678
    %v684 = vmul.f32 %v349, %v678
    %v685 = vmul.f32 %v353, %v678
    %v686 = vmul.f32 %v357, %v678
    %v687 = vmul.f32 %v361, %v678
    %v688 = vmul.f32 %v562, %v678
    %v689 = vmul.f32 0.0, %v678
    %v690 = vadd.f32 %v665, %v680
    %v691 = vadd.f32 %v666, %v681
    %v692 = vadd.f32 %v667, %v682
    %v693 = vadd.f32 %v668, %v683
    %v694 = vadd.f32 %v669, %v684
    %v695 = vadd.f32 %v670, %v685
    %v696 = vadd.f32 %v671, %v686
    %v697 = vadd.f32 %v672, %v687
    %v698 = vadd.f32 %v673, %v688
    %v699 = vadd.f32 %v674, %v689
    %701 = vset.pattern.permute.xlu0 0
    %702 = vperm.xlu0 %701, %v320
    %v703 = vpop.permute.xlu0 %702
    %v705 = vmul.f32 %v391, %v703
    %v706 = vmul.f32 %v395, %v703
    %v707 = vmul.f32 %v399, %v703
    %v708 = vmul.f32 %v403, %v703
    %v709 = vmul.f32 %v407, %v703
    %v710 = vmul.f32 %v411, %v703
    %v711 = vmul.f32 %v415, %v703
    %v712 = vmul.f32 %v419, %v703
    %v713 = vmul.f32 %v591, %v703
    %v714 = vmul.f32 0.0, %v703
    %v715 = vadd.f32 %v690, %v705
    %v716 = vadd.f32 %v691, %v706
    %v717 = vadd.f32 %v692, %v707
    %v718 = vadd.f32 %v693, %v708
    %v719 = vadd.f32 %v694, %v709
    %v720 = vadd.f32 %v695, %v710
    %v721 = vadd.f32 %v696, %v711
    %v722 = vadd.f32 %v697, %v712
    %v723 = vadd.f32 %v698, %v713
    %v724 = vadd.f32 %v699, %v714
    %726 = vset.pattern.permute.xlu0 0
    %727 = vperm.xlu0 %726, %v321
    %v728 = vpop.permute.xlu0 %727
    %v730 = vmul.f32 %v449, %v728
    %v731 = vmul.f32 %v453, %v728
    %v732 = vmul.f32 %v457, %v728
    %v733 = vmul.f32 %v461, %v728
    %v734 = vmul.f32 %v465, %v728
    %v735 = vmul.f32 %v469, %v728
    %v736 = vmul.f32 %v473, %v728
    %v737 = vmul.f32 %v477, %v728
    %v738 = vmul.f32 %v620, %v728
    %v739 = vmul.f32 0.0, %v728
    %v740 = vadd.f32 %v715, %v730
    %v741 = vadd.f32 %v716, %v731
    %v742 = vadd.f32 %v717, %v732
    %v743 = vadd.f32 %v718, %v733
    %v744 = vadd.f32 %v719, %v734
    %v745 = vadd.f32 %v720, %v735
    %v746 = vadd.f32 %v721, %v736
    %v747 = vadd.f32 %v722, %v737
    %v748 = vadd.f32 %v723, %v738
    %v749 = vadd.f32 %v724, %v739
    %751 = vset.pattern.permute.xlu0 0
    %752 = vperm.xlu0 %751, %v322
    %v753 = vpop.permute.xlu0 %752
    %v755 = vmul.f32 %v507, %v753
    %v756 = vmul.f32 %v511, %v753
    %v757 = vmul.f32 %v515, %v753
    %v758 = vmul.f32 %v519, %v753
    %v759 = vmul.f32 %v523, %v753
    %v760 = vmul.f32 %v527, %v753
    %v761 = vmul.f32 %v531, %v753
    %v762 = vmul.f32 %v535, %v753
    %v763 = vmul.f32 %v649, %v753
    %v764 = vmul.f32 0.0, %v753
    %v765 = vadd.f32 %v740, %v755
    %v766 = vadd.f32 %v741, %v756
    %v767 = vadd.f32 %v742, %v757
    %v768 = vadd.f32 %v743, %v758
    %v769 = vadd.f32 %v744, %v759
    %v770 = vadd.f32 %v745, %v760
    %v771 = vadd.f32 %v746, %v761
    %v772 = vadd.f32 %v747, %v762
    %v773 = vadd.f32 %v748, %v763
    %v774 = vadd.f32 %v749, %v764
    %v775 = vmax.f32 %v765, 0.0
    %v776 = vmax.f32 %v766, 0.0
    %v777 = vmax.f32 %v767, 0.0
    %v778 = vmax.f32 %v768, 0.0
    %v779 = vmax.f32 %v769, 0.0
    %v780 = vmax.f32 %v770, 0.0
    %v781 = vmax.f32 %v771, 0.0
    %v782 = vmax.f32 %v772, 0.0
    %v783 = vmax.f32 %v773, 0.0
    %v784 = vmax.f32 %v774, 0.0
    %v785 = vmax.f32 %v775, %v776
    %v786 = vmax.f32 %v777, %v778
    %v787 = vmax.f32 %v779, %v780
    %v788 = vmax.f32 %v781, %v782
    %v789 = vmax.f32 %v783, %v784
    %v790 = vld [vmem:[%s5] sm:$0xff]
    %v791 = vld [vmem:[%s5 + $0x8] sm:$0x3]
    %v792 = vld [vmem:[%s5 + $0x10] sm:$0xff]
    %v793 = vld [vmem:[%s5 + $0x18] sm:$0x3]
    %v794 = vld [vmem:[%s5 + $0x20] sm:$0xff]
    %v795 = vld [vmem:[%s5 + $0x28] sm:$0x3]
    %v796 = vld [vmem:[%s5 + $0x30] sm:$0xff]
    %v797 = vld [vmem:[%s5 + $0x38] sm:$0x3]
    %v798 = vld [vmem:[%s5 + $0x40] sm:$0xff]
    %v799 = vld [vmem:[%s5 + $0x48] sm:$0x3]
    %v800 = vld [vmem:[%s5 + $0x50] sm:$0xff]
    %v801 = vld [vmem:[%s5 + $0x58] sm:$0x3]
    %v802 = vld [vmem:[%s5 + $0x60] sm:$0xff]
    %v803 = vld [vmem:[%s5 + $0x68] sm:$0x3]
    %v804 = vld [vmem:[%s5 + $0x70] sm:$0xff]
    %v805 = vld [vmem:[%s5 + $0x78] sm:$0x3]
    %v806 = vld [vmem:[%s5 + $0x80] sm:$0xff]
    %v807 = vld [vmem:[%s5 + $0x88] sm:$0x3]
    %v808 = vld [vmem:[%s5 + $0x90] sm:$0xff]
    %v809 = vld [vmem:[%s5 + $0x98] sm:$0x3]
    %v810 = vld [vmem:[%s5 + $0xa0] sm:$0xff]
    %v811 = vld [vmem:[%s5 + $0xa8] sm:$0x3]
    %v812 = vld [vmem:[%s5 + $0xb0] sm:$0xff]
    %v813 = vld [vmem:[%s5 + $0xb8] sm:$0x3]
    %v814 = vld [vmem:[%s5 + $0xc0] sm:$0xff]
    %v815 = vld [vmem:[%s5 + $0xc8] sm:$0x3]
    %v816 = vld [vmem:[%s5 + $0xd0] sm:$0xff]
    %v817 = vld [vmem:[%s5 + $0xd8] sm:$0x3]
    %v818 = vld [vmem:[%s5 + $0xe0] sm:$0xff]
    %v819 = vld [vmem:[%s5 + $0xe8] sm:$0x3]
    %v820 = vld [vmem:[%s5 + $0xf0] sm:$0xff]
    %v821 = vld [vmem:[%s5 + $0xf8] sm:$0x3]
    %v822 = vld [vmem:[%s5 + $0x100] sm:$0xff]
    %v823 = vld [vmem:[%s5 + $0x108] sm:$0x3]
    %v824 = vld [vmem:[%s5 + $0x110] sm:$0xff]
    %v825 = vld [vmem:[%s5 + $0x118] sm:$0x3]
    %v826 = vld [vmem:[%s5 + $0x120] sm:$0xff]
    %v827 = vld [vmem:[%s5 + $0x128] sm:$0x3]
    %v828 = vld [vmem:[%s5 + $0x130] sm:$0xff]
    %v829 = vld [vmem:[%s5 + $0x138] sm:$0x3]
    %v830 = vld [vmem:[%s5 + $0x140] sm:$0xff]
    %v831 = vld [vmem:[%s5 + $0x148] sm:$0x3]
    %v832 = vld [vmem:[%s5 + $0x150] sm:$0xff]
    %v833 = vld [vmem:[%s5 + $0x158] sm:$0x3]
    %v834 = vld [vmem:[%s5 + $0x160] sm:$0xff]
    %v835 = vld [vmem:[%s5 + $0x168] sm:$0x3]
    %v836 = vld [vmem:[%s5 + $0x170] sm:$0xff]
    %v837 = vld [vmem:[%s5 + $0x178] sm:$0x3]
    %v838 = vld [vmem:[%s6] sm:$0xff]
    %v839 = vld [vmem:[%s6 + $0x8] sm:$0x3]
    %841 = vset.pattern.permute.xlu0 0
    %842 = vperm.xlu0 %841, %v838
    %v843 = vpop.permute.xlu0 %842
    %846 = vset.pattern.permute.xlu0 0
    %847 = vperm.xlu0 %846, %v839
    %v848 = vpop.permute.xlu0 %847
    %v850 = vadd.f32 %v843, 0.0
    %v851 = vadd.f32 %v848, 0.0
    %v852 = vlaneseq
    %v853 = vshrl.u32 %v852, 7
    %v854 = vsub.s32 0, %v853
    %v855 = vrot.slane %v785, %v854
    %v856 = vlaneseq
    %v857 = vshrl.u32 %v856, 7
    %v858 = vsub.s32 0, %v857
    %v859 = vrot.slane %v786, %v858
    %v860 = vlaneseq
    %v861 = vshrl.u32 %v860, 7
    %v862 = vsub.s32 0, %v861
    %v863 = vrot.slane %v787, %v862
    %v864 = vlaneseq
    %v865 = vshrl.u32 %v864, 7
    %v866 = vsub.s32 0, %v865
    %v867 = vrot.slane %v788, %v866
    %869 = vset.pattern.permute.xlu0 0
    %870 = vperm.xlu0 %869, %v790
    %v871 = vpop.permute.xlu0 %870
    %874 = vset.pattern.permute.xlu0 0
    %875 = vperm.xlu0 %874, %v791
    %v876 = vpop.permute.xlu0 %875
    %v878 = vmul.f32 0.0, %v871
    %v879 = vmul.f32 0.0, %v876
    %v880 = vmul.f32 %v855, %v871
    %v881 = vmul.f32 %v855, %v876
    %v882 = vmul.f32 %v859, %v871
    %v883 = vmul.f32 %v859, %v876
    %v884 = vmul.f32 %v863, %v871
    %v885 = vmul.f32 %v863, %v876
    %v886 = vmul.f32 %v867, %v871
    %v887 = vmul.f32 %v867, %v876
    %v888 = vadd.f32 %v850, %v878
    %v889 = vadd.f32 %v851, %v879
    %v890 = vadd.f32 %v850, %v880
    %v891 = vadd.f32 %v851, %v881
    %v892 = vadd.f32 %v850, %v882
    %v893 = vadd.f32 %v851, %v883
    %v894 = vadd.f32 %v850, %v884
    %v895 = vadd.f32 %v851, %v885
    %v896 = vadd.f32 %v850, %v886
    %v897 = vadd.f32 %v851, %v887
    %v898 = vlaneseq
    %v899 = vshrl.u32 %v898, 7
    %v900 = vsub.s32 1, %v899
    %v901 = vrot.slane %v785, %v900
    %v902 = vlaneseq
    %v903 = vshrl.u32 %v902, 7
    %v904 = vsub.s32 1, %v903
    %v905 = vrot.slane %v786, %v904
    %v906 = vlaneseq
    %v907 = vshrl.u32 %v906, 7
    %v908 = vsub.s32 1, %v907
    %v909 = vrot.slane %v787, %v908
    %v910 = vlaneseq
    %v911 = vshrl.u32 %v910, 7
    %v912 = vsub.s32 1, %v911
    %v913 = vrot.slane %v788, %v912
    %915 = vset.pattern.permute.xlu0 0
    %916 = vperm.xlu0 %915, %v792
    %v917 = vpop.permute.xlu0 %916
    %920 = vset.pattern.permute.xlu0 0
    %921 = vperm.xlu0 %920, %v793
    %v922 = vpop.permute.xlu0 %921
    %v924 = vmul.f32 0.0, %v917
    %v925 = vmul.f32 0.0, %v922
    %v926 = vmul.f32 %v901, %v917
    %v927 = vmul.f32 %v901, %v922
    %v928 = vmul.f32 %v905, %v917
    %v929 = vmul.f32 %v905, %v922
    %v930 = vmul.f32 %v909, %v917
    %v931 = vmul.f32 %v909, %v922
    %v932 = vmul.f32 %v913, %v917
    %v933 = vmul.f32 %v913, %v922
    %v934 = vadd.f32 %v888, %v924
    %v935 = vadd.f32 %v889, %v925
    %v936 = vadd.f32 %v890, %v926
    %v937 = vadd.f32 %v891, %v927
    %v938 = vadd.f32 %v892, %v928
    %v939 = vadd.f32 %v893, %v929
    %v940 = vadd.f32 %v894, %v930
    %v941 = vadd.f32 %v895, %v931
    %v942 = vadd.f32 %v896, %v932
    %v943 = vadd.f32 %v897, %v933
    %v944 = vlaneseq
    %v945 = vshrl.u32 %v944, 7
    %v946 = vsub.s32 2, %v945
    %v947 = vrot.slane %v785, %v946
    %v948 = vlaneseq
    %v949 = vshrl.u32 %v948, 7
    %v950 = vsub.s32 2, %v949
    %v951 = vrot.slane %v786, %v950
    %v952 = vlaneseq
    %v953 = vshrl.u32 %v952, 7
    %v954 = vsub.s32 2, %v953
    %v955 = vrot.slane %v787, %v954
    %v956 = vlaneseq
    %v957 = vshrl.u32 %v956, 7
    %v958 = vsub.s32 2, %v957
    %v959 = vrot.slane %v788, %v958
    %961 = vset.pattern.permute.xlu0 0
    %962 = vperm.xlu0 %961, %v794
    %v963 = vpop.permute.xlu0 %962
    %966 = vset.pattern.permute.xlu0 0
    %967 = vperm.xlu0 %966, %v795
    %v968 = vpop.permute.xlu0 %967
    %v970 = vmul.f32 0.0, %v963
    %v971 = vmul.f32 0.0, %v968
    %v972 = vmul.f32 %v947, %v963
    %v973 = vmul.f32 %v947, %v968
    %v974 = vmul.f32 %v951, %v963
    %v975 = vmul.f32 %v951, %v968
    %v976 = vmul.f32 %v955, %v963
    %v977 = vmul.f32 %v955, %v968
    %v978 = vmul.f32 %v959, %v963
    %v979 = vmul.f32 %v959, %v968
    %v980 = vadd.f32 %v934, %v970
    %v981 = vadd.f32 %v935, %v971
    %v982 = vadd.f32 %v936, %v972
    %v983 = vadd.f32 %v937, %v973
    %v984 = vadd.f32 %v938, %v974
    %v985 = vadd.f32 %v939, %v975
    %v986 = vadd.f32 %v940, %v976
    %v987 = vadd.f32 %v941, %v977
    %v988 = vadd.f32 %v942, %v978
    %v989 = vadd.f32 %v943, %v979
    %v990 = vlaneseq
    %v991 = vshrl.u32 %v990, 7
    %v992 = vsub.s32 3, %v991
    %v993 = vrot.slane %v785, %v992
    %v994 = vlaneseq
    %v995 = vshrl.u32 %v994, 7
    %v996 = vsub.s32 3, %v995
    %v997 = vrot.slane %v786, %v996
    %v998 = vlaneseq
    %v999 = vshrl.u32 %v998, 7
    %v1000 = vsub.s32 3, %v999
    %v1001 = vrot.slane %v787, %v1000
    %v1002 = vlaneseq
    %v1003 = vshrl.u32 %v1002, 7
    %v1004 = vsub.s32 3, %v1003
    %v1005 = vrot.slane %v788, %v1004
    %1007 = vset.pattern.permute.xlu0 0
    %1008 = vperm.xlu0 %1007, %v796
    %v1009 = vpop.permute.xlu0 %1008
    %1012 = vset.pattern.permute.xlu0 0
    %1013 = vperm.xlu0 %1012, %v797
    %v1014 = vpop.permute.xlu0 %1013
    %v1016 = vmul.f32 0.0, %v1009
    %v1017 = vmul.f32 0.0, %v1014
    %v1018 = vmul.f32 %v993, %v1009
    %v1019 = vmul.f32 %v993, %v1014
    %v1020 = vmul.f32 %v997, %v1009
    %v1021 = vmul.f32 %v997, %v1014
    %v1022 = vmul.f32 %v1001, %v1009
    %v1023 = vmul.f32 %v1001, %v1014
    %v1024 = vmul.f32 %v1005, %v1009
    %v1025 = vmul.f32 %v1005, %v1014
    %v1026 = vadd.f32 %v980, %v1016
    %v1027 = vadd.f32 %v981, %v1017
    %v1028 = vadd.f32 %v982, %v1018
    %v1029 = vadd.f32 %v983, %v1019
    %v1030 = vadd.f32 %v984, %v1020
    %v1031 = vadd.f32 %v985, %v1021
    %v1032 = vadd.f32 %v986, %v1022
    %v1033 = vadd.f32 %v987, %v1023
    %v1034 = vadd.f32 %v988, %v1024
    %v1035 = vadd.f32 %v989, %v1025
    %v1036 = vlaneseq
    %v1037 = vshrl.u32 %v1036, 7
    %v1038 = vsub.s32 4, %v1037
    %v1039 = vlaneseq
    %v1040 = vshrl.u32 %v1039, 7
    %v1041 = vsub.s32 4, %v1040
    %v1042 = vrot.slane %v785, %v1041
    %v1043 = vlaneseq
    %v1044 = vshrl.u32 %v1043, 7
    %v1045 = vsub.s32 4, %v1044
    %v1046 = vrot.slane %v786, %v1045
    %v1047 = vlaneseq
    %v1048 = vshrl.u32 %v1047, 7
    %v1049 = vsub.s32 4, %v1048
    %v1050 = vrot.slane %v787, %v1049
    %v1051 = vlaneseq
    %v1052 = vshrl.u32 %v1051, 7
    %v1053 = vsub.s32 4, %v1052
    %v1054 = vrot.slane %v788, %v1053
    %1056 = vset.pattern.permute.xlu0 0
    %1057 = vperm.xlu0 %1056, %v798
    %v1058 = vpop.permute.xlu0 %1057
    %1061 = vset.pattern.permute.xlu0 0
    %1062 = vperm.xlu0 %1061, %v799
    %v1063 = vpop.permute.xlu0 %1062
    %v1065 = vmul.f32 0.0, %v1058
    %v1066 = vmul.f32 0.0, %v1063
    %v1067 = vmul.f32 %v1042, %v1058
    %v1068 = vmul.f32 %v1042, %v1063
    %v1069 = vmul.f32 %v1046, %v1058
    %v1070 = vmul.f32 %v1046, %v1063
    %v1071 = vmul.f32 %v1050, %v1058
    %v1072 = vmul.f32 %v1050, %v1063
    %v1073 = vmul.f32 %v1054, %v1058
    %v1074 = vmul.f32 %v1054, %v1063
    %v1075 = vadd.f32 %v1026, %v1065
    %v1076 = vadd.f32 %v1027, %v1066
    %v1077 = vadd.f32 %v1028, %v1067
    %v1078 = vadd.f32 %v1029, %v1068
    %v1079 = vadd.f32 %v1030, %v1069
    %v1080 = vadd.f32 %v1031, %v1070
    %v1081 = vadd.f32 %v1032, %v1071
    %v1082 = vadd.f32 %v1033, %v1072
    %v1083 = vadd.f32 %v1034, %v1073
    %v1084 = vadd.f32 %v1035, %v1074
    %v1085 = vlaneseq
    %v1086 = vshrl.u32 %v1085, 7
    %v1087 = vsub.s32 5, %v1086
    %v1088 = vlaneseq
    %v1089 = vshrl.u32 %v1088, 7
    %v1090 = vsub.s32 5, %v1089
    %v1091 = vrot.slane %v785, %v1090
    %v1092 = vlaneseq
    %v1093 = vshrl.u32 %v1092, 7
    %v1094 = vsub.s32 5, %v1093
    %v1095 = vrot.slane %v786, %v1094
    %v1096 = vlaneseq
    %v1097 = vshrl.u32 %v1096, 7
    %v1098 = vsub.s32 5, %v1097
    %v1099 = vrot.slane %v787, %v1098
    %v1100 = vlaneseq
    %v1101 = vshrl.u32 %v1100, 7
    %v1102 = vsub.s32 5, %v1101
    %v1103 = vrot.slane %v788, %v1102
    %1105 = vset.pattern.permute.xlu0 0
    %1106 = vperm.xlu0 %1105, %v800
    %v1107 = vpop.permute.xlu0 %1106
    %1110 = vset.pattern.permute.xlu0 0
    %1111 = vperm.xlu0 %1110, %v801
    %v1112 = vpop.permute.xlu0 %1111
    %v1114 = vmul.f32 0.0, %v1107
    %v1115 = vmul.f32 0.0, %v1112
    %v1116 = vmul.f32 %v1091, %v1107
    %v1117 = vmul.f32 %v1091, %v1112
    %v1118 = vmul.f32 %v1095, %v1107
    %v1119 = vmul.f32 %v1095, %v1112
    %v1120 = vmul.f32 %v1099, %v1107
    %v1121 = vmul.f32 %v1099, %v1112
    %v1122 = vmul.f32 %v1103, %v1107
    %v1123 = vmul.f32 %v1103, %v1112
    %v1124 = vadd.f32 %v1075, %v1114
    %v1125 = vadd.f32 %v1076, %v1115
    %v1126 = vadd.f32 %v1077, %v1116
    %v1127 = vadd.f32 %v1078, %v1117
    %v1128 = vadd.f32 %v1079, %v1118
    %v1129 = vadd.f32 %v1080, %v1119
    %v1130 = vadd.f32 %v1081, %v1120
    %v1131 = vadd.f32 %v1082, %v1121
    %v1132 = vadd.f32 %v1083, %v1122
    %v1133 = vadd.f32 %v1084, %v1123
    %v1134 = vlaneseq
    %v1135 = vshrl.u32 %v1134, 7
    %v1136 = vsub.s32 6, %v1135
    %v1137 = vlaneseq
    %v1138 = vshrl.u32 %v1137, 7
    %v1139 = vsub.s32 6, %v1138
    %v1140 = vrot.slane %v785, %v1139
    %v1141 = vlaneseq
    %v1142 = vshrl.u32 %v1141, 7
    %v1143 = vsub.s32 6, %v1142
    %v1144 = vrot.slane %v786, %v1143
    %v1145 = vlaneseq
    %v1146 = vshrl.u32 %v1145, 7
    %v1147 = vsub.s32 6, %v1146
    %v1148 = vrot.slane %v787, %v1147
    %v1149 = vlaneseq
    %v1150 = vshrl.u32 %v1149, 7
    %v1151 = vsub.s32 6, %v1150
    %v1152 = vrot.slane %v788, %v1151
    %1154 = vset.pattern.permute.xlu0 0
    %1155 = vperm.xlu0 %1154, %v802
    %v1156 = vpop.permute.xlu0 %1155
    %1159 = vset.pattern.permute.xlu0 0
    %1160 = vperm.xlu0 %1159, %v803
    %v1161 = vpop.permute.xlu0 %1160
    %v1163 = vmul.f32 0.0, %v1156
    %v1164 = vmul.f32 0.0, %v1161
    %v1165 = vmul.f32 %v1140, %v1156
    %v1166 = vmul.f32 %v1140, %v1161
    %v1167 = vmul.f32 %v1144, %v1156
    %v1168 = vmul.f32 %v1144, %v1161
    %v1169 = vmul.f32 %v1148, %v1156
    %v1170 = vmul.f32 %v1148, %v1161
    %v1171 = vmul.f32 %v1152, %v1156
    %v1172 = vmul.f32 %v1152, %v1161
    %v1173 = vadd.f32 %v1124, %v1163
    %v1174 = vadd.f32 %v1125, %v1164
    %v1175 = vadd.f32 %v1126, %v1165
    %v1176 = vadd.f32 %v1127, %v1166
    %v1177 = vadd.f32 %v1128, %v1167
    %v1178 = vadd.f32 %v1129, %v1168
    %v1179 = vadd.f32 %v1130, %v1169
    %v1180 = vadd.f32 %v1131, %v1170
    %v1181 = vadd.f32 %v1132, %v1171
    %v1182 = vadd.f32 %v1133, %v1172
    %v1183 = vlaneseq
    %v1184 = vshrl.u32 %v1183, 7
    %v1185 = vsub.s32 7, %v1184
    %v1186 = vlaneseq
    %v1187 = vshrl.u32 %v1186, 7
    %v1188 = vsub.s32 7, %v1187
    %v1189 = vrot.slane %v785, %v1188
    %v1190 = vlaneseq
    %v1191 = vshrl.u32 %v1190, 7
    %v1192 = vsub.s32 7, %v1191
    %v1193 = vrot.slane %v786, %v1192
    %v1194 = vlaneseq
    %v1195 = vshrl.u32 %v1194, 7
    %v1196 = vsub.s32 7, %v1195
    %v1197 = vrot.slane %v787, %v1196
    %v1198 = vlaneseq
    %v1199 = vshrl.u32 %v1198, 7
    %v1200 = vsub.s32 7, %v1199
    %v1201 = vrot.slane %v788, %v1200
    %1203 = vset.pattern.permute.xlu0 0
    %1204 = vperm.xlu0 %1203, %v804
    %v1205 = vpop.permute.xlu0 %1204
    %1208 = vset.pattern.permute.xlu0 0
    %1209 = vperm.xlu0 %1208, %v805
    %v1210 = vpop.permute.xlu0 %1209
    %v1212 = vmul.f32 0.0, %v1205
    %v1213 = vmul.f32 0.0, %v1210
    %v1214 = vmul.f32 %v1189, %v1205
    %v1215 = vmul.f32 %v1189, %v1210
    %v1216 = vmul.f32 %v1193, %v1205
    %v1217 = vmul.f32 %v1193, %v1210
    %v1218 = vmul.f32 %v1197, %v1205
    %v1219 = vmul.f32 %v1197, %v1210
    %v1220 = vmul.f32 %v1201, %v1205
    %v1221 = vmul.f32 %v1201, %v1210
    %v1222 = vadd.f32 %v1173, %v1212
    %v1223 = vadd.f32 %v1174, %v1213
    %v1224 = vadd.f32 %v1175, %v1214
    %v1225 = vadd.f32 %v1176, %v1215
    %v1226 = vadd.f32 %v1177, %v1216
    %v1227 = vadd.f32 %v1178, %v1217
    %v1228 = vadd.f32 %v1179, %v1218
    %v1229 = vadd.f32 %v1180, %v1219
    %v1230 = vadd.f32 %v1181, %v1220
    %v1231 = vadd.f32 %v1182, %v1221
    %v1232 = vlaneseq
    %v1233 = vshrl.u32 %v1232, 7
    %v1234 = vsub.s32 0, %v1233
    %v1235 = vrot.slane %v789, %v1234
    %1237 = vset.pattern.permute.xlu0 0
    %1238 = vperm.xlu0 %1237, %v806
    %v1239 = vpop.permute.xlu0 %1238
    %1242 = vset.pattern.permute.xlu0 0
    %1243 = vperm.xlu0 %1242, %v807
    %v1244 = vpop.permute.xlu0 %1243
    %v1246 = vmul.f32 0.0, %v1239
    %v1247 = vmul.f32 0.0, %v1244
    %v1248 = vmul.f32 %v855, %v1239
    %v1249 = vmul.f32 %v855, %v1244
    %v1250 = vmul.f32 %v859, %v1239
    %v1251 = vmul.f32 %v859, %v1244
    %v1252 = vmul.f32 %v863, %v1239
    %v1253 = vmul.f32 %v863, %v1244
    %v1254 = vmul.f32 %v867, %v1239
    %v1255 = vmul.f32 %v867, %v1244
    %v1256 = vmul.f32 %v1235, %v1239
    %v1257 = vmul.f32 %v1235, %v1244
    %v1258 = vadd.f32 %v1222, %v1246
    %v1259 = vadd.f32 %v1223, %v1247
    %v1260 = vadd.f32 %v1222, %v1248
    %v1261 = vadd.f32 %v1223, %v1249
    %v1262 = vadd.f32 %v1224, %v1250
    %v1263 = vadd.f32 %v1225, %v1251
    %v1264 = vadd.f32 %v1226, %v1252
    %v1265 = vadd.f32 %v1227, %v1253
    %v1266 = vadd.f32 %v1228, %v1254
    %v1267 = vadd.f32 %v1229, %v1255
    %v1268 = vadd.f32 %v1230, %v1256
    %v1269 = vadd.f32 %v1231, %v1257
    %v1270 = vlaneseq
    %v1271 = vshrl.u32 %v1270, 7
    %v1272 = vsub.s32 1, %v1271
    %v1273 = vrot.slane %v789, %v1272
    %1275 = vset.pattern.permute.xlu0 0
    %1276 = vperm.xlu0 %1275, %v808
    %v1277 = vpop.permute.xlu0 %1276
    %1280 = vset.pattern.permute.xlu0 0
    %1281 = vperm.xlu0 %1280, %v809
    %v1282 = vpop.permute.xlu0 %1281
    %v1284 = vmul.f32 0.0, %v1277
    %v1285 = vmul.f32 0.0, %v1282
    %v1286 = vmul.f32 %v901, %v1277
    %v1287 = vmul.f32 %v901, %v1282
    %v1288 = vmul.f32 %v905, %v1277
    %v1289 = vmul.f32 %v905, %v1282
    %v1290 = vmul.f32 %v909, %v1277
    %v1291 = vmul.f32 %v909, %v1282
    %v1292 = vmul.f32 %v913, %v1277
    %v1293 = vmul.f32 %v913, %v1282
    %v1294 = vmul.f32 %v1273, %v1277
    %v1295 = vmul.f32 %v1273, %v1282
    %v1296 = vadd.f32 %v1258, %v1284
    %v1297 = vadd.f32 %v1259, %v1285
    %v1298 = vadd.f32 %v1260, %v1286
    %v1299 = vadd.f32 %v1261, %v1287
    %v1300 = vadd.f32 %v1262, %v1288
    %v1301 = vadd.f32 %v1263, %v1289
    %v1302 = vadd.f32 %v1264, %v1290
    %v1303 = vadd.f32 %v1265, %v1291
    %v1304 = vadd.f32 %v1266, %v1292
    %v1305 = vadd.f32 %v1267, %v1293
    %v1306 = vadd.f32 %v1268, %v1294
    %v1307 = vadd.f32 %v1269, %v1295
    %v1308 = vlaneseq
    %v1309 = vshrl.u32 %v1308, 7
    %v1310 = vsub.s32 2, %v1309
    %v1311 = vrot.slane %v789, %v1310
    %1313 = vset.pattern.permute.xlu0 0
    %1314 = vperm.xlu0 %1313, %v810
    %v1315 = vpop.permute.xlu0 %1314
    %1318 = vset.pattern.permute.xlu0 0
    %1319 = vperm.xlu0 %1318, %v811
    %v1320 = vpop.permute.xlu0 %1319
    %v1322 = vmul.f32 0.0, %v1315
    %v1323 = vmul.f32 0.0, %v1320
    %v1324 = vmul.f32 %v947, %v1315
    %v1325 = vmul.f32 %v947, %v1320
    %v1326 = vmul.f32 %v951, %v1315
    %v1327 = vmul.f32 %v951, %v1320
    %v1328 = vmul.f32 %v955, %v1315
    %v1329 = vmul.f32 %v955, %v1320
    %v1330 = vmul.f32 %v959, %v1315
    %v1331 = vmul.f32 %v959, %v1320
    %v1332 = vmul.f32 %v1311, %v1315
    %v1333 = vmul.f32 %v1311, %v1320
    %v1334 = vadd.f32 %v1296, %v1322
    %v1335 = vadd.f32 %v1297, %v1323
    %v1336 = vadd.f32 %v1298, %v1324
    %v1337 = vadd.f32 %v1299, %v1325
    %v1338 = vadd.f32 %v1300, %v1326
    %v1339 = vadd.f32 %v1301, %v1327
    %v1340 = vadd.f32 %v1302, %v1328
    %v1341 = vadd.f32 %v1303, %v1329
    %v1342 = vadd.f32 %v1304, %v1330
    %v1343 = vadd.f32 %v1305, %v1331
    %v1344 = vadd.f32 %v1306, %v1332
    %v1345 = vadd.f32 %v1307, %v1333
    %v1346 = vlaneseq
    %v1347 = vshrl.u32 %v1346, 7
    %v1348 = vsub.s32 3, %v1347
    %v1349 = vrot.slane %v789, %v1348
    %1351 = vset.pattern.permute.xlu0 0
    %1352 = vperm.xlu0 %1351, %v812
    %v1353 = vpop.permute.xlu0 %1352
    %1356 = vset.pattern.permute.xlu0 0
    %1357 = vperm.xlu0 %1356, %v813
    %v1358 = vpop.permute.xlu0 %1357
    %v1360 = vmul.f32 0.0, %v1353
    %v1361 = vmul.f32 0.0, %v1358
    %v1362 = vmul.f32 %v993, %v1353
    %v1363 = vmul.f32 %v993, %v1358
    %v1364 = vmul.f32 %v997, %v1353
    %v1365 = vmul.f32 %v997, %v1358
    %v1366 = vmul.f32 %v1001, %v1353
    %v1367 = vmul.f32 %v1001, %v1358
    %v1368 = vmul.f32 %v1005, %v1353
    %v1369 = vmul.f32 %v1005, %v1358
    %v1370 = vmul.f32 %v1349, %v1353
    %v1371 = vmul.f32 %v1349, %v1358
    %v1372 = vadd.f32 %v1334, %v1360
    %v1373 = vadd.f32 %v1335, %v1361
    %v1374 = vadd.f32 %v1336, %v1362
    %v1375 = vadd.f32 %v1337, %v1363
    %v1376 = vadd.f32 %v1338, %v1364
    %v1377 = vadd.f32 %v1339, %v1365
    %v1378 = vadd.f32 %v1340, %v1366
    %v1379 = vadd.f32 %v1341, %v1367
    %v1380 = vadd.f32 %v1342, %v1368
    %v1381 = vadd.f32 %v1343, %v1369
    %v1382 = vadd.f32 %v1344, %v1370
    %v1383 = vadd.f32 %v1345, %v1371
    %v1384 = vlaneseq
    %v1385 = vshrl.u32 %v1384, 7
    %v1386 = vsub.s32 4, %v1385
    %v1387 = vrot.slane %v789, %v1386
    %1389 = vset.pattern.permute.xlu0 0
    %1390 = vperm.xlu0 %1389, %v814
    %v1391 = vpop.permute.xlu0 %1390
    %1394 = vset.pattern.permute.xlu0 0
    %1395 = vperm.xlu0 %1394, %v815
    %v1396 = vpop.permute.xlu0 %1395
    %v1398 = vmul.f32 0.0, %v1391
    %v1399 = vmul.f32 0.0, %v1396
    %v1400 = vmul.f32 %v1042, %v1391
    %v1401 = vmul.f32 %v1042, %v1396
    %v1402 = vmul.f32 %v1046, %v1391
    %v1403 = vmul.f32 %v1046, %v1396
    %v1404 = vmul.f32 %v1050, %v1391
    %v1405 = vmul.f32 %v1050, %v1396
    %v1406 = vmul.f32 %v1054, %v1391
    %v1407 = vmul.f32 %v1054, %v1396
    %v1408 = vmul.f32 %v1387, %v1391
    %v1409 = vmul.f32 %v1387, %v1396
    %v1410 = vadd.f32 %v1372, %v1398
    %v1411 = vadd.f32 %v1373, %v1399
    %v1412 = vadd.f32 %v1374, %v1400
    %v1413 = vadd.f32 %v1375, %v1401
    %v1414 = vadd.f32 %v1376, %v1402
    %v1415 = vadd.f32 %v1377, %v1403
    %v1416 = vadd.f32 %v1378, %v1404
    %v1417 = vadd.f32 %v1379, %v1405
    %v1418 = vadd.f32 %v1380, %v1406
    %v1419 = vadd.f32 %v1381, %v1407
    %v1420 = vadd.f32 %v1382, %v1408
    %v1421 = vadd.f32 %v1383, %v1409
    %v1422 = vlaneseq
    %v1423 = vshrl.u32 %v1422, 7
    %v1424 = vsub.s32 5, %v1423
    %v1425 = vrot.slane %v789, %v1424
    %1427 = vset.pattern.permute.xlu0 0
    %1428 = vperm.xlu0 %1427, %v816
    %v1429 = vpop.permute.xlu0 %1428
    %1432 = vset.pattern.permute.xlu0 0
    %1433 = vperm.xlu0 %1432, %v817
    %v1434 = vpop.permute.xlu0 %1433
    %v1436 = vmul.f32 0.0, %v1429
    %v1437 = vmul.f32 0.0, %v1434
    %v1438 = vmul.f32 %v1091, %v1429
    %v1439 = vmul.f32 %v1091, %v1434
    %v1440 = vmul.f32 %v1095, %v1429
    %v1441 = vmul.f32 %v1095, %v1434
    %v1442 = vmul.f32 %v1099, %v1429
    %v1443 = vmul.f32 %v1099, %v1434
    %v1444 = vmul.f32 %v1103, %v1429
    %v1445 = vmul.f32 %v1103, %v1434
    %v1446 = vmul.f32 %v1425, %v1429
    %v1447 = vmul.f32 %v1425, %v1434
    %v1448 = vadd.f32 %v1410, %v1436
    %v1449 = vadd.f32 %v1411, %v1437
    %v1450 = vadd.f32 %v1412, %v1438
    %v1451 = vadd.f32 %v1413, %v1439
    %v1452 = vadd.f32 %v1414, %v1440
    %v1453 = vadd.f32 %v1415, %v1441
    %v1454 = vadd.f32 %v1416, %v1442
    %v1455 = vadd.f32 %v1417, %v1443
    %v1456 = vadd.f32 %v1418, %v1444
    %v1457 = vadd.f32 %v1419, %v1445
    %v1458 = vadd.f32 %v1420, %v1446
    %v1459 = vadd.f32 %v1421, %v1447
    %v1460 = vlaneseq
    %v1461 = vshrl.u32 %v1460, 7
    %v1462 = vsub.s32 6, %v1461
    %v1463 = vrot.slane %v789, %v1462
    %1465 = vset.pattern.permute.xlu0 0
    %1466 = vperm.xlu0 %1465, %v818
    %v1467 = vpop.permute.xlu0 %1466
    %1470 = vset.pattern.permute.xlu0 0
    %1471 = vperm.xlu0 %1470, %v819
    %v1472 = vpop.permute.xlu0 %1471
    %v1474 = vmul.f32 0.0, %v1467
    %v1475 = vmul.f32 0.0, %v1472
    %v1476 = vmul.f32 %v1140, %v1467
    %v1477 = vmul.f32 %v1140, %v1472
    %v1478 = vmul.f32 %v1144, %v1467
    %v1479 = vmul.f32 %v1144, %v1472
    %v1480 = vmul.f32 %v1148, %v1467
    %v1481 = vmul.f32 %v1148, %v1472
    %v1482 = vmul.f32 %v1152, %v1467
    %v1483 = vmul.f32 %v1152, %v1472
    %v1484 = vmul.f32 %v1463, %v1467
    %v1485 = vmul.f32 %v1463, %v1472
    %v1486 = vadd.f32 %v1448, %v1474
    %v1487 = vadd.f32 %v1449, %v1475
    %v1488 = vadd.f32 %v1450, %v1476
    %v1489 = vadd.f32 %v1451, %v1477
    %v1490 = vadd.f32 %v1452, %v1478
    %v1491 = vadd.f32 %v1453, %v1479
    %v1492 = vadd.f32 %v1454, %v1480
    %v1493 = vadd.f32 %v1455, %v1481
    %v1494 = vadd.f32 %v1456, %v1482
    %v1495 = vadd.f32 %v1457, %v1483
    %v1496 = vadd.f32 %v1458, %v1484
    %v1497 = vadd.f32 %v1459, %v1485
    %v1498 = vlaneseq
    %v1499 = vshrl.u32 %v1498, 7
    %v1500 = vsub.s32 7, %v1499
    %v1501 = vrot.slane %v789, %v1500
    %1503 = vset.pattern.permute.xlu0 0
    %1504 = vperm.xlu0 %1503, %v820
    %v1505 = vpop.permute.xlu0 %1504
    %1508 = vset.pattern.permute.xlu0 0
    %1509 = vperm.xlu0 %1508, %v821
    %v1510 = vpop.permute.xlu0 %1509
    %v1512 = vmul.f32 0.0, %v1505
    %v1513 = vmul.f32 0.0, %v1510
    %v1514 = vmul.f32 %v1189, %v1505
    %v1515 = vmul.f32 %v1189, %v1510
    %v1516 = vmul.f32 %v1193, %v1505
    %v1517 = vmul.f32 %v1193, %v1510
    %v1518 = vmul.f32 %v1197, %v1505
    %v1519 = vmul.f32 %v1197, %v1510
    %v1520 = vmul.f32 %v1201, %v1505
    %v1521 = vmul.f32 %v1201, %v1510
    %v1522 = vmul.f32 %v1501, %v1505
    %v1523 = vmul.f32 %v1501, %v1510
    %v1524 = vadd.f32 %v1486, %v1512
    %v1525 = vadd.f32 %v1487, %v1513
    %v1526 = vadd.f32 %v1488, %v1514
    %v1527 = vadd.f32 %v1489, %v1515
    %v1528 = vadd.f32 %v1490, %v1516
    %v1529 = vadd.f32 %v1491, %v1517
    %v1530 = vadd.f32 %v1492, %v1518
    %v1531 = vadd.f32 %v1493, %v1519
    %v1532 = vadd.f32 %v1494, %v1520
    %v1533 = vadd.f32 %v1495, %v1521
    %v1534 = vadd.f32 %v1496, %v1522
    %v1535 = vadd.f32 %v1497, %v1523
    %1537 = vset.pattern.permute.xlu0 0
    %1538 = vperm.xlu0 %1537, %v822
    %v1539 = vpop.permute.xlu0 %1538
    %1542 = vset.pattern.permute.xlu0 0
    %1543 = vperm.xlu0 %1542, %v823
    %v1544 = vpop.permute.xlu0 %1543
    %v1546 = vmul.f32 %v855, %v1539
    %v1547 = vmul.f32 %v855, %v1544
    %v1548 = vmul.f32 %v859, %v1539
    %v1549 = vmul.f32 %v859, %v1544
    %v1550 = vmul.f32 %v863, %v1539
    %v1551 = vmul.f32 %v863, %v1544
    %v1552 = vmul.f32 %v867, %v1539
    %v1553 = vmul.f32 %v867, %v1544
    %v1554 = vmul.f32 %v1235, %v1539
    %v1555 = vmul.f32 %v1235, %v1544
    %v1556 = vmul.f32 0.0, %v1539
    %v1557 = vmul.f32 0.0, %v1544
    %v1558 = vadd.f32 %v1524, %v1546
    %v1559 = vadd.f32 %v1525, %v1547
    %v1560 = vadd.f32 %v1526, %v1548
    %v1561 = vadd.f32 %v1527, %v1549
    %v1562 = vadd.f32 %v1528, %v1550
    %v1563 = vadd.f32 %v1529, %v1551
    %v1564 = vadd.f32 %v1530, %v1552
    %v1565 = vadd.f32 %v1531, %v1553
    %v1566 = vadd.f32 %v1532, %v1554
    %v1567 = vadd.f32 %v1533, %v1555
    %v1568 = vadd.f32 %v1534, %v1556
    %v1569 = vadd.f32 %v1535, %v1557
    %1571 = vset.pattern.permute.xlu0 0
    %1572 = vperm.xlu0 %1571, %v824
    %v1573 = vpop.permute.xlu0 %1572
    %1576 = vset.pattern.permute.xlu0 0
    %1577 = vperm.xlu0 %1576, %v825
    %v1578 = vpop.permute.xlu0 %1577
    %v1580 = vmul.f32 %v901, %v1573
    %v1581 = vmul.f32 %v901, %v1578
    %v1582 = vmul.f32 %v905, %v1573
    %v1583 = vmul.f32 %v905, %v1578
    %v1584 = vmul.f32 %v909, %v1573
    %v1585 = vmul.f32 %v909, %v1578
    %v1586 = vmul.f32 %v913, %v1573
    %v1587 = vmul.f32 %v913, %v1578
    %v1588 = vmul.f32 %v1273, %v1573
    %v1589 = vmul.f32 %v1273, %v1578
    %v1590 = vmul.f32 0.0, %v1573
    %v1591 = vmul.f32 0.0, %v1578
    %v1592 = vadd.f32 %v1558, %v1580
    %v1593 = vadd.f32 %v1559, %v1581
    %v1594 = vadd.f32 %v1560, %v1582
    %v1595 = vadd.f32 %v1561, %v1583
    %v1596 = vadd.f32 %v1562, %v1584
    %v1597 = vadd.f32 %v1563, %v1585
    %v1598 = vadd.f32 %v1564, %v1586
    %v1599 = vadd.f32 %v1565, %v1587
    %v1600 = vadd.f32 %v1566, %v1588
    %v1601 = vadd.f32 %v1567, %v1589
    %v1602 = vadd.f32 %v1568, %v1590
    %v1603 = vadd.f32 %v1569, %v1591
    %1605 = vset.pattern.permute.xlu0 0
    %1606 = vperm.xlu0 %1605, %v826
    %v1607 = vpop.permute.xlu0 %1606
    %1610 = vset.pattern.permute.xlu0 0
    %1611 = vperm.xlu0 %1610, %v827
    %v1612 = vpop.permute.xlu0 %1611
    %v1614 = vmul.f32 %v947, %v1607
    %v1615 = vmul.f32 %v947, %v1612
    %v1616 = vmul.f32 %v951, %v1607
    %v1617 = vmul.f32 %v951, %v1612
    %v1618 = vmul.f32 %v955, %v1607
    %v1619 = vmul.f32 %v955, %v1612
    %v1620 = vmul.f32 %v959, %v1607
    %v1621 = vmul.f32 %v959, %v1612
    %v1622 = vmul.f32 %v1311, %v1607
    %v1623 = vmul.f32 %v1311, %v1612
    %v1624 = vmul.f32 0.0, %v1607
    %v1625 = vmul.f32 0.0, %v1612
    %v1626 = vadd.f32 %v1592, %v1614
    %v1627 = vadd.f32 %v1593, %v1615
    %v1628 = vadd.f32 %v1594, %v1616
    %v1629 = vadd.f32 %v1595, %v1617
    %v1630 = vadd.f32 %v1596, %v1618
    %v1631 = vadd.f32 %v1597, %v1619
    %v1632 = vadd.f32 %v1598, %v1620
    %v1633 = vadd.f32 %v1599, %v1621
    %v1634 = vadd.f32 %v1600, %v1622
    %v1635 = vadd.f32 %v1601, %v1623
    %v1636 = vadd.f32 %v1602, %v1624
    %v1637 = vadd.f32 %v1603, %v1625
    %1639 = vset.pattern.permute.xlu0 0
    %1640 = vperm.xlu0 %1639, %v828
    %v1641 = vpop.permute.xlu0 %1640
    %1644 = vset.pattern.permute.xlu0 0
    %1645 = vperm.xlu0 %1644, %v829
    %v1646 = vpop.permute.xlu0 %1645
    %v1648 = vmul.f32 %v993, %v1641
    %v1649 = vmul.f32 %v993, %v1646
    %v1650 = vmul.f32 %v997, %v1641
    %v1651 = vmul.f32 %v997, %v1646
    %v1652 = vmul.f32 %v1001, %v1641
    %v1653 = vmul.f32 %v1001, %v1646
    %v1654 = vmul.f32 %v1005, %v1641
    %v1655 = vmul.f32 %v1005, %v1646
    %v1656 = vmul.f32 %v1349, %v1641
    %v1657 = vmul.f32 %v1349, %v1646
    %v1658 = vmul.f32 0.0, %v1641
    %v1659 = vmul.f32 0.0, %v1646
    %v1660 = vadd.f32 %v1626, %v1648
    %v1661 = vadd.f32 %v1627, %v1649
    %v1662 = vadd.f32 %v1628, %v1650
    %v1663 = vadd.f32 %v1629, %v1651
    %v1664 = vadd.f32 %v1630, %v1652
    %v1665 = vadd.f32 %v1631, %v1653
    %v1666 = vadd.f32 %v1632, %v1654
    %v1667 = vadd.f32 %v1633, %v1655
    %v1668 = vadd.f32 %v1634, %v1656
    %v1669 = vadd.f32 %v1635, %v1657
    %v1670 = vadd.f32 %v1636, %v1658
    %v1671 = vadd.f32 %v1637, %v1659
    %1673 = vset.pattern.permute.xlu0 0
    %1674 = vperm.xlu0 %1673, %v830
    %v1675 = vpop.permute.xlu0 %1674
    %1678 = vset.pattern.permute.xlu0 0
    %1679 = vperm.xlu0 %1678, %v831
    %v1680 = vpop.permute.xlu0 %1679
    %v1682 = vmul.f32 %v1042, %v1675
    %v1683 = vmul.f32 %v1042, %v1680
    %v1684 = vmul.f32 %v1046, %v1675
    %v1685 = vmul.f32 %v1046, %v1680
    %v1686 = vmul.f32 %v1050, %v1675
    %v1687 = vmul.f32 %v1050, %v1680
    %v1688 = vmul.f32 %v1054, %v1675
    %v1689 = vmul.f32 %v1054, %v1680
    %v1690 = vmul.f32 %v1387, %v1675
    %v1691 = vmul.f32 %v1387, %v1680
    %v1692 = vmul.f32 0.0, %v1675
    %v1693 = vmul.f32 0.0, %v1680
    %v1694 = vadd.f32 %v1660, %v1682
    %v1695 = vadd.f32 %v1661, %v1683
    %v1696 = vadd.f32 %v1662, %v1684
    %v1697 = vadd.f32 %v1663, %v1685
    %v1698 = vadd.f32 %v1664, %v1686
    %v1699 = vadd.f32 %v1665, %v1687
    %v1700 = vadd.f32 %v1666, %v1688
    %v1701 = vadd.f32 %v1667, %v1689
    %v1702 = vadd.f32 %v1668, %v1690
    %v1703 = vadd.f32 %v1669, %v1691
    %v1704 = vadd.f32 %v1670, %v1692
    %v1705 = vadd.f32 %v1671, %v1693
    %1707 = vset.pattern.permute.xlu0 0
    %1708 = vperm.xlu0 %1707, %v832
    %v1709 = vpop.permute.xlu0 %1708
    %1712 = vset.pattern.permute.xlu0 0
    %1713 = vperm.xlu0 %1712, %v833
    %v1714 = vpop.permute.xlu0 %1713
    %v1716 = vmul.f32 %v1091, %v1709
    %v1717 = vmul.f32 %v1091, %v1714
    %v1718 = vmul.f32 %v1095, %v1709
    %v1719 = vmul.f32 %v1095, %v1714
    %v1720 = vmul.f32 %v1099, %v1709
    %v1721 = vmul.f32 %v1099, %v1714
    %v1722 = vmul.f32 %v1103, %v1709
    %v1723 = vmul.f32 %v1103, %v1714
    %v1724 = vmul.f32 %v1425, %v1709
    %v1725 = vmul.f32 %v1425, %v1714
    %v1726 = vmul.f32 0.0, %v1709
    %v1727 = vmul.f32 0.0, %v1714
    %v1728 = vadd.f32 %v1694, %v1716
    %v1729 = vadd.f32 %v1695, %v1717
    %v1730 = vadd.f32 %v1696, %v1718
    %v1731 = vadd.f32 %v1697, %v1719
    %v1732 = vadd.f32 %v1698, %v1720
    %v1733 = vadd.f32 %v1699, %v1721
    %v1734 = vadd.f32 %v1700, %v1722
    %v1735 = vadd.f32 %v1701, %v1723
    %v1736 = vadd.f32 %v1702, %v1724
    %v1737 = vadd.f32 %v1703, %v1725
    %v1738 = vadd.f32 %v1704, %v1726
    %v1739 = vadd.f32 %v1705, %v1727
    %1741 = vset.pattern.permute.xlu0 0
    %1742 = vperm.xlu0 %1741, %v834
    %v1743 = vpop.permute.xlu0 %1742
    %1746 = vset.pattern.permute.xlu0 0
    %1747 = vperm.xlu0 %1746, %v835
    %v1748 = vpop.permute.xlu0 %1747
    %v1750 = vmul.f32 %v1140, %v1743
    %v1751 = vmul.f32 %v1140, %v1748
    %v1752 = vmul.f32 %v1144, %v1743
    %v1753 = vmul.f32 %v1144, %v1748
    %v1754 = vmul.f32 %v1148, %v1743
    %v1755 = vmul.f32 %v1148, %v1748
    %v1756 = vmul.f32 %v1152, %v1743
    %v1757 = vmul.f32 %v1152, %v1748
    %v1758 = vmul.f32 %v1463, %v1743
    %v1759 = vmul.f32 %v1463, %v1748
    %v1760 = vmul.f32 0.0, %v1743
    %v1761 = vmul.f32 0.0, %v1748
    %v1762 = vadd.f32 %v1728, %v1750
    %v1763 = vadd.f32 %v1729, %v1751
    %v1764 = vadd.f32 %v1730, %v1752
    %v1765 = vadd.f32 %v1731, %v1753
    %v1766 = vadd.f32 %v1732, %v1754
    %v1767 = vadd.f32 %v1733, %v1755
    %v1768 = vadd.f32 %v1734, %v1756
    %v1769 = vadd.f32 %v1735, %v1757
    %v1770 = vadd.f32 %v1736, %v1758
    %v1771 = vadd.f32 %v1737, %v1759
    %v1772 = vadd.f32 %v1738, %v1760
    %v1773 = vadd.f32 %v1739, %v1761
    %1775 = vset.pattern.permute.xlu0 0
    %1776 = vperm.xlu0 %1775, %v836
    %v1777 = vpop.permute.xlu0 %1776
    %1780 = vset.pattern.permute.xlu0 0
    %1781 = vperm.xlu0 %1780, %v837
    %v1782 = vpop.permute.xlu0 %1781
    %v1784 = vmul.f32 %v1189, %v1777
    %v1785 = vmul.f32 %v1189, %v1782
    %v1786 = vmul.f32 %v1193, %v1777
    %v1787 = vmul.f32 %v1193, %v1782
    %v1788 = vmul.f32 %v1197, %v1777
    %v1789 = vmul.f32 %v1197, %v1782
    %v1790 = vmul.f32 %v1201, %v1777
    %v1791 = vmul.f32 %v1201, %v1782
    %v1792 = vmul.f32 %v1501, %v1777
    %v1793 = vmul.f32 %v1501, %v1782
    %v1794 = vmul.f32 0.0, %v1777
    %v1795 = vmul.f32 0.0, %v1782
    %v1796 = vadd.f32 %v1762, %v1784
    %v1797 = vadd.f32 %v1763, %v1785
    %v1798 = vadd.f32 %v1764, %v1786
    %v1799 = vadd.f32 %v1765, %v1787
    %v1800 = vadd.f32 %v1766, %v1788
    %v1801 = vadd.f32 %v1767, %v1789
    %v1802 = vadd.f32 %v1768, %v1790
    %v1803 = vadd.f32 %v1769, %v1791
    %v1804 = vadd.f32 %v1770, %v1792
    %v1805 = vadd.f32 %v1771, %v1793
    %v1806 = vadd.f32 %v1772, %v1794
    %v1807 = vadd.f32 %v1773, %v1795
    %v1808 = vmax.f32 %v1796, 0.0
    %v1809 = vmax.f32 %v1797, 0.0
    %v1810 = vmax.f32 %v1798, 0.0
    %v1811 = vmax.f32 %v1799, 0.0
    %v1812 = vmax.f32 %v1800, 0.0
    %v1813 = vmax.f32 %v1801, 0.0
    %v1814 = vmax.f32 %v1802, 0.0
    %v1815 = vmax.f32 %v1803, 0.0
    %v1816 = vmax.f32 %v1804, 0.0
    %v1817 = vmax.f32 %v1805, 0.0
    %v1818 = vmax.f32 %v1806, 0.0
    %v1819 = vmax.f32 %v1807, 0.0
    %v1820 = vmax.f32 %v1808, %v1810
    %vm1821 = vcmask 1041408
    %v1822 = vsel %vm1821, %v1809, -inf
    %v1823 = vsel %vm1821, %v1811, -inf
    %v1824 = vmax.f32 %v1822, %v1823
    %v1825 = vmax.f32 %v1812, %v1814
    %v1826 = vsel %vm1821, %v1813, -inf
    %v1827 = vsel %vm1821, %v1815, -inf
    %v1828 = vmax.f32 %v1826, %v1827
    %v1829 = vmax.f32 %v1816, %v1818
    %v1830 = vsel %vm1821, %v1817, -inf
    %v1831 = vsel %vm1821, %v1819, -inf
    %v1832 = vmax.f32 %v1830, %v1831
    %v1833 = vld [vmem:[%s7] sm:$0xff]
    %v1834 = vld [vmem:[%s7 + $0x8] sm:$0xff]
    %v1835 = vld [vmem:[%s7 + $0x10] sm:$0xff]
    %v1836 = vld [vmem:[%s7 + $0x18] sm:$0xff]
    %v1837 = vld [vmem:[%s7 + $0x20] sm:$0xff]
    %v1838 = vld [vmem:[%s7 + $0x28] sm:$0xff]
    %v1839 = vld [vmem:[%s7 + $0x30] sm:$0xff]
    %v1840 = vld [vmem:[%s7 + $0x38] sm:$0xff]
    %v1841 = vld [vmem:[%s7 + $0x40] sm:$0xff]
    %v1842 = vld [vmem:[%s7 + $0x48] sm:$0xff]
    %v1843 = vld [vmem:[%s7 + $0x50] sm:$0xff]
    %v1844 = vld [vmem:[%s7 + $0x58] sm:$0xff]
    %v1845 = vld [vmem:[%s7 + $0x60] sm:$0xff]
    %v1846 = vld [vmem:[%s7 + $0x68] sm:$0xff]
    %v1847 = vld [vmem:[%s7 + $0x70] sm:$0xff]
    %v1848 = vld [vmem:[%s7 + $0x78] sm:$0xff]
    %v1849 = vld [vmem:[%s7 + $0x80] sm:$0xff]
    %v1850 = vld [vmem:[%s7 + $0x88] sm:$0xff]
    %v1851 = vld [vmem:[%s7 + $0x90] sm:$0xff]
    %v1852 = vld [vmem:[%s7 + $0x98] sm:$0xff]
    %v1853 = vld [vmem:[%s7 + $0xa0] sm:$0xff]
    %v1854 = vld [vmem:[%s7 + $0xa8] sm:$0xff]
    %v1855 = vld [vmem:[%s7 + $0xb0] sm:$0xff]
    %v1856 = vld [vmem:[%s7 + $0xb8] sm:$0xff]
    %v1857 = vld [vmem:[%s7 + $0xc0] sm:$0xff]
    %v1858 = vld [vmem:[%s7 + $0xc8] sm:$0xff]
    %v1859 = vld [vmem:[%s7 + $0xd0] sm:$0xff]
    %v1860 = vld [vmem:[%s7 + $0xd8] sm:$0xff]
    %v1861 = vld [vmem:[%s7 + $0xe0] sm:$0xff]
    %v1862 = vld [vmem:[%s7 + $0xe8] sm:$0xff]
    %v1863 = vld [vmem:[%s8] sm:$0xff]
    %1865 = vset.pattern.permute.xlu0 0
    %1866 = vperm.xlu0 %1865, %v1863
    %v1867 = vpop.permute.xlu0 %1866
    %v1869 = vadd.f32 %v1867, 0.0
    %v1870 = vlaneseq
    %v1871 = vshrl.u32 %v1870, 7
    %v1872 = vsub.s32 0, %v1871
    %v1873 = vrot.slane %v1820, %v1872
    %v1874 = vlaneseq
    %v1875 = vshrl.u32 %v1874, 7
    %v1876 = vsub.s32 0, %v1875
    %v1877 = vrot.slane %v1825, %v1876
    %1879 = vset.pattern.permute.xlu0 0
    %1880 = vperm.xlu0 %1879, %v1833
    %v1881 = vpop.permute.xlu0 %1880
    %v1883 = vmul.f32 0.0, %v1881
    %v1884 = vmul.f32 %v1873, %v1881
    %v1885 = vmul.f32 %v1877, %v1881
    %v1886 = vadd.f32 %v1869, %v1883
    %v1887 = vadd.f32 %v1869, %v1884
    %v1888 = vadd.f32 %v1869, %v1885
    %v1889 = vlaneseq
    %v1890 = vshrl.u32 %v1889, 7
    %v1891 = vsub.s32 1, %v1890
    %v1892 = vrot.slane %v1820, %v1891
    %v1893 = vlaneseq
    %v1894 = vshrl.u32 %v1893, 7
    %v1895 = vsub.s32 1, %v1894
    %v1896 = vrot.slane %v1825, %v1895
    %1898 = vset.pattern.permute.xlu0 0
    %1899 = vperm.xlu0 %1898, %v1834
    %v1900 = vpop.permute.xlu0 %1899
    %v1902 = vmul.f32 0.0, %v1900
    %v1903 = vmul.f32 %v1892, %v1900
    %v1904 = vmul.f32 %v1896, %v1900
    %v1905 = vadd.f32 %v1886, %v1902
    %v1906 = vadd.f32 %v1887, %v1903
    %v1907 = vadd.f32 %v1888, %v1904
    %v1908 = vlaneseq
    %v1909 = vshrl.u32 %v1908, 7
    %v1910 = vsub.s32 2, %v1909
    %v1911 = vrot.slane %v1820, %v1910
    %v1912 = vlaneseq
    %v1913 = vshrl.u32 %v1912, 7
    %v1914 = vsub.s32 2, %v1913
    %v1915 = vrot.slane %v1825, %v1914
    %1917 = vset.pattern.permute.xlu0 0
    %1918 = vperm.xlu0 %1917, %v1835
    %v1919 = vpop.permute.xlu0 %1918
    %v1921 = vmul.f32 0.0, %v1919
    %v1922 = vmul.f32 %v1911, %v1919
    %v1923 = vmul.f32 %v1915, %v1919
    %v1924 = vadd.f32 %v1905, %v1921
    %v1925 = vadd.f32 %v1906, %v1922
    %v1926 = vadd.f32 %v1907, %v1923
    %v1927 = vlaneseq
    %v1928 = vshrl.u32 %v1927, 7
    %v1929 = vsub.s32 3, %v1928
    %v1930 = vrot.slane %v1820, %v1929
    %v1931 = vlaneseq
    %v1932 = vshrl.u32 %v1931, 7
    %v1933 = vsub.s32 3, %v1932
    %v1934 = vrot.slane %v1825, %v1933
    %1936 = vset.pattern.permute.xlu0 0
    %1937 = vperm.xlu0 %1936, %v1836
    %v1938 = vpop.permute.xlu0 %1937
    %v1940 = vmul.f32 0.0, %v1938
    %v1941 = vmul.f32 %v1930, %v1938
    %v1942 = vmul.f32 %v1934, %v1938
    %v1943 = vadd.f32 %v1924, %v1940
    %v1944 = vadd.f32 %v1925, %v1941
    %v1945 = vadd.f32 %v1926, %v1942
    %v1946 = vlaneseq
    %v1947 = vshrl.u32 %v1946, 7
    %v1948 = vsub.s32 4, %v1947
    %v1949 = vrot.slane %v1820, %v1948
    %v1950 = vlaneseq
    %v1951 = vshrl.u32 %v1950, 7
    %v1952 = vsub.s32 4, %v1951
    %v1953 = vrot.slane %v1825, %v1952
    %1955 = vset.pattern.permute.xlu0 0
    %1956 = vperm.xlu0 %1955, %v1837
    %v1957 = vpop.permute.xlu0 %1956
    %v1959 = vmul.f32 0.0, %v1957
    %v1960 = vmul.f32 %v1949, %v1957
    %v1961 = vmul.f32 %v1953, %v1957
    %v1962 = vadd.f32 %v1943, %v1959
    %v1963 = vadd.f32 %v1944, %v1960
    %v1964 = vadd.f32 %v1945, %v1961
    %v1965 = vlaneseq
    %v1966 = vshrl.u32 %v1965, 7
    %v1967 = vsub.s32 5, %v1966
    %v1968 = vrot.slane %v1820, %v1967
    %v1969 = vlaneseq
    %v1970 = vshrl.u32 %v1969, 7
    %v1971 = vsub.s32 5, %v1970
    %v1972 = vrot.slane %v1825, %v1971
    %1974 = vset.pattern.permute.xlu0 0
    %1975 = vperm.xlu0 %1974, %v1838
    %v1976 = vpop.permute.xlu0 %1975
    %v1978 = vmul.f32 0.0, %v1976
    %v1979 = vmul.f32 %v1968, %v1976
    %v1980 = vmul.f32 %v1972, %v1976
    %v1981 = vadd.f32 %v1962, %v1978
    %v1982 = vadd.f32 %v1963, %v1979
    %v1983 = vadd.f32 %v1964, %v1980
    %v1984 = vlaneseq
    %v1985 = vshrl.u32 %v1984, 7
    %v1986 = vsub.s32 6, %v1985
    %v1987 = vrot.slane %v1820, %v1986
    %v1988 = vlaneseq
    %v1989 = vshrl.u32 %v1988, 7
    %v1990 = vsub.s32 6, %v1989
    %v1991 = vrot.slane %v1825, %v1990
    %1993 = vset.pattern.permute.xlu0 0
    %1994 = vperm.xlu0 %1993, %v1839
    %v1995 = vpop.permute.xlu0 %1994
    %v1997 = vmul.f32 0.0, %v1995
    %v1998 = vmul.f32 %v1987, %v1995
    %v1999 = vmul.f32 %v1991, %v1995
    %v2000 = vadd.f32 %v1981, %v1997
    %v2001 = vadd.f32 %v1982, %v1998
    %v2002 = vadd.f32 %v1983, %v1999
    %v2003 = vlaneseq
    %v2004 = vshrl.u32 %v2003, 7
    %v2005 = vsub.s32 7, %v2004
    %v2006 = vrot.slane %v1820, %v2005
    %v2007 = vlaneseq
    %v2008 = vshrl.u32 %v2007, 7
    %v2009 = vsub.s32 7, %v2008
    %v2010 = vrot.slane %v1825, %v2009
    %2012 = vset.pattern.permute.xlu0 0
    %2013 = vperm.xlu0 %2012, %v1840
    %v2014 = vpop.permute.xlu0 %2013
    %v2016 = vmul.f32 0.0, %v2014
    %v2017 = vmul.f32 %v2006, %v2014
    %v2018 = vmul.f32 %v2010, %v2014
    %v2019 = vadd.f32 %v2000, %v2016
    %v2020 = vadd.f32 %v2001, %v2017
    %v2021 = vadd.f32 %v2002, %v2018
    %v2022 = vlaneseq
    %v2023 = vshrl.u32 %v2022, 7
    %v2024 = vsub.s32 0, %v2023
    %v2025 = vrot.slane %v1824, %v2024
    %v2026 = vlaneseq
    %v2027 = vshrl.u32 %v2026, 7
    %v2028 = vsub.s32 0, %v2027
    %v2029 = vrot.slane %v1828, %v2028
    %2031 = vset.pattern.permute.xlu0 0
    %2032 = vperm.xlu0 %2031, %v1841
    %v2033 = vpop.permute.xlu0 %2032
    %v2035 = vmul.f32 0.0, %v2033
    %v2036 = vmul.f32 %v2025, %v2033
    %v2037 = vmul.f32 %v2029, %v2033
    %v2038 = vadd.f32 %v2019, %v2035
    %v2039 = vadd.f32 %v2020, %v2036
    %v2040 = vadd.f32 %v2021, %v2037
    %v2041 = vlaneseq
    %v2042 = vshrl.u32 %v2041, 7
    %v2043 = vsub.s32 1, %v2042
    %v2044 = vrot.slane %v1824, %v2043
    %v2045 = vlaneseq
    %v2046 = vshrl.u32 %v2045, 7
    %v2047 = vsub.s32 1, %v2046
    %v2048 = vrot.slane %v1828, %v2047
    %2050 = vset.pattern.permute.xlu0 0
    %2051 = vperm.xlu0 %2050, %v1842
    %v2052 = vpop.permute.xlu0 %2051
    %v2054 = vmul.f32 0.0, %v2052
    %v2055 = vmul.f32 %v2044, %v2052
    %v2056 = vmul.f32 %v2048, %v2052
    %v2057 = vadd.f32 %v2038, %v2054
    %v2058 = vadd.f32 %v2039, %v2055
    %v2059 = vadd.f32 %v2040, %v2056
    %v2060 = vlaneseq
    %v2061 = vshrl.u32 %v2060, 7
    %v2062 = vsub.s32 0, %v2061
    %v2063 = vrot.slane %v1829, %v2062
    %2065 = vset.pattern.permute.xlu0 0
    %2066 = vperm.xlu0 %2065, %v1843
    %v2067 = vpop.permute.xlu0 %2066
    %v2069 = vmul.f32 0.0, %v2067
    %v2070 = vmul.f32 %v1873, %v2067
    %v2071 = vmul.f32 %v1877, %v2067
    %v2072 = vmul.f32 %v2063, %v2067
    %v2073 = vadd.f32 %v2057, %v2069
    %v2074 = vadd.f32 %v2057, %v2070
    %v2075 = vadd.f32 %v2058, %v2071
    %v2076 = vadd.f32 %v2059, %v2072
    %v2077 = vlaneseq
    %v2078 = vshrl.u32 %v2077, 7
    %v2079 = vsub.s32 1, %v2078
    %v2080 = vrot.slane %v1829, %v2079
    %2082 = vset.pattern.permute.xlu0 0
    %2083 = vperm.xlu0 %2082, %v1844
    %v2084 = vpop.permute.xlu0 %2083
    %v2086 = vmul.f32 0.0, %v2084
    %v2087 = vmul.f32 %v1892, %v2084
    %v2088 = vmul.f32 %v1896, %v2084
    %v2089 = vmul.f32 %v2080, %v2084
    %v2090 = vadd.f32 %v2073, %v2086
    %v2091 = vadd.f32 %v2074, %v2087
    %v2092 = vadd.f32 %v2075, %v2088
    %v2093 = vadd.f32 %v2076, %v2089
    %v2094 = vlaneseq
    %v2095 = vshrl.u32 %v2094, 7
    %v2096 = vsub.s32 2, %v2095
    %v2097 = vrot.slane %v1829, %v2096
    %2099 = vset.pattern.permute.xlu0 0
    %2100 = vperm.xlu0 %2099, %v1845
    %v2101 = vpop.permute.xlu0 %2100
    %v2103 = vmul.f32 0.0, %v2101
    %v2104 = vmul.f32 %v1911, %v2101
    %v2105 = vmul.f32 %v1915, %v2101
    %v2106 = vmul.f32 %v2097, %v2101
    %v2107 = vadd.f32 %v2090, %v2103
    %v2108 = vadd.f32 %v2091, %v2104
    %v2109 = vadd.f32 %v2092, %v2105
    %v2110 = vadd.f32 %v2093, %v2106
    %v2111 = vlaneseq
    %v2112 = vshrl.u32 %v2111, 7
    %v2113 = vsub.s32 3, %v2112
    %v2114 = vrot.slane %v1829, %v2113
    %2116 = vset.pattern.permute.xlu0 0
    %2117 = vperm.xlu0 %2116, %v1846
    %v2118 = vpop.permute.xlu0 %2117
    %v2120 = vmul.f32 0.0, %v2118
    %v2121 = vmul.f32 %v1930, %v2118
    %v2122 = vmul.f32 %v1934, %v2118
    %v2123 = vmul.f32 %v2114, %v2118
    %v2124 = vadd.f32 %v2107, %v2120
    %v2125 = vadd.f32 %v2108, %v2121
    %v2126 = vadd.f32 %v2109, %v2122
    %v2127 = vadd.f32 %v2110, %v2123
    %v2128 = vlaneseq
    %v2129 = vshrl.u32 %v2128, 7
    %v2130 = vsub.s32 4, %v2129
    %v2131 = vrot.slane %v1829, %v2130
    %2133 = vset.pattern.permute.xlu0 0
    %2134 = vperm.xlu0 %2133, %v1847
    %v2135 = vpop.permute.xlu0 %2134
    %v2137 = vmul.f32 0.0, %v2135
    %v2138 = vmul.f32 %v1949, %v2135
    %v2139 = vmul.f32 %v1953, %v2135
    %v2140 = vmul.f32 %v2131, %v2135
    %v2141 = vadd.f32 %v2124, %v2137
    %v2142 = vadd.f32 %v2125, %v2138
    %v2143 = vadd.f32 %v2126, %v2139
    %v2144 = vadd.f32 %v2127, %v2140
    %v2145 = vlaneseq
    %v2146 = vshrl.u32 %v2145, 7
    %v2147 = vsub.s32 5, %v2146
    %v2148 = vrot.slane %v1829, %v2147
    %2150 = vset.pattern.permute.xlu0 0
    %2151 = vperm.xlu0 %2150, %v1848
    %v2152 = vpop.permute.xlu0 %2151
    %v2154 = vmul.f32 0.0, %v2152
    %v2155 = vmul.f32 %v1968, %v2152
    %v2156 = vmul.f32 %v1972, %v2152
    %v2157 = vmul.f32 %v2148, %v2152
    %v2158 = vadd.f32 %v2141, %v2154
    %v2159 = vadd.f32 %v2142, %v2155
    %v2160 = vadd.f32 %v2143, %v2156
    %v2161 = vadd.f32 %v2144, %v2157
    %v2162 = vlaneseq
    %v2163 = vshrl.u32 %v2162, 7
    %v2164 = vsub.s32 6, %v2163
    %v2165 = vrot.slane %v1829, %v2164
    %2167 = vset.pattern.permute.xlu0 0
    %2168 = vperm.xlu0 %2167, %v1849
    %v2169 = vpop.permute.xlu0 %2168
    %v2171 = vmul.f32 0.0, %v2169
    %v2172 = vmul.f32 %v1987, %v2169
    %v2173 = vmul.f32 %v1991, %v2169
    %v2174 = vmul.f32 %v2165, %v2169
    %v2175 = vadd.f32 %v2158, %v2171
    %v2176 = vadd.f32 %v2159, %v2172
    %v2177 = vadd.f32 %v2160, %v2173
    %v2178 = vadd.f32 %v2161, %v2174
    %v2179 = vlaneseq
    %v2180 = vshrl.u32 %v2179, 7
    %v2181 = vsub.s32 7, %v2180
    %v2182 = vrot.slane %v1829, %v2181
    %2184 = vset.pattern.permute.xlu0 0
    %2185 = vperm.xlu0 %2184, %v1850
    %v2186 = vpop.permute.xlu0 %2185
    %v2188 = vmul.f32 0.0, %v2186
    %v2189 = vmul.f32 %v2006, %v2186
    %v2190 = vmul.f32 %v2010, %v2186
    %v2191 = vmul.f32 %v2182, %v2186
    %v2192 = vadd.f32 %v2175, %v2188
    %v2193 = vadd.f32 %v2176, %v2189
    %v2194 = vadd.f32 %v2177, %v2190
    %v2195 = vadd.f32 %v2178, %v2191
    %v2196 = vlaneseq
    %v2197 = vshrl.u32 %v2196, 7
    %v2198 = vsub.s32 0, %v2197
    %v2199 = vrot.slane %v1832, %v2198
    %2201 = vset.pattern.permute.xlu0 0
    %2202 = vperm.xlu0 %2201, %v1851
    %v2203 = vpop.permute.xlu0 %2202
    %v2205 = vmul.f32 0.0, %v2203
    %v2206 = vmul.f32 %v2025, %v2203
    %v2207 = vmul.f32 %v2029, %v2203
    %v2208 = vmul.f32 %v2199, %v2203
    %v2209 = vadd.f32 %v2192, %v2205
    %v2210 = vadd.f32 %v2193, %v2206
    %v2211 = vadd.f32 %v2194, %v2207
    %v2212 = vadd.f32 %v2195, %v2208
    %v2213 = vlaneseq
    %v2214 = vshrl.u32 %v2213, 7
    %v2215 = vsub.s32 1, %v2214
    %v2216 = vrot.slane %v1832, %v2215
    %2218 = vset.pattern.permute.xlu0 0
    %2219 = vperm.xlu0 %2218, %v1852
    %v2220 = vpop.permute.xlu0 %2219
    %v2222 = vmul.f32 0.0, %v2220
    %v2223 = vmul.f32 %v2044, %v2220
    %v2224 = vmul.f32 %v2048, %v2220
    %v2225 = vmul.f32 %v2216, %v2220
    %v2226 = vadd.f32 %v2209, %v2222
    %v2227 = vadd.f32 %v2210, %v2223
    %v2228 = vadd.f32 %v2211, %v2224
    %v2229 = vadd.f32 %v2212, %v2225
    %2231 = vset.pattern.permute.xlu0 0
    %2232 = vperm.xlu0 %2231, %v1853
    %v2233 = vpop.permute.xlu0 %2232
    %v2235 = vmul.f32 %v1873, %v2233
    %v2236 = vmul.f32 %v1877, %v2233
    %v2237 = vmul.f32 %v2063, %v2233
    %v2238 = vmul.f32 0.0, %v2233
    %v2239 = vadd.f32 %v2226, %v2235
    %v2240 = vadd.f32 %v2227, %v2236
    %v2241 = vadd.f32 %v2228, %v2237
    %v2242 = vadd.f32 %v2229, %v2238
    %2244 = vset.pattern.permute.xlu0 0
    %2245 = vperm.xlu0 %2244, %v1854
    %v2246 = vpop.permute.xlu0 %2245
    %v2248 = vmul.f32 %v1892, %v2246
    %v2249 = vmul.f32 %v1896, %v2246
    %v2250 = vmul.f32 %v2080, %v2246
    %v2251 = vmul.f32 0.0, %v2246
    %v2252 = vadd.f32 %v2239, %v2248
    %v2253 = vadd.f32 %v2240, %v2249
    %v2254 = vadd.f32 %v2241, %v2250
    %v2255 = vadd.f32 %v2242, %v2251
    %2257 = vset.pattern.permute.xlu0 0
    %2258 = vperm.xlu0 %2257, %v1855
    %v2259 = vpop.permute.xlu0 %2258
    %v2261 = vmul.f32 %v1911, %v2259
    %v2262 = vmul.f32 %v1915, %v2259
    %v2263 = vmul.f32 %v2097, %v2259
    %v2264 = vmul.f32 0.0, %v2259
    %v2265 = vadd.f32 %v2252, %v2261
    %v2266 = vadd.f32 %v2253, %v2262
    %v2267 = vadd.f32 %v2254, %v2263
    %v2268 = vadd.f32 %v2255, %v2264
    %2270 = vset.pattern.permute.xlu0 0
    %2271 = vperm.xlu0 %2270, %v1856
    %v2272 = vpop.permute.xlu0 %2271
    %v2274 = vmul.f32 %v1930, %v2272
    %v2275 = vmul.f32 %v1934, %v2272
    %v2276 = vmul.f32 %v2114, %v2272
    %v2277 = vmul.f32 0.0, %v2272
    %v2278 = vadd.f32 %v2265, %v2274
    %v2279 = vadd.f32 %v2266, %v2275
    %v2280 = vadd.f32 %v2267, %v2276
    %v2281 = vadd.f32 %v2268, %v2277
    %2283 = vset.pattern.permute.xlu0 0
    %2284 = vperm.xlu0 %2283, %v1857
    %v2285 = vpop.permute.xlu0 %2284
    %v2287 = vmul.f32 %v1949, %v2285
    %v2288 = vmul.f32 %v1953, %v2285
    %v2289 = vmul.f32 %v2131, %v2285
    %v2290 = vmul.f32 0.0, %v2285
    %v2291 = vadd.f32 %v2278, %v2287
    %v2292 = vadd.f32 %v2279, %v2288
    %v2293 = vadd.f32 %v2280, %v2289
    %v2294 = vadd.f32 %v2281, %v2290
    %2296 = vset.pattern.permute.xlu0 0
    %2297 = vperm.xlu0 %2296, %v1858
    %v2298 = vpop.permute.xlu0 %2297
    %v2300 = vmul.f32 %v1968, %v2298
    %v2301 = vmul.f32 %v1972, %v2298
    %v2302 = vmul.f32 %v2148, %v2298
    %v2303 = vmul.f32 0.0, %v2298
    %v2304 = vadd.f32 %v2291, %v2300
    %v2305 = vadd.f32 %v2292, %v2301
    %v2306 = vadd.f32 %v2293, %v2302
    %v2307 = vadd.f32 %v2294, %v2303
    %2309 = vset.pattern.permute.xlu0 0
    %2310 = vperm.xlu0 %2309, %v1859
    %v2311 = vpop.permute.xlu0 %2310
    %v2313 = vmul.f32 %v1987, %v2311
    %v2314 = vmul.f32 %v1991, %v2311
    %v2315 = vmul.f32 %v2165, %v2311
    %v2316 = vmul.f32 0.0, %v2311
    %v2317 = vadd.f32 %v2304, %v2313
    %v2318 = vadd.f32 %v2305, %v2314
    %v2319 = vadd.f32 %v2306, %v2315
    %v2320 = vadd.f32 %v2307, %v2316
    %2322 = vset.pattern.permute.xlu0 0
    %2323 = vperm.xlu0 %2322, %v1860
    %v2324 = vpop.permute.xlu0 %2323
    %v2326 = vmul.f32 %v2006, %v2324
    %v2327 = vmul.f32 %v2010, %v2324
    %v2328 = vmul.f32 %v2182, %v2324
    %v2329 = vmul.f32 0.0, %v2324
    %v2330 = vadd.f32 %v2317, %v2326
    %v2331 = vadd.f32 %v2318, %v2327
    %v2332 = vadd.f32 %v2319, %v2328
    %v2333 = vadd.f32 %v2320, %v2329
    %2335 = vset.pattern.permute.xlu0 0
    %2336 = vperm.xlu0 %2335, %v1861
    %v2337 = vpop.permute.xlu0 %2336
    %v2339 = vmul.f32 %v2025, %v2337
    %v2340 = vmul.f32 %v2029, %v2337
    %v2341 = vmul.f32 %v2199, %v2337
    %v2342 = vmul.f32 0.0, %v2337
    %v2343 = vadd.f32 %v2330, %v2339
    %v2344 = vadd.f32 %v2331, %v2340
    %v2345 = vadd.f32 %v2332, %v2341
    %v2346 = vadd.f32 %v2333, %v2342
    %2348 = vset.pattern.permute.xlu0 0
    %2349 = vperm.xlu0 %2348, %v1862
    %v2350 = vpop.permute.xlu0 %2349
    %v2352 = vmul.f32 %v2044, %v2350
    %v2353 = vmul.f32 %v2048, %v2350
    %v2354 = vmul.f32 %v2216, %v2350
    %v2355 = vmul.f32 0.0, %v2350
    %v2356 = vadd.f32 %v2343, %v2352
    %v2357 = vadd.f32 %v2344, %v2353
    %v2358 = vadd.f32 %v2345, %v2354
    %v2359 = vadd.f32 %v2346, %v2355
    %v2360 = vmax.f32 %v2356, 0.0
    %v2361 = vmax.f32 %v2357, 0.0
    %v2362 = vmax.f32 %v2358, 0.0
    %v2363 = vmax.f32 %v2359, 0.0
    %v2364 = vmax.f32 %v2360, %v2361
    %v2365 = vmax.f32 %v2362, %v2363
    %v2366 = vld [vmem:[%s9] sm:$0xf]
    %v2367 = vld [vmem:[%s9 + $0x4] sm:$0xf]
    %v2368 = vld [vmem:[%s9 + $0x8] sm:$0xf]
    %v2369 = vld [vmem:[%s9 + $0xc] sm:$0xf]
    %v2370 = vld [vmem:[%s9 + $0x10] sm:$0xf]
    %v2371 = vld [vmem:[%s9 + $0x14] sm:$0xf]
    %v2372 = vld [vmem:[%s9 + $0x18] sm:$0xf]
    %v2373 = vld [vmem:[%s9 + $0x1c] sm:$0xf]
    %v2374 = vld [vmem:[%s9 + $0x20] sm:$0xf]
    %v2375 = vld [vmem:[%s9 + $0x24] sm:$0xf]
    %v2376 = vld [vmem:[%s9 + $0x28] sm:$0xf]
    %v2377 = vld [vmem:[%s9 + $0x2c] sm:$0xf]
    %v2378 = vld [vmem:[%s9 + $0x30] sm:$0xf]
    %v2379 = vld [vmem:[%s9 + $0x34] sm:$0xf]
    %v2380 = vld [vmem:[%s9 + $0x38] sm:$0xf]
    %v2381 = vld [vmem:[%s9 + $0x3c] sm:$0xf]
    %v2382 = vld [vmem:[%s9 + $0x40] sm:$0xf]
    %v2383 = vld [vmem:[%s9 + $0x44] sm:$0xf]
    %v2384 = vld [vmem:[%s9 + $0x48] sm:$0xf]
    %v2385 = vld [vmem:[%s9 + $0x4c] sm:$0xf]
    %v2386 = vld [vmem:[%s9 + $0x50] sm:$0xf]
    %v2387 = vld [vmem:[%s9 + $0x54] sm:$0xf]
    %v2388 = vld [vmem:[%s9 + $0x58] sm:$0xf]
    %v2389 = vld [vmem:[%s9 + $0x5c] sm:$0xf]
    %v2390 = vld [vmem:[%s10] sm:$0xf]
    %2392 = vset.pattern.permute.xlu0 0
    %2393 = vperm.xlu0 %2392, %v2390
    %v2394 = vpop.permute.xlu0 %2393
    %v2396 = vadd.f32 %v2394, 0.0
    %v2397 = vlaneseq
    %v2398 = vshrl.u32 %v2397, 7
    %v2399 = vsub.s32 0, %v2398
    %v2400 = vrot.slane %v2364, %v2399
    %v2401 = vlaneseq
    %v2402 = vshrl.u32 %v2401, 7
    %v2403 = vsub.s32 0, %v2402
    %v2404 = vrot.slane %v2365, %v2403
    %2406 = vset.pattern.permute.xlu0 0
    %2407 = vperm.xlu0 %2406, %v2366
    %v2408 = vpop.permute.xlu0 %2407
    %v2410 = vmul.f32 0.0, %v2408
    %v2411 = vmul.f32 %v2400, %v2408
    %v2412 = vmul.f32 %v2404, %v2408
    %v2413 = vadd.f32 %v2396, %v2410
    %v2414 = vadd.f32 %v2396, %v2411
    %v2415 = vadd.f32 %v2396, %v2412
    %v2416 = vlaneseq
    %v2417 = vshrl.u32 %v2416, 7
    %v2418 = vsub.s32 1, %v2417
    %v2419 = vrot.slane %v2364, %v2418
    %v2420 = vlaneseq
    %v2421 = vshrl.u32 %v2420, 7
    %v2422 = vsub.s32 1, %v2421
    %v2423 = vrot.slane %v2365, %v2422
    %2425 = vset.pattern.permute.xlu0 0
    %2426 = vperm.xlu0 %2425, %v2367
    %v2427 = vpop.permute.xlu0 %2426
    %v2429 = vmul.f32 0.0, %v2427
    %v2430 = vmul.f32 %v2419, %v2427
    %v2431 = vmul.f32 %v2423, %v2427
    %v2432 = vadd.f32 %v2413, %v2429
    %v2433 = vadd.f32 %v2414, %v2430
    %v2434 = vadd.f32 %v2415, %v2431
    %v2435 = vlaneseq
    %v2436 = vshrl.u32 %v2435, 7
    %v2437 = vsub.s32 2, %v2436
    %v2438 = vrot.slane %v2364, %v2437
    %v2439 = vlaneseq
    %v2440 = vshrl.u32 %v2439, 7
    %v2441 = vsub.s32 2, %v2440
    %v2442 = vrot.slane %v2365, %v2441
    %2444 = vset.pattern.permute.xlu0 0
    %2445 = vperm.xlu0 %2444, %v2368
    %v2446 = vpop.permute.xlu0 %2445
    %v2448 = vmul.f32 0.0, %v2446
    %v2449 = vmul.f32 %v2438, %v2446
    %v2450 = vmul.f32 %v2442, %v2446
    %v2451 = vadd.f32 %v2432, %v2448
    %v2452 = vadd.f32 %v2433, %v2449
    %v2453 = vadd.f32 %v2434, %v2450
    %v2454 = vlaneseq
    %v2455 = vshrl.u32 %v2454, 7
    %v2456 = vsub.s32 3, %v2455
    %v2457 = vrot.slane %v2364, %v2456
    %v2458 = vlaneseq
    %v2459 = vshrl.u32 %v2458, 7
    %v2460 = vsub.s32 3, %v2459
    %v2461 = vrot.slane %v2365, %v2460
    %2463 = vset.pattern.permute.xlu0 0
    %2464 = vperm.xlu0 %2463, %v2369
    %v2465 = vpop.permute.xlu0 %2464
    %v2467 = vmul.f32 0.0, %v2465
    %v2468 = vmul.f32 %v2457, %v2465
    %v2469 = vmul.f32 %v2461, %v2465
    %v2470 = vadd.f32 %v2451, %v2467
    %v2471 = vadd.f32 %v2452, %v2468
    %v2472 = vadd.f32 %v2453, %v2469
    %v2473 = vlaneseq
    %v2474 = vshrl.u32 %v2473, 7
    %v2475 = vsub.s32 4, %v2474
    %v2476 = vrot.slane %v2364, %v2475
    %v2477 = vlaneseq
    %v2478 = vshrl.u32 %v2477, 7
    %v2479 = vsub.s32 4, %v2478
    %v2480 = vrot.slane %v2365, %v2479
    %2482 = vset.pattern.permute.xlu0 0
    %2483 = vperm.xlu0 %2482, %v2370
    %v2484 = vpop.permute.xlu0 %2483
    %v2486 = vmul.f32 0.0, %v2484
    %v2487 = vmul.f32 %v2476, %v2484
    %v2488 = vmul.f32 %v2480, %v2484
    %v2489 = vadd.f32 %v2470, %v2486
    %v2490 = vadd.f32 %v2471, %v2487
    %v2491 = vadd.f32 %v2472, %v2488
    %v2492 = vlaneseq
    %v2493 = vshrl.u32 %v2492, 7
    %v2494 = vsub.s32 5, %v2493
    %v2495 = vrot.slane %v2364, %v2494
    %v2496 = vlaneseq
    %v2497 = vshrl.u32 %v2496, 7
    %v2498 = vsub.s32 5, %v2497
    %v2499 = vrot.slane %v2365, %v2498
    %2501 = vset.pattern.permute.xlu0 0
    %2502 = vperm.xlu0 %2501, %v2371
    %v2503 = vpop.permute.xlu0 %2502
    %v2505 = vmul.f32 0.0, %v2503
    %v2506 = vmul.f32 %v2495, %v2503
    %v2507 = vmul.f32 %v2499, %v2503
    %v2508 = vadd.f32 %v2489, %v2505
    %v2509 = vadd.f32 %v2490, %v2506
    %v2510 = vadd.f32 %v2491, %v2507
    %v2511 = vlaneseq
    %v2512 = vshrl.u32 %v2511, 7
    %v2513 = vsub.s32 6, %v2512
    %v2514 = vrot.slane %v2364, %v2513
    %v2515 = vlaneseq
    %v2516 = vshrl.u32 %v2515, 7
    %v2517 = vsub.s32 6, %v2516
    %v2518 = vrot.slane %v2365, %v2517
    %2520 = vset.pattern.permute.xlu0 0
    %2521 = vperm.xlu0 %2520, %v2372
    %v2522 = vpop.permute.xlu0 %2521
    %v2524 = vmul.f32 0.0, %v2522
    %v2525 = vmul.f32 %v2514, %v2522
    %v2526 = vmul.f32 %v2518, %v2522
    %v2527 = vadd.f32 %v2508, %v2524
    %v2528 = vadd.f32 %v2509, %v2525
    %v2529 = vadd.f32 %v2510, %v2526
    %v2530 = vlaneseq
    %v2531 = vshrl.u32 %v2530, 7
    %v2532 = vsub.s32 7, %v2531
    %v2533 = vrot.slane %v2364, %v2532
    %v2534 = vlaneseq
    %v2535 = vshrl.u32 %v2534, 7
    %v2536 = vsub.s32 7, %v2535
    %v2537 = vrot.slane %v2365, %v2536
    %2539 = vset.pattern.permute.xlu0 0
    %2540 = vperm.xlu0 %2539, %v2373
    %v2541 = vpop.permute.xlu0 %2540
    %v2543 = vmul.f32 0.0, %v2541
    %v2544 = vmul.f32 %v2533, %v2541
    %v2545 = vmul.f32 %v2537, %v2541
    %v2546 = vadd.f32 %v2527, %v2543
    %v2547 = vadd.f32 %v2528, %v2544
    %v2548 = vadd.f32 %v2529, %v2545
    %2550 = vset.pattern.permute.xlu0 0
    %2551 = vperm.xlu0 %2550, %v2374
    %v2552 = vpop.permute.xlu0 %2551
    %v2554 = vmul.f32 0.0, %v2552
    %v2555 = vmul.f32 %v2400, %v2552
    %v2556 = vmul.f32 %v2404, %v2552
    %v2557 = vadd.f32 %v2546, %v2554
    %v2558 = vadd.f32 %v2546, %v2555
    %v2559 = vadd.f32 %v2547, %v2556
    %v2560 = vadd.f32 %v2548, %v2554
    %2562 = vset.pattern.permute.xlu0 0
    %2563 = vperm.xlu0 %2562, %v2375
    %v2564 = vpop.permute.xlu0 %2563
    %v2566 = vmul.f32 0.0, %v2564
    %v2567 = vmul.f32 %v2419, %v2564
    %v2568 = vmul.f32 %v2423, %v2564
    %v2569 = vadd.f32 %v2557, %v2566
    %v2570 = vadd.f32 %v2558, %v2567
    %v2571 = vadd.f32 %v2559, %v2568
    %v2572 = vadd.f32 %v2560, %v2566
    %2574 = vset.pattern.permute.xlu0 0
    %2575 = vperm.xlu0 %2574, %v2376
    %v2576 = vpop.permute.xlu0 %2575
    %v2578 = vmul.f32 0.0, %v2576
    %v2579 = vmul.f32 %v2438, %v2576
    %v2580 = vmul.f32 %v2442, %v2576
    %v2581 = vadd.f32 %v2569, %v2578
    %v2582 = vadd.f32 %v2570, %v2579
    %v2583 = vadd.f32 %v2571, %v2580
    %v2584 = vadd.f32 %v2572, %v2578
    %2586 = vset.pattern.permute.xlu0 0
    %2587 = vperm.xlu0 %2586, %v2377
    %v2588 = vpop.permute.xlu0 %2587
    %v2590 = vmul.f32 0.0, %v2588
    %v2591 = vmul.f32 %v2457, %v2588
    %v2592 = vmul.f32 %v2461, %v2588
    %v2593 = vadd.f32 %v2581, %v2590
    %v2594 = vadd.f32 %v2582, %v2591
    %v2595 = vadd.f32 %v2583, %v2592
    %v2596 = vadd.f32 %v2584, %v2590
    %2598 = vset.pattern.permute.xlu0 0
    %2599 = vperm.xlu0 %2598, %v2378
    %v2600 = vpop.permute.xlu0 %2599
    %v2602 = vmul.f32 0.0, %v2600
    %v2603 = vmul.f32 %v2476, %v2600
    %v2604 = vmul.f32 %v2480, %v2600
    %v2605 = vadd.f32 %v2593, %v2602
    %v2606 = vadd.f32 %v2594, %v2603
    %v2607 = vadd.f32 %v2595, %v2604
    %v2608 = vadd.f32 %v2596, %v2602
    %2610 = vset.pattern.permute.xlu0 0
    %2611 = vperm.xlu0 %2610, %v2379
    %v2612 = vpop.permute.xlu0 %2611
    %v2614 = vmul.f32 0.0, %v2612
    %v2615 = vmul.f32 %v2495, %v2612
    %v2616 = vmul.f32 %v2499, %v2612
    %v2617 = vadd.f32 %v2605, %v2614
    %v2618 = vadd.f32 %v2606, %v2615
    %v2619 = vadd.f32 %v2607, %v2616
    %v2620 = vadd.f32 %v2608, %v2614
    %2622 = vset.pattern.permute.xlu0 0
    %2623 = vperm.xlu0 %2622, %v2380
    %v2624 = vpop.permute.xlu0 %2623
    %v2626 = vmul.f32 0.0, %v2624
    %v2627 = vmul.f32 %v2514, %v2624
    %v2628 = vmul.f32 %v2518, %v2624
    %v2629 = vadd.f32 %v2617, %v2626
    %v2630 = vadd.f32 %v2618, %v2627
    %v2631 = vadd.f32 %v2619, %v2628
    %v2632 = vadd.f32 %v2620, %v2626
    %2634 = vset.pattern.permute.xlu0 0
    %2635 = vperm.xlu0 %2634, %v2381
    %v2636 = vpop.permute.xlu0 %2635
    %v2638 = vmul.f32 0.0, %v2636
    %v2639 = vmul.f32 %v2533, %v2636
    %v2640 = vmul.f32 %v2537, %v2636
    %v2641 = vadd.f32 %v2629, %v2638
    %v2642 = vadd.f32 %v2630, %v2639
    %v2643 = vadd.f32 %v2631, %v2640
    %v2644 = vadd.f32 %v2632, %v2638
    %2646 = vset.pattern.permute.xlu0 0
    %2647 = vperm.xlu0 %2646, %v2382
    %v2648 = vpop.permute.xlu0 %2647
    %v2650 = vmul.f32 %v2400, %v2648
    %v2651 = vmul.f32 %v2404, %v2648
    %v2652 = vmul.f32 0.0, %v2648
    %v2653 = vadd.f32 %v2641, %v2650
    %v2654 = vadd.f32 %v2642, %v2651
    %v2655 = vadd.f32 %v2643, %v2652
    %v2656 = vadd.f32 %v2644, %v2652
    %2658 = vset.pattern.permute.xlu0 0
    %2659 = vperm.xlu0 %2658, %v2383
    %v2660 = vpop.permute.xlu0 %2659
    %v2662 = vmul.f32 %v2419, %v2660
    %v2663 = vmul.f32 %v2423, %v2660
    %v2664 = vmul.f32 0.0, %v2660
    %v2665 = vadd.f32 %v2653, %v2662
    %v2666 = vadd.f32 %v2654, %v2663
    %v2667 = vadd.f32 %v2655, %v2664
    %v2668 = vadd.f32 %v2656, %v2664
    %2670 = vset.pattern.permute.xlu0 0
    %2671 = vperm.xlu0 %2670, %v2384
    %v2672 = vpop.permute.xlu0 %2671
    %v2674 = vmul.f32 %v2438, %v2672
    %v2675 = vmul.f32 %v2442, %v2672
    %v2676 = vmul.f32 0.0, %v2672
    %v2677 = vadd.f32 %v2665, %v2674
    %v2678 = vadd.f32 %v2666, %v2675
    %v2679 = vadd.f32 %v2667, %v2676
    %v2680 = vadd.f32 %v2668, %v2676
    %2682 = vset.pattern.permute.xlu0 0
    %2683 = vperm.xlu0 %2682, %v2385
    %v2684 = vpop.permute.xlu0 %2683
    %v2686 = vmul.f32 %v2457, %v2684
    %v2687 = vmul.f32 %v2461, %v2684
    %v2688 = vmul.f32 0.0, %v2684
    %v2689 = vadd.f32 %v2677, %v2686
    %v2690 = vadd.f32 %v2678, %v2687
    %v2691 = vadd.f32 %v2679, %v2688
    %v2692 = vadd.f32 %v2680, %v2688
    %2694 = vset.pattern.permute.xlu0 0
    %2695 = vperm.xlu0 %2694, %v2386
    %v2696 = vpop.permute.xlu0 %2695
    %v2698 = vmul.f32 %v2476, %v2696
    %v2699 = vmul.f32 %v2480, %v2696
    %v2700 = vmul.f32 0.0, %v2696
    %v2701 = vadd.f32 %v2689, %v2698
    %v2702 = vadd.f32 %v2690, %v2699
    %v2703 = vadd.f32 %v2691, %v2700
    %v2704 = vadd.f32 %v2692, %v2700
    %2706 = vset.pattern.permute.xlu0 0
    %2707 = vperm.xlu0 %2706, %v2387
    %v2708 = vpop.permute.xlu0 %2707
    %v2710 = vmul.f32 %v2495, %v2708
    %v2711 = vmul.f32 %v2499, %v2708
    %v2712 = vmul.f32 0.0, %v2708
    %v2713 = vadd.f32 %v2701, %v2710
    %v2714 = vadd.f32 %v2702, %v2711
    %v2715 = vadd.f32 %v2703, %v2712
    %v2716 = vadd.f32 %v2704, %v2712
    %2718 = vset.pattern.permute.xlu0 0
    %2719 = vperm.xlu0 %2718, %v2388
    %v2720 = vpop.permute.xlu0 %2719
    %v2722 = vmul.f32 %v2514, %v2720
    %v2723 = vmul.f32 %v2518, %v2720
    %v2724 = vmul.f32 0.0, %v2720
    %v2725 = vadd.f32 %v2713, %v2722
    %v2726 = vadd.f32 %v2714, %v2723
    %v2727 = vadd.f32 %v2715, %v2724
    %v2728 = vadd.f32 %v2716, %v2724
    %2730 = vset.pattern.permute.xlu0 0
    %2731 = vperm.xlu0 %2730, %v2389
    %v2732 = vpop.permute.xlu0 %2731
    %v2734 = vmul.f32 %v2533, %v2732
    %v2735 = vmul.f32 %v2537, %v2732
    %v2736 = vmul.f32 0.0, %v2732
    %v2737 = vadd.f32 %v2725, %v2734
    %v2738 = vadd.f32 %v2726, %v2735
    %v2739 = vadd.f32 %v2727, %v2736
    %v2740 = vadd.f32 %v2728, %v2736
    %v2741 = vmax.f32 %v2737, 0.0
    %v2742 = vmax.f32 %v2738, 0.0
    %v2743 = vmax.f32 %v2739, 0.0
    %v2744 = vmax.f32 %v2740, 0.0
    %v2745 = vsel %vm283, %v2741, -inf
    %v2746 = vsel %vm283, %v2742, -inf
    %v2747 = vmax.f32 %v2745, %v2746
    %v2748 = vsel %vm283, %v2743, -inf
    %v2749 = vsel %vm283, %v2744, -inf
    %v2750 = vmax.f32 %v2748, %v2749
    %v2751 = vld [vmem:[%s11] sm:$0xff]
    %v2752 = vld [vmem:[%s11 + $0x8] sm:$0x3]
    %v2753 = vld [vmem:[%s11 + $0x10] sm:$0xff]
    %v2754 = vld [vmem:[%s11 + $0x18] sm:$0x3]
    %v2755 = vld [vmem:[%s11 + $0x20] sm:$0xff]
    %v2756 = vld [vmem:[%s11 + $0x28] sm:$0x3]
    %v2757 = vld [vmem:[%s11 + $0x30] sm:$0xff]
    %v2758 = vld [vmem:[%s11 + $0x38] sm:$0x3]
    %v2759 = vld [vmem:[%s11 + $0x40] sm:$0xff]
    %v2760 = vld [vmem:[%s11 + $0x48] sm:$0x3]
    %v2761 = vld [vmem:[%s11 + $0x50] sm:$0xff]
    %v2762 = vld [vmem:[%s11 + $0x58] sm:$0x3]
    %v2763 = vld [vmem:[%s11 + $0x60] sm:$0xff]
    %v2764 = vld [vmem:[%s11 + $0x68] sm:$0x3]
    %v2765 = vld [vmem:[%s11 + $0x70] sm:$0xff]
    %v2766 = vld [vmem:[%s11 + $0x78] sm:$0x3]
    %v2767 = vld [vmem:[%s12] sm:$0xff]
    %v2768 = vld [vmem:[%s12 + $0x8] sm:$0x3]
    %2770 = vset.pattern.permute.xlu0 0
    %2771 = vperm.xlu0 %2770, %v2767
    %v2772 = vpop.permute.xlu0 %2771
    %2775 = vset.pattern.permute.xlu0 0
    %2776 = vperm.xlu0 %2775, %v2768
    %v2777 = vpop.permute.xlu0 %2776
    %v2779 = vadd.f32 %v2772, 0.0
    %v2780 = vadd.f32 %v2777, 0.0
    %v2781 = vlaneseq
    %v2782 = vshrl.u32 %v2781, 7
    %v2783 = vsub.s32 0, %v2782
    %v2784 = vrot.slane %v2747, %v2783
    %2786 = vset.pattern.permute.xlu0 0
    %2787 = vperm.xlu0 %2786, %v2751
    %v2788 = vpop.permute.xlu0 %2787
    %2791 = vset.pattern.permute.xlu0 0
    %2792 = vperm.xlu0 %2791, %v2752
    %v2793 = vpop.permute.xlu0 %2792
    %v2795 = vmul.f32 %v2784, %v2788
    %v2796 = vmul.f32 %v2784, %v2793
    %v2797 = vadd.f32 %v2779, %v2795
    %v2798 = vadd.f32 %v2780, %v2796
    %v2799 = vlaneseq
    %v2800 = vshrl.u32 %v2799, 7
    %v2801 = vsub.s32 1, %v2800
    %v2802 = vrot.slane %v2747, %v2801
    %2804 = vset.pattern.permute.xlu0 0
    %2805 = vperm.xlu0 %2804, %v2753
    %v2806 = vpop.permute.xlu0 %2805
    %2809 = vset.pattern.permute.xlu0 0
    %2810 = vperm.xlu0 %2809, %v2754
    %v2811 = vpop.permute.xlu0 %2810
    %v2813 = vmul.f32 %v2802, %v2806
    %v2814 = vmul.f32 %v2802, %v2811
    %v2815 = vadd.f32 %v2797, %v2813
    %v2816 = vadd.f32 %v2798, %v2814
    %v2817 = vlaneseq
    %v2818 = vshrl.u32 %v2817, 7
    %v2819 = vsub.s32 2, %v2818
    %v2820 = vrot.slane %v2747, %v2819
    %2822 = vset.pattern.permute.xlu0 0
    %2823 = vperm.xlu0 %2822, %v2755
    %v2824 = vpop.permute.xlu0 %2823
    %2827 = vset.pattern.permute.xlu0 0
    %2828 = vperm.xlu0 %2827, %v2756
    %v2829 = vpop.permute.xlu0 %2828
    %v2831 = vmul.f32 %v2820, %v2824
    %v2832 = vmul.f32 %v2820, %v2829
    %v2833 = vadd.f32 %v2815, %v2831
    %v2834 = vadd.f32 %v2816, %v2832
    %v2835 = vlaneseq
    %v2836 = vshrl.u32 %v2835, 7
    %v2837 = vsub.s32 3, %v2836
    %v2838 = vrot.slane %v2747, %v2837
    %2840 = vset.pattern.permute.xlu0 0
    %2841 = vperm.xlu0 %2840, %v2757
    %v2842 = vpop.permute.xlu0 %2841
    %2845 = vset.pattern.permute.xlu0 0
    %2846 = vperm.xlu0 %2845, %v2758
    %v2847 = vpop.permute.xlu0 %2846
    %v2849 = vmul.f32 %v2838, %v2842
    %v2850 = vmul.f32 %v2838, %v2847
    %v2851 = vadd.f32 %v2833, %v2849
    %v2852 = vadd.f32 %v2834, %v2850
    %v2853 = vlaneseq
    %v2854 = vshrl.u32 %v2853, 7
    %v2855 = vsub.s32 0, %v2854
    %v2856 = vrot.slane %v2750, %v2855
    %2858 = vset.pattern.permute.xlu0 0
    %2859 = vperm.xlu0 %2858, %v2759
    %v2860 = vpop.permute.xlu0 %2859
    %2863 = vset.pattern.permute.xlu0 0
    %2864 = vperm.xlu0 %2863, %v2760
    %v2865 = vpop.permute.xlu0 %2864
    %v2867 = vmul.f32 %v2856, %v2860
    %v2868 = vmul.f32 %v2856, %v2865
    %v2869 = vadd.f32 %v2851, %v2867
    %v2870 = vadd.f32 %v2852, %v2868
    %v2871 = vlaneseq
    %v2872 = vshrl.u32 %v2871, 7
    %v2873 = vsub.s32 1, %v2872
    %v2874 = vrot.slane %v2750, %v2873
    %2876 = vset.pattern.permute.xlu0 0
    %2877 = vperm.xlu0 %2876, %v2761
    %v2878 = vpop.permute.xlu0 %2877
    %2881 = vset.pattern.permute.xlu0 0
    %2882 = vperm.xlu0 %2881, %v2762
    %v2883 = vpop.permute.xlu0 %2882
    %v2885 = vmul.f32 %v2874, %v2878
    %v2886 = vmul.f32 %v2874, %v2883
    %v2887 = vadd.f32 %v2869, %v2885
    %v2888 = vadd.f32 %v2870, %v2886
    %v2889 = vlaneseq
    %v2890 = vshrl.u32 %v2889, 7
    %v2891 = vsub.s32 2, %v2890
    %v2892 = vrot.slane %v2750, %v2891
    %2894 = vset.pattern.permute.xlu0 0
    %2895 = vperm.xlu0 %2894, %v2763
    %v2896 = vpop.permute.xlu0 %2895
    %2899 = vset.pattern.permute.xlu0 0
    %2900 = vperm.xlu0 %2899, %v2764
    %v2901 = vpop.permute.xlu0 %2900
    %v2903 = vmul.f32 %v2892, %v2896
    %v2904 = vmul.f32 %v2892, %v2901
    %v2905 = vadd.f32 %v2887, %v2903
    %v2906 = vadd.f32 %v2888, %v2904
    %v2907 = vlaneseq
    %v2908 = vshrl.u32 %v2907, 7
    %v2909 = vsub.s32 3, %v2908
    %v2910 = vrot.slane %v2750, %v2909
    %2912 = vset.pattern.permute.xlu0 0
    %2913 = vperm.xlu0 %2912, %v2765
    %v2914 = vpop.permute.xlu0 %2913
    %2917 = vset.pattern.permute.xlu0 0
    %2918 = vperm.xlu0 %2917, %v2766
    %v2919 = vpop.permute.xlu0 %2918
    %v2921 = vmul.f32 %v2910, %v2914
    %v2922 = vmul.f32 %v2910, %v2919
    %v2923 = vadd.f32 %v2905, %v2921
    %v2924 = vadd.f32 %v2906, %v2922
    %v2925 = vmax.f32 %v2923, 0.0
    %v2926 = vmax.f32 %v2924, 0.0
    %v2927 = vld [vmem:[%s13] sm:$0xff]
    %v2928 = vld [vmem:[%s13 + $0x8] sm:$0x3]
    %2930 = vset.pattern.permute.xlu0 0
    %2931 = vperm.xlu0 %2930, %v2927
    %v2932 = vpop.permute.xlu0 %2931
    %2935 = vset.pattern.permute.xlu0 0
    %2936 = vperm.xlu0 %2935, %v2928
    %v2937 = vpop.permute.xlu0 %2936
    %v2939 = vmul.f32 %v2925, %v2932
    %v2940 = vmul.f32 %v2926, %v2937
    %v2941 = vsel %vm1821, %v2940, 0.0
    %v2942 = vadd.f32 %v2939, %v2941
    %v2943 = vrot.slane %v2942, 4
    %v2944 = vadd.f32 %v2942, %v2943
    %v2945 = vrot.slane %v2944, 2
    %v2946 = vadd.f32 %v2944, %v2945
    %v2947 = vrot.slane %v2946, 1
    %v2948 = vadd.f32 %v2946, %v2947
    %v2949 = vld [vmem:[#allocation2] sm:$0x1]
    %2951 = vset.pattern.permute.xlu0 0
    %2952 = vperm.xlu0 %2951, %v2949
    %v2953 = vpop.permute.xlu0 %2952
    %v2955 = vlaneseq
    %v2956 = vshrl.u32 %v2955, 7
    %v2957 = vsub.s32 0, %v2956
    %v2958 = vrot.slane %v2953, %v2957
    %v2959 = vadd.f32 %v2948, %v2958
    %v2960 = vsub.f32 0.0, %v2959
    %v2961 = vmul.f32 %v2960, 1.442695
    %v2962 = vpow.pop %v2961
    %v2963 = vadd.f32 %v2962, 1.0
    %v2964 = vrcp.pop %v2963
    %v2965 = vmul.f32 1.0, %v2964
    %2966 = vst [vmem:[#allocation3] sm:$0x1] %v2965
    // Predicated region
    $region62: #{tpu_custom_call.1} parent=1 // pred_check
      _
    $region63: #{tpu_custom_call.1} parent=1 // pred_check_branch
      %2968 = sbr.rel (0) target = $region65
    $region64: #{tpu_custom_call.1} parent=1 // pred_region
      %s2970 = ssub.s32 16, 16
      %2971 = vsyncadd [#allocation4], %s2970
      %s2973 = sshll.u32 [#allocation3], 4
      %s2974 = int_to_ptr.vmem [resolvable:$true] %s2973
      %2976 = dma.vmem_to_hbm [thread:$0]  %s2974, 16, %s15, [#allocation4]
    $region65: #{tpu_custom_call.1} parent=1 // pred_fallthru
      _
    // Predicated region
    $region66: #{tpu_custom_call.1} parent=1 // pred_check
      _
    $region67: #{tpu_custom_call.1} parent=1 // pred_check_branch
      %2978 = sbr.rel (0) target = $region69
    $region68: #{tpu_custom_call.1} parent=1 // pred_region
      %2979 = dma.done [#allocation4], 16
    $region69: #{tpu_custom_call.1} parent=1 // pred_fallthru
      _
    %2980 = vsyncpa [#allocation4], 1

</llo_original>
